<compile_context>
chip_gen: v7x
topology: tpu7x:2x2x1
jax: 0.10.0
libtpu: 0.0.40
codegen_flags: <defaults>
</compile_context>

<pallas_src>
import jax
import jax.numpy as jnp
from jax import lax
from jax.experimental import pallas as pl
from jax.experimental.pallas import tpu as pltpu

DT = 0.01
INPUT_DIM = 3
HIDDEN = 64
_HP = jax.lax.Precision.HIGHEST  # keep every matmul in true f32 (kernel + reference)


def combined_kernel(u_ref, w_t_ref, in_mat_t_ref, theta_ref,
                    w1_t_ref, b1_ref, w2_ref, b2_ref, scal_ref,
                    out_ref, mp_ref, state_ref, drive_ref):
    """Refs:
    u_ref:        (T, C) VMEM   input sequence, time-major
    w_t_ref:      (C, C) VMEM   RNODE W, pre-transposed (row-vector matvec)
    in_mat_t_ref: (C, C) VMEM   RNODE in_mat, pre-transposed
    theta_ref:    (1, C) VMEM
    w1_t_ref:     (C, H) VMEM   fc1 weight transposed;   b1_ref: (1, H)
    w2_ref:       (C, H) VMEM   fc2 weight, native;      b2_ref: (C, 1)
    scal_ref:     (2,)   SMEM   [dt, tau]
    out_ref:      (C, T) VMEM   feedforward outputs (lane-dense: T on lanes)
    mp_ref:       (C, T) VMEM   membrane potentials (lane-dense)
    state_ref:    (T, C) VMEM scratch  per-step RNODE states (one row per step)
    drive_ref:    (T, C) VMEM scratch  dt * (in_mat @ u[:, t]) rows
    """
    T, C = u_ref.shape

    dt = scal_ref[0]
    tau = scal_ref[1]
    decay = 1.0 - dt / tau            # x*decay == x + dt*(-x/tau); divide happens once
    theta = theta_ref[...]            # (1, C)
    w_dt = w_t_ref[...] * dt          # fold dt into W once (loop-invariant)

    # Hoisted input projection: one batched (T,C)x(C,C) MXU matmul, pre-scaled by dt.
    drive_ref[...] = dt * jnp.dot(u_ref[...], in_mat_t_ref[...],
                                  precision=_HP,
                                  preferred_element_type=jnp.float32)

    def body(t, x):                   # x: (1, C) recurrent state (row vector)
        s = jax.nn.sigmoid(x + theta)                                  # EUP + VPU
        rec = jnp.dot(s, w_dt, precision=_HP,
                      preferred_element_type=jnp.float32)              # dt * (W @ s)
        x_new = x * decay + rec + drive_ref[pl.ds(t, 1), :]            # Euler step
        state_ref[pl.ds(t, 1), :] = x_new
        return x_new

    unroll = True if T <= 64 else 8
    lax.fori_loop(0, T, body, jnp.zeros((1, C), jnp.float32), unroll=unroll)

    states = state_ref[...]           # (T, C)

    # Lane-dense membrane-potential output (C, T): MXU "identity" matmul acts as a
    # transpose (avoids an unsupported small-shape vector transpose / relayout).
    rows = lax.broadcasted_iota(jnp.int32, (C, C), 0)
    cols = lax.broadcasted_iota(jnp.int32, (C, C), 1)
    eye_c = jnp.where(rows == cols, 1.0, 0.0).astype(jnp.float32)
    mp_ref[...] = lax.dot_general(eye_c, states,
                                  dimension_numbers=(((1,), (1,)), ((), ())),
                                  precision=_HP,
                                  preferred_element_type=jnp.float32)   # (C, T)

    # Hoisted feedforward readout, batched over all timesteps.
    # TODO(synk): nn.Dropout(0.5) has no deterministic equivalent; applied as
    # identity (eval semantics). Training parity would need pltpu.prng_* masking.
    h = jnp.maximum(
        jnp.dot(states, w1_t_ref[...], precision=_HP,
                preferred_element_type=jnp.float32) + b1_ref[...], 0.0)  # (T, H)
    out_ref[...] = lax.dot_general(w2_ref[...], h,
                                   dimension_numbers=(((1,), (1,)), ((), ())),
                                   precision=_HP,
                                   preferred_element_type=jnp.float32) + b2_ref[...]


def combined_model(u, params, dt=DT):
    """u: (channels, seq_len) float32, as in the PyTorch module.

    Returns (outputs, membrane_potentials), each (channels, seq_len)."""
    C, T = u.shape
    assert C == INPUT_DIM, "channels must equal input_dim (in_mat @ u[:, t])"
    H = params["fc1_w"].shape[0]
    u_tc = jnp.asarray(u, jnp.float32).T                                # (T, C)
    scalars = jnp.concatenate([
        jnp.full((1,), dt, jnp.float32),
        jnp.reshape(params["tau"], (1,)).astype(jnp.float32)])          # [dt, tau]

    vmem = pl.BlockSpec(memory_space=pltpu.MemorySpace.VMEM)
    smem = pl.BlockSpec(memory_space=pltpu.MemorySpace.SMEM)

    out_ct, mp_ct = pl.pallas_call(
        combined_kernel,
        out_shape=(jax.ShapeDtypeStruct((C, T), jnp.float32),
                   jax.ShapeDtypeStruct((C, T), jnp.float32)),
        in_specs=[vmem] * 8 + [smem],
        out_specs=(vmem, vmem),
        scratch_shapes=[pltpu.VMEM((T, C), jnp.float32),   # per-step states
                        pltpu.VMEM((T, C), jnp.float32)],  # dt-scaled input drive
        compiler_params=pltpu.CompilerParams(
            # Raise the scoped-VMEM budget (defaults: 16/32 MiB) while staying
            # under v7x's 64 MiB physical VMEM. For very long sequences a 1-D
            # grid over T (state carried in scratch) would replace this.
            vmem_limit_bytes=48 * 1024 * 1024),
    )(
        u_tc,
        params["W"].T,                        # (C, C) transposed
        params["in_mat"].T,                   # (C, C) transposed
        params["theta"].reshape(1, C),        # (1, C)
        params["fc1_w"].T,                    # (C, H)  (PyTorch weight is (H, C))
        params["fc1_b"].reshape(1, H),        # (1, H)
        params["fc2_w"],                      # (C, H)  native layout
        params["fc2_b"].reshape(C, 1),        # (C, 1)  column bias for (C, T) output
        scalars,                              # (2,) SMEM
    )
    return out_ct, mp_ct


def reference_model(u, params, dt=DT):
    """Pure-JAX reference mirroring the PyTorch loop (dropout = identity)."""
    C, T = u.shape
    x = jnp.zeros((C,), jnp.float32)
    outs, mps = [], []
    for t in range(T):
        s = jax.nn.sigmoid(x + params["theta"])
        dxdt = (-x / params["tau"]
                + jnp.dot(params["W"], s, precision=_HP)
                + jnp.dot(params["in_mat"], u[:, t], precision=_HP))
        x = x + dxdt * dt
        h = jnp.maximum(
            jnp.dot(params["fc1_w"], x, precision=_HP) + params["fc1_b"], 0.0)
        y = jnp.dot(params["fc2_w"], h, precision=_HP) + params["fc2_b"]
        outs.append(y)
        mps.append(x)
    return jnp.stack(outs, axis=1), jnp.stack(mps, axis=1)


def make_params(key):
    ks = jax.random.split(key, 7)
    C, H = INPUT_DIM, HIDDEN
    return {
        "in_mat": 0.1 * jax.random.normal(ks[0], (C, C), jnp.float32),
        "W":      0.1 * jax.random.normal(ks[1], (C, C), jnp.float32),
        "theta":  0.1 * jax.random.normal(ks[2], (C,), jnp.float32),
        "tau":    jnp.array(1.0, jnp.float32),
        # nn.Linear(C, H): weight (H, C), bias (H,)
        "fc1_w":  0.1 * jax.random.normal(ks[3], (H, C), jnp.float32),
        "fc1_b":  0.1 * jax.random.normal(ks[4], (H,), jnp.float32),
        # nn.Linear(H, C): weight (C, H), bias (C,)
        "fc2_w":  0.1 * jax.random.normal(ks[5], (C, H), jnp.float32),
        "fc2_b":  0.1 * jax.random.normal(ks[6], (C,), jnp.float32),
    }


if __name__ == "__main__":
    key = jax.random.PRNGKey(0)
    k_u, k_p = jax.random.split(key)

    channels, seq_len = INPUT_DIM, 8
    u = jax.random.normal(k_u, (channels, seq_len), jnp.float32)
    params = make_params(k_p)

    outputs, membrane_potentials = combined_model(u, params, DT)
    jax.block_until_ready((outputs, membrane_potentials))

    ref_out, ref_mp = reference_model(u, params, DT)
    assert outputs.shape == (channels, seq_len)
    assert membrane_potentials.shape == (channels, seq_len)
    assert jnp.allclose(outputs, ref_out, rtol=2e-3, atol=2e-4), (
        float(jnp.max(jnp.abs(outputs - ref_out))))
    assert jnp.allclose(membrane_potentials, ref_mp, rtol=2e-3, atol=2e-4), (
        float(jnp.max(jnp.abs(membrane_potentials - ref_mp))))

    print("KERNEL_OK")
</pallas_src>

<mosaic_0001>
module attributes {stable_mosaic.version = 11 : i64} {
  func.func @combined_kernel(%arg0: memref<8x3xf32, #tpu.memory_space<vmem>>, %arg1: memref<3x3xf32, #tpu.memory_space<vmem>>, %arg2: memref<3x3xf32, #tpu.memory_space<vmem>>, %arg3: memref<1x3xf32, #tpu.memory_space<vmem>>, %arg4: memref<3x64xf32, #tpu.memory_space<vmem>>, %arg5: memref<1x64xf32, #tpu.memory_space<vmem>>, %arg6: memref<3x64xf32, #tpu.memory_space<vmem>>, %arg7: memref<3x1xf32, #tpu.memory_space<vmem>>, %arg8: memref<2xf32, #tpu.memory_space<smem>>, %arg9: memref<3x8xf32, #tpu.memory_space<vmem>>, %arg10: memref<3x8xf32, #tpu.memory_space<vmem>>, %arg11: memref<8x3xf32, #tpu.memory_space<vmem>>, %arg12: memref<8x3xf32, #tpu.memory_space<vmem>>) attributes {dimension_semantics = [], scalar_prefetch = 0 : i64, scratch_operands = 2 : i64, tpu.core_type = #tpu.core_type<tc>} {
    %c0 = arith.constant 0 : index
    %0 = memref.load %arg8[%c0] : memref<2xf32, #tpu.memory_space<smem>>
    %c1 = arith.constant 1 : index
    %1 = memref.load %arg8[%c1] : memref<2xf32, #tpu.memory_space<smem>>
    %2 = arith.divf %0, %1 : f32
    %cst = arith.constant 1.000000e+00 : f32
    %3 = arith.subf %cst, %2 : f32
    %c0_0 = arith.constant 0 : index
    %c0_1 = arith.constant 0 : index
    %4 = vector.load %arg3[%c0_0, %c0_1] : memref<1x3xf32, #tpu.memory_space<vmem>>, vector<1x3xf32>
    %c0_2 = arith.constant 0 : index
    %c0_3 = arith.constant 0 : index
    %5 = vector.load %arg1[%c0_2, %c0_3] : memref<3x3xf32, #tpu.memory_space<vmem>>, vector<3x3xf32>
    %6 = vector.broadcast %0 : f32 to vector<3x3xf32>
    %7 = arith.mulf %5, %6 : vector<3x3xf32>
    %c0_4 = arith.constant 0 : index
    %c0_5 = arith.constant 0 : index
    %8 = vector.load %arg0[%c0_4, %c0_5] : memref<8x3xf32, #tpu.memory_space<vmem>>, vector<8x3xf32>
    %c0_6 = arith.constant 0 : index
    %c0_7 = arith.constant 0 : index
    %9 = vector.load %arg2[%c0_6, %c0_7] : memref<3x3xf32, #tpu.memory_space<vmem>>, vector<3x3xf32>
    %cst_8 = arith.constant dense<0.000000e+00> : vector<8x3xf32>
    %10 = tpu.matmul %8, %9, %cst_8 {dimension_numbers = #tpu.dot_dimension_numbers<[1], [0], [0], [1], [0, 0, 1, 1], [], []>, precision = #tpu.contract_precision<fp32>} : vector<8x3xf32>, vector<3x3xf32>, vector<8x3xf32> -> vector<8x3xf32>
    %11 = vector.broadcast %0 : f32 to vector<8x3xf32>
    %12 = arith.mulf %11, %10 : vector<8x3xf32>
    %c0_9 = arith.constant 0 : index
    %c0_10 = arith.constant 0 : index
    %13 = vector.load %arg12[%c0_9, %c0_10] : memref<8x3xf32, #tpu.memory_space<vmem>>, vector<8x3xf32>
    tpu.vector_store %arg12[%c0_9, %c0_10], %12 {strides = array<i32>} : memref<8x3xf32, #tpu.memory_space<vmem>>, vector<8x3xf32>,
    %cst_11 = arith.constant 0.000000e+00 : f32
    %14 = vector.broadcast %cst_11 : f32 to vector<1x3xf32>
    %c0_i32 = arith.constant 0 : i32
    %15 = arith.addf %14, %4 : vector<1x3xf32>
    %16 = arith.negf %15 : vector<1x3xf32>
    %17 = math.exp %16 : vector<1x3xf32>
    %cst_12 = arith.constant 1.000000e+00 : f32
    %18 = vector.broadcast %cst_12 : f32 to vector<1x3xf32>
    %19 = arith.addf %18, %17 : vector<1x3xf32>
    %20 = arith.divf %18, %19 : vector<1x3xf32>
    %cst_13 = arith.constant dense<0.000000e+00> : vector<1x3xf32>
    %21 = tpu.matmul %20, %7, %cst_13 {dimension_numbers = #tpu.dot_dimension_numbers<[1], [0], [0], [1], [0, 0, 1, 1], [], []>, precision = #tpu.contract_precision<fp32>} : vector<1x3xf32>, vector<3x3xf32>, vector<1x3xf32> -> vector<1x3xf32>
    %22 = vector.broadcast %3 : f32 to vector<1x3xf32>
    %23 = arith.mulf %14, %22 : vector<1x3xf32>
    %24 = arith.addf %23, %21 : vector<1x3xf32>
    %25 = arith.index_cast %c0_i32 : i32 to index
    %c0_14 = arith.constant 0 : index
    %26 = vector.load %arg12[%25, %c0_14] : memref<8x3xf32, #tpu.memory_space<vmem>>, vector<1x3xf32>
    %27 = arith.addf %24, %26 : vector<1x3xf32>
    %28 = arith.index_cast %c0_i32 : i32 to index
    %c0_15 = arith.constant 0 : index
    %29 = vector.load %arg11[%28, %c0_15] : memref<8x3xf32, #tpu.memory_space<vmem>>, vector<1x3xf32>
    tpu.vector_store %arg11[%28, %c0_15], %27 {strides = array<i32>} : memref<8x3xf32, #tpu.memory_space<vmem>>, vector<1x3xf32>,
    %c1_i32 = arith.constant 1 : i32
    %30 = arith.addf %27, %4 : vector<1x3xf32>
    %31 = arith.negf %30 : vector<1x3xf32>
    %32 = math.exp %31 : vector<1x3xf32>
    %cst_16 = arith.constant 1.000000e+00 : f32
    %33 = vector.broadcast %cst_16 : f32 to vector<1x3xf32>
    %34 = arith.addf %33, %32 : vector<1x3xf32>
    %35 = arith.divf %33, %34 : vector<1x3xf32>
    %cst_17 = arith.constant dense<0.000000e+00> : vector<1x3xf32>
    %36 = tpu.matmul %35, %7, %cst_17 {dimension_numbers = #tpu.dot_dimension_numbers<[1], [0], [0], [1], [0, 0, 1, 1], [], []>, precision = #tpu.contract_precision<fp32>} : vector<1x3xf32>, vector<3x3xf32>, vector<1x3xf32> -> vector<1x3xf32>
    %37 = vector.broadcast %3 : f32 to vector<1x3xf32>
    %38 = arith.mulf %27, %37 : vector<1x3xf32>
    %39 = arith.addf %38, %36 : vector<1x3xf32>
    %40 = arith.index_cast %c1_i32 : i32 to index
    %c0_18 = arith.constant 0 : index
    %41 = vector.load %arg12[%40, %c0_18] : memref<8x3xf32, #tpu.memory_space<vmem>>, vector<1x3xf32>
    %42 = arith.addf %39, %41 : vector<1x3xf32>
    %43 = arith.index_cast %c1_i32 : i32 to index
    %c0_19 = arith.constant 0 : index
    %44 = vector.load %arg11[%43, %c0_19] : memref<8x3xf32, #tpu.memory_space<vmem>>, vector<1x3xf32>
    tpu.vector_store %arg11[%43, %c0_19], %42 {strides = array<i32>} : memref<8x3xf32, #tpu.memory_space<vmem>>, vector<1x3xf32>,
    %c2_i32 = arith.constant 2 : i32
    %45 = arith.addf %42, %4 : vector<1x3xf32>
    %46 = arith.negf %45 : vector<1x3xf32>
    %47 = math.exp %46 : vector<1x3xf32>
    %cst_20 = arith.constant 1.000000e+00 : f32
    %48 = vector.broadcast %cst_20 : f32 to vector<1x3xf32>
    %49 = arith.addf %48, %47 : vector<1x3xf32>
    %50 = arith.divf %48, %49 : vector<1x3xf32>
    %cst_21 = arith.constant dense<0.000000e+00> : vector<1x3xf32>
    %51 = tpu.matmul %50, %7, %cst_21 {dimension_numbers = #tpu.dot_dimension_numbers<[1], [0], [0], [1], [0, 0, 1, 1], [], []>, precision = #tpu.contract_precision<fp32>} : vector<1x3xf32>, vector<3x3xf32>, vector<1x3xf32> -> vector<1x3xf32>
    %52 = vector.broadcast %3 : f32 to vector<1x3xf32>
    %53 = arith.mulf %42, %52 : vector<1x3xf32>
    %54 = arith.addf %53, %51 : vector<1x3xf32>
    %55 = arith.index_cast %c2_i32 : i32 to index
    %c0_22 = arith.constant 0 : index
    %56 = vector.load %arg12[%55, %c0_22] : memref<8x3xf32, #tpu.memory_space<vmem>>, vector<1x3xf32>
    %57 = arith.addf %54, %56 : vector<1x3xf32>
    %58 = arith.index_cast %c2_i32 : i32 to index
    %c0_23 = arith.constant 0 : index
    %59 = vector.load %arg11[%58, %c0_23] : memref<8x3xf32, #tpu.memory_space<vmem>>, vector<1x3xf32>
    tpu.vector_store %arg11[%58, %c0_23], %57 {strides = array<i32>} : memref<8x3xf32, #tpu.memory_space<vmem>>, vector<1x3xf32>,
    %c3_i32 = arith.constant 3 : i32
    %60 = arith.addf %57, %4 : vector<1x3xf32>
    %61 = arith.negf %60 : vector<1x3xf32>
    %62 = math.exp %61 : vector<1x3xf32>
    %cst_24 = arith.constant 1.000000e+00 : f32
    %63 = vector.broadcast %cst_24 : f32 to vector<1x3xf32>
    %64 = arith.addf %63, %62 : vector<1x3xf32>
    %65 = arith.divf %63, %64 : vector<1x3xf32>
    %cst_25 = arith.constant dense<0.000000e+00> : vector<1x3xf32>
    %66 = tpu.matmul %65, %7, %cst_25 {dimension_numbers = #tpu.dot_dimension_numbers<[1], [0], [0], [1], [0, 0, 1, 1], [], []>, precision = #tpu.contract_precision<fp32>} : vector<1x3xf32>, vector<3x3xf32>, vector<1x3xf32> -> vector<1x3xf32>
    %67 = vector.broadcast %3 : f32 to vector<1x3xf32>
    %68 = arith.mulf %57, %67 : vector<1x3xf32>
    %69 = arith.addf %68, %66 : vector<1x3xf32>
    %70 = arith.index_cast %c3_i32 : i32 to index
    %c0_26 = arith.constant 0 : index
    %71 = vector.load %arg12[%70, %c0_26] : memref<8x3xf32, #tpu.memory_space<vmem>>, vector<1x3xf32>
    %72 = arith.addf %69, %71 : vector<1x3xf32>
    %73 = arith.index_cast %c3_i32 : i32 to index
    %c0_27 = arith.constant 0 : index
    %74 = vector.load %arg11[%73, %c0_27] : memref<8x3xf32, #tpu.memory_space<vmem>>, vector<1x3xf32>
    tpu.vector_store %arg11[%73, %c0_27], %72 {strides = array<i32>} : memref<8x3xf32, #tpu.memory_space<vmem>>, vector<1x3xf32>,
    %c4_i32 = arith.constant 4 : i32
    %75 = arith.addf %72, %4 : vector<1x3xf32>
    %76 = arith.negf %75 : vector<1x3xf32>
    %77 = math.exp %76 : vector<1x3xf32>
    %cst_28 = arith.constant 1.000000e+00 : f32
    %78 = vector.broadcast %cst_28 : f32 to vector<1x3xf32>
    %79 = arith.addf %78, %77 : vector<1x3xf32>
    %80 = arith.divf %78, %79 : vector<1x3xf32>
    %cst_29 = arith.constant dense<0.000000e+00> : vector<1x3xf32>
    %81 = tpu.matmul %80, %7, %cst_29 {dimension_numbers = #tpu.dot_dimension_numbers<[1], [0], [0], [1], [0, 0, 1, 1], [], []>, precision = #tpu.contract_precision<fp32>} : vector<1x3xf32>, vector<3x3xf32>, vector<1x3xf32> -> vector<1x3xf32>
    %82 = vector.broadcast %3 : f32 to vector<1x3xf32>
    %83 = arith.mulf %72, %82 : vector<1x3xf32>
    %84 = arith.addf %83, %81 : vector<1x3xf32>
    %85 = arith.index_cast %c4_i32 : i32 to index
    %c0_30 = arith.constant 0 : index
    %86 = vector.load %arg12[%85, %c0_30] : memref<8x3xf32, #tpu.memory_space<vmem>>, vector<1x3xf32>
    %87 = arith.addf %84, %86 : vector<1x3xf32>
    %88 = arith.index_cast %c4_i32 : i32 to index
    %c0_31 = arith.constant 0 : index
    %89 = vector.load %arg11[%88, %c0_31] : memref<8x3xf32, #tpu.memory_space<vmem>>, vector<1x3xf32>
    tpu.vector_store %arg11[%88, %c0_31], %87 {strides = array<i32>} : memref<8x3xf32, #tpu.memory_space<vmem>>, vector<1x3xf32>,
    %c5_i32 = arith.constant 5 : i32
    %90 = arith.addf %87, %4 : vector<1x3xf32>
    %91 = arith.negf %90 : vector<1x3xf32>
    %92 = math.exp %91 : vector<1x3xf32>
    %cst_32 = arith.constant 1.000000e+00 : f32
    %93 = vector.broadcast %cst_32 : f32 to vector<1x3xf32>
    %94 = arith.addf %93, %92 : vector<1x3xf32>
    %95 = arith.divf %93, %94 : vector<1x3xf32>
    %cst_33 = arith.constant dense<0.000000e+00> : vector<1x3xf32>
    %96 = tpu.matmul %95, %7, %cst_33 {dimension_numbers = #tpu.dot_dimension_numbers<[1], [0], [0], [1], [0, 0, 1, 1], [], []>, precision = #tpu.contract_precision<fp32>} : vector<1x3xf32>, vector<3x3xf32>, vector<1x3xf32> -> vector<1x3xf32>
    %97 = vector.broadcast %3 : f32 to vector<1x3xf32>
    %98 = arith.mulf %87, %97 : vector<1x3xf32>
    %99 = arith.addf %98, %96 : vector<1x3xf32>
    %100 = arith.index_cast %c5_i32 : i32 to index
    %c0_34 = arith.constant 0 : index
    %101 = vector.load %arg12[%100, %c0_34] : memref<8x3xf32, #tpu.memory_space<vmem>>, vector<1x3xf32>
    %102 = arith.addf %99, %101 : vector<1x3xf32>
    %103 = arith.index_cast %c5_i32 : i32 to index
    %c0_35 = arith.constant 0 : index
    %104 = vector.load %arg11[%103, %c0_35] : memref<8x3xf32, #tpu.memory_space<vmem>>, vector<1x3xf32>
    tpu.vector_store %arg11[%103, %c0_35], %102 {strides = array<i32>} : memref<8x3xf32, #tpu.memory_space<vmem>>, vector<1x3xf32>,
    %c6_i32 = arith.constant 6 : i32
    %105 = arith.addf %102, %4 : vector<1x3xf32>
    %106 = arith.negf %105 : vector<1x3xf32>
    %107 = math.exp %106 : vector<1x3xf32>
    %cst_36 = arith.constant 1.000000e+00 : f32
    %108 = vector.broadcast %cst_36 : f32 to vector<1x3xf32>
    %109 = arith.addf %108, %107 : vector<1x3xf32>
    %110 = arith.divf %108, %109 : vector<1x3xf32>
    %cst_37 = arith.constant dense<0.000000e+00> : vector<1x3xf32>
    %111 = tpu.matmul %110, %7, %cst_37 {dimension_numbers = #tpu.dot_dimension_numbers<[1], [0], [0], [1], [0, 0, 1, 1], [], []>, precision = #tpu.contract_precision<fp32>} : vector<1x3xf32>, vector<3x3xf32>, vector<1x3xf32> -> vector<1x3xf32>
    %112 = vector.broadcast %3 : f32 to vector<1x3xf32>
    %113 = arith.mulf %102, %112 : vector<1x3xf32>
    %114 = arith.addf %113, %111 : vector<1x3xf32>
    %115 = arith.index_cast %c6_i32 : i32 to index
    %c0_38 = arith.constant 0 : index
    %116 = vector.load %arg12[%115, %c0_38] : memref<8x3xf32, #tpu.memory_space<vmem>>, vector<1x3xf32>
    %117 = arith.addf %114, %116 : vector<1x3xf32>
    %118 = arith.index_cast %c6_i32 : i32 to index
    %c0_39 = arith.constant 0 : index
    %119 = vector.load %arg11[%118, %c0_39] : memref<8x3xf32, #tpu.memory_space<vmem>>, vector<1x3xf32>
    tpu.vector_store %arg11[%118, %c0_39], %117 {strides = array<i32>} : memref<8x3xf32, #tpu.memory_space<vmem>>, vector<1x3xf32>,
    %c7_i32 = arith.constant 7 : i32
    %120 = arith.addf %117, %4 : vector<1x3xf32>
    %121 = arith.negf %120 : vector<1x3xf32>
    %122 = math.exp %121 : vector<1x3xf32>
    %cst_40 = arith.constant 1.000000e+00 : f32
    %123 = vector.broadcast %cst_40 : f32 to vector<1x3xf32>
    %124 = arith.addf %123, %122 : vector<1x3xf32>
    %125 = arith.divf %123, %124 : vector<1x3xf32>
    %cst_41 = arith.constant dense<0.000000e+00> : vector<1x3xf32>
    %126 = tpu.matmul %125, %7, %cst_41 {dimension_numbers = #tpu.dot_dimension_numbers<[1], [0], [0], [1], [0, 0, 1, 1], [], []>, precision = #tpu.contract_precision<fp32>} : vector<1x3xf32>, vector<3x3xf32>, vector<1x3xf32> -> vector<1x3xf32>
    %127 = vector.broadcast %3 : f32 to vector<1x3xf32>
    %128 = arith.mulf %117, %127 : vector<1x3xf32>
    %129 = arith.addf %128, %126 : vector<1x3xf32>
    %130 = arith.index_cast %c7_i32 : i32 to index
    %c0_42 = arith.constant 0 : index
    %131 = vector.load %arg12[%130, %c0_42] : memref<8x3xf32, #tpu.memory_space<vmem>>, vector<1x3xf32>
    %132 = arith.addf %129, %131 : vector<1x3xf32>
    %133 = arith.index_cast %c7_i32 : i32 to index
    %c0_43 = arith.constant 0 : index
    %134 = vector.load %arg11[%133, %c0_43] : memref<8x3xf32, #tpu.memory_space<vmem>>, vector<1x3xf32>
    tpu.vector_store %arg11[%133, %c0_43], %132 {strides = array<i32>} : memref<8x3xf32, #tpu.memory_space<vmem>>, vector<1x3xf32>,
    %c8_i32 = arith.constant 8 : i32
    %c0_44 = arith.constant 0 : index
    %c0_45 = arith.constant 0 : index
    %135 = vector.load %arg11[%c0_44, %c0_45] : memref<8x3xf32, #tpu.memory_space<vmem>>, vector<8x3xf32>
    %136 = tpu.iota {dimensions = array<i32: 0>} : vector<3x3xi32>
    %137 = tpu.iota {dimensions = array<i32: 1>} : vector<3x3xi32>
    %138 = arith.cmpi eq, %136, %137 : vector<3x3xi32>
    %cst_46 = arith.constant 1.000000e+00 : f32
    %cst_47 = arith.constant 0.000000e+00 : f32
    %139 = vector.broadcast %cst_46 : f32 to vector<3x3xf32>
    %140 = vector.broadcast %cst_47 : f32 to vector<3x3xf32>
    %141 = arith.select %138, %139, %140 : vector<3x3xi1>, vector<3x3xf32>
    %cst_48 = arith.constant dense<0.000000e+00> : vector<3x8xf32>
    %142 = tpu.matmul %141, %135, %cst_48 {dimension_numbers = #tpu.dot_dimension_numbers<[1], [1], [0], [0], [0, 0, 1, 0], [], []>, precision = #tpu.contract_precision<fp32>} : vector<3x3xf32>, vector<8x3xf32>, vector<3x8xf32> -> vector<3x8xf32>
    %c0_49 = arith.constant 0 : index
    %c0_50 = arith.constant 0 : index
    %143 = vector.load %arg10[%c0_49, %c0_50] : memref<3x8xf32, #tpu.memory_space<vmem>>, vector<3x8xf32>
    tpu.vector_store %arg10[%c0_49, %c0_50], %142 {strides = array<i32>} : memref<3x8xf32, #tpu.memory_space<vmem>>, vector<3x8xf32>,
    %c0_51 = arith.constant 0 : index
    %c0_52 = arith.constant 0 : index
    %144 = vector.load %arg4[%c0_51, %c0_52] : memref<3x64xf32, #tpu.memory_space<vmem>>, vector<3x64xf32>
    %cst_53 = arith.constant dense<0.000000e+00> : vector<8x64xf32>
    %145 = tpu.matmul %135, %144, %cst_53 {dimension_numbers = #tpu.dot_dimension_numbers<[1], [0], [0], [1], [0, 0, 1, 1], [], []>, precision = #tpu.contract_precision<fp32>} : vector<8x3xf32>, vector<3x64xf32>, vector<8x64xf32> -> vector<8x64xf32>
    %c0_54 = arith.constant 0 : index
    %c0_55 = arith.constant 0 : index
    %146 = vector.load %arg5[%c0_54, %c0_55] : memref<1x64xf32, #tpu.memory_space<vmem>>, vector<1x64xf32>
    %147 = vector.broadcast %146 : vector<1x64xf32> to vector<8x64xf32>
    %148 = arith.addf %145, %147 : vector<8x64xf32>
    %cst_56 = arith.constant 0.000000e+00 : f32
    %149 = vector.broadcast %cst_56 : f32 to vector<8x64xf32>
    %150 = arith.maximumf %148, %149 : vector<8x64xf32>
    %c0_57 = arith.constant 0 : index
    %c0_58 = arith.constant 0 : index
    %151 = vector.load %arg6[%c0_57, %c0_58] : memref<3x64xf32, #tpu.memory_space<vmem>>, vector<3x64xf32>
    %cst_59 = arith.constant dense<0.000000e+00> : vector<3x8xf32>
    %152 = tpu.matmul %151, %150, %cst_59 {dimension_numbers = #tpu.dot_dimension_numbers<[1], [1], [0], [0], [0, 0, 1, 0], [], []>, precision = #tpu.contract_precision<fp32>} : vector<3x64xf32>, vector<8x64xf32>, vector<3x8xf32> -> vector<3x8xf32>
    %c0_60 = arith.constant 0 : index
    %c0_61 = arith.constant 0 : index
    %153 = vector.load %arg7[%c0_60, %c0_61] : memref<3x1xf32, #tpu.memory_space<vmem>>, vector<3x1xf32>
    %154 = vector.broadcast %153 : vector<3x1xf32> to vector<3x8xf32>
    %155 = arith.addf %152, %154 : vector<3x8xf32>
    %c0_62 = arith.constant 0 : index
    %c0_63 = arith.constant 0 : index
    %156 = vector.load %arg9[%c0_62, %c0_63] : memref<3x8xf32, #tpu.memory_space<vmem>>, vector<3x8xf32>
    tpu.vector_store %arg9[%c0_62, %c0_63], %155 {strides = array<i32>} : memref<3x8xf32, #tpu.memory_space<vmem>>, vector<3x8xf32>,
    return
  }
}

</mosaic_0001>

<llo_original>
// kernel: tpu_custom_call.1
$region0: #{tpu_custom_call.1}
  #allocation0 [shape = 'u32[]', space=smem, size = 0x4, offset = 0x4, fixed_abs, tag = 'smem constant byte address 0x4 - core index']
  #allocation1 [shape = 'u32[144,128]{1,0:T(1,128)}', space=vmem, size = 0x12000, scoped, tag = 'internal scratch']
  #allocation2 [shape = 'f32[8,3]{1,0:T(8,128)}', space=vmem, size = 0x1000, scoped, tag = 'scratch operand']
  #allocation3 [shape = 'f32[8,3]{1,0:T(8,128)}', space=vmem, size = 0x1000, scoped, tag = 'scratch operand']
  %s0 = inlined_call_operand.vmem [shape: f32[8,3], index: 0, kind: input, shape index: {}]
  %s1 = inlined_call_operand.vmem [shape: f32[3,3], index: 1, kind: input, shape index: {}]
  %s2 = inlined_call_operand.vmem [shape: f32[3,3], index: 2, kind: input, shape index: {}]
  %s3 = inlined_call_operand.vmem [shape: f32[1,3], index: 3, kind: input, shape index: {}]
  %s4 = inlined_call_operand.vmem [shape: f32[3,64], index: 4, kind: input, shape index: {}]
  %s5 = inlined_call_operand.vmem [shape: f32[1,64], index: 5, kind: input, shape index: {}]
  %s6 = inlined_call_operand.vmem [shape: f32[3,64], index: 6, kind: input, shape index: {}]
  %s7 = inlined_call_operand.vmem [shape: f32[3,1], index: 7, kind: input, shape index: {}]
  %s8 = inlined_call_operand.vmem [shape: f32[2], index: 8, kind: input, shape index: {}]
  %s9 = inlined_call_operand.hbm [shape: f32[3,8], index: 9, kind: output, shape index: {0}]
  %s10 = inlined_call_operand.hbm [shape: f32[3,8], index: 10, kind: output, shape index: {1}]
  %11 = xla_tuple %s9, %s10
  %s12 = sld [smem:[#allocation0]]
  $region58: #{tpu_custom_call.1} parent=0
    _
  %s14 = ssub.s32 1, %s12
  %s15 = scalar_select 0, %s14, %s12
  $region1: #{tpu_custom_call.1} parent=0
    #allocation4 [shape = 'u8[512]{0}', space=smem, size = 0x200, scoped, tag = 'input window, operand 8, single buffered']
    #allocation5 [shape = 's32[1]{0}', space=sflag, size = 0x4, scoped, tag = 'scoped memory for tpu_custom_call.1']
    #allocation6 [shape = 's32[1]{0}', space=sflag, size = 0x4, scoped, tag = 'scoped memory for tpu_custom_call.1']
    #allocation7 [shape = 'u8[2048]{0}', space=vmem, size = 0x800, scoped, tag = 'output window, operand 0, single buffered']
    #allocation8 [shape = 'u8[2048]{0}', space=vmem, size = 0x800, scoped, tag = 'output window, operand 1, single buffered']
    #allocation9 [shape = 's32[1]{0}', space=sflag, size = 0x4, scoped, tag = 'scoped memory for tpu_custom_call.1']
    %16 = vsyncpa [#allocation6], 0
    %17 = vsyncpa [#allocation5], 0
    %18 = vsyncpa [#allocation9], 0
    // Predicated region
    $region2: #{tpu_custom_call.1} parent=1 // pred_check
      _
    $region3: #{tpu_custom_call.1} parent=1 // pred_check_branch
      %20 = sbr.rel (0) target = $region5
    $region4: #{tpu_custom_call.1} parent=1 // pred_region
      _
    $region5: #{tpu_custom_call.1} parent=1 // pred_fallthru
      _
    // Predicated region
    $region6: #{tpu_custom_call.1} parent=1 // pred_check
      _
    $region7: #{tpu_custom_call.1} parent=1 // pred_check_branch
      %22 = sbr.rel (0) target = $region9
    $region8: #{tpu_custom_call.1} parent=1 // pred_region
      _
    $region9: #{tpu_custom_call.1} parent=1 // pred_fallthru
      _
    // Predicated region
    $region10: #{tpu_custom_call.1} parent=1 // pred_check
      _
    $region11: #{tpu_custom_call.1} parent=1 // pred_check_branch
      %24 = sbr.rel (0) target = $region13
    $region12: #{tpu_custom_call.1} parent=1 // pred_region
      _
    $region13: #{tpu_custom_call.1} parent=1 // pred_fallthru
      _
    // Predicated region
    $region14: #{tpu_custom_call.1} parent=1 // pred_check
      _
    $region15: #{tpu_custom_call.1} parent=1 // pred_check_branch
      %26 = sbr.rel (0) target = $region17
    $region16: #{tpu_custom_call.1} parent=1 // pred_region
      _
    $region17: #{tpu_custom_call.1} parent=1 // pred_fallthru
      _
    // Predicated region
    $region18: #{tpu_custom_call.1} parent=1 // pred_check
      _
    $region19: #{tpu_custom_call.1} parent=1 // pred_check_branch
      %28 = sbr.rel (0) target = $region21
    $region20: #{tpu_custom_call.1} parent=1 // pred_region
      _
    $region21: #{tpu_custom_call.1} parent=1 // pred_fallthru
      _
    // Predicated region
    $region22: #{tpu_custom_call.1} parent=1 // pred_check
      _
    $region23: #{tpu_custom_call.1} parent=1 // pred_check_branch
      %30 = sbr.rel (0) target = $region25
    $region24: #{tpu_custom_call.1} parent=1 // pred_region
      _
    $region25: #{tpu_custom_call.1} parent=1 // pred_fallthru
      _
    // Predicated region
    $region26: #{tpu_custom_call.1} parent=1 // pred_check
      _
    $region27: #{tpu_custom_call.1} parent=1 // pred_check_branch
      %32 = sbr.rel (0) target = $region29
    $region28: #{tpu_custom_call.1} parent=1 // pred_region
      _
    $region29: #{tpu_custom_call.1} parent=1 // pred_fallthru
      _
    // Predicated region
    $region30: #{tpu_custom_call.1} parent=1 // pred_check
      _
    $region31: #{tpu_custom_call.1} parent=1 // pred_check_branch
      %34 = sbr.rel (0) target = $region33
    $region32: #{tpu_custom_call.1} parent=1 // pred_region
      _
    $region33: #{tpu_custom_call.1} parent=1 // pred_fallthru
      _
    // Predicated region
    $region34: #{tpu_custom_call.1} parent=1 // pred_check
      _
    $region35: #{tpu_custom_call.1} parent=1 // pred_check_branch
      %36 = sbr.rel (0) target = $region37
    $region36: #{tpu_custom_call.1} parent=1 // pred_region
      %s38 = ssub.s32 16, 16
      %39 = vsyncadd [#allocation6], %s38
      %s41 = sshll.u32 %s8, 4
      %s42 = int_to_ptr.vmem [resolvable:$true] %s41
      %44 = dma.vmem_to_smem %s42, 16, [#allocation4], [#allocation6]
    $region37: #{tpu_custom_call.1} parent=1 // pred_fallthru
      _
    // Predicated region
    $region38: #{tpu_custom_call.1} parent=1 // pred_check
      _
    $region39: #{tpu_custom_call.1} parent=1 // pred_check_branch
      %46 = sbr.rel (0) target = $region41
    $region40: #{tpu_custom_call.1} parent=1 // pred_region
      %47 = dma.done [#allocation6], 16
    $region41: #{tpu_custom_call.1} parent=1 // pred_fallthru
      _
    %48 = sfence
    %s49 = sld [smem:[#allocation4]]
    %s50 = sld [smem:[#allocation4 + $0x1]]
    %v51 = vstv %s50
    %v52 = vrcp.pop %v51
    %s53 = vtos %v52
    %s54 = smul.f32 %s49, %s53
    %s55 = ssub.f32 1.0, %s54
    %v56 = vld [vmem:[%s3] sm:$0x1]
    %v57 = vld [vmem:[%s1] sm:$0x7]
    %v58 = vstv %s49
    %v59 = vmul.f32 %v57, %v58
    %v60 = vld [vmem:[%s0] sm:$0xff]
    %v61 = vld [vmem:[%s2] sm:$0x7]
    %vm62 = vcmask 23552
    %v64 = vsel %vm62, %v60, 0
    %vm66 = vcmask 1042432
    %v68 = vsel %vm66, %v61, 0
    %70 = vmatprep.subr.mxu0 0.0
    %v71 = vand.u32 %v68, 4294901760
    %72 = vmatpush1.msra.mxu0 %v71
    %73 = vmatprep.subr.mxu0 0.0
    %74 = vmatpush1.msra.mxu0 0.0
    %75 = vmatprep.subr.mxu0 0.0
    %76 = vmatpush1.msra.mxu0 0.0
    %77 = vmatprep.subr.mxu0 0.0
    %78 = vmatpush1.msra.mxu0 0.0
    %79 = vmatprep.subr.mxu0 0.0
    %80 = vmatpush1.msra.mxu0 0.0
    %81 = vmatprep.subr.mxu0 0.0
    %82 = vmatpush1.msra.mxu0 0.0
    %83 = vmatprep.subr.mxu0 0.0
    %84 = vmatpush1.msra.mxu0 0.0
    %85 = vmatprep.subr.mxu0 0.0
    %86 = vmatpush1.msra.mxu0 0.0
    %87 = vmatprep.subr.mxu0 0.0
    %88 = vmatpush1.msra.mxu0 0.0
    %89 = vmatprep.subr.mxu0 0.0
    %90 = vmatpush1.msra.mxu0 0.0
    %91 = vmatprep.subr.mxu0 0.0
    %92 = vmatpush1.msra.mxu0 0.0
    %93 = vmatprep.subr.mxu0 0.0
    %94 = vmatpush1.msra.mxu0 0.0
    %95 = vmatprep.subr.mxu0 0.0
    %96 = vmatpush1.msra.mxu0 0.0
    %97 = vmatprep.subr.mxu0 0.0
    %98 = vmatpush1.msra.mxu0 0.0
    %99 = vmatprep.subr.mxu0 0.0
    %100 = vmatpush1.msra.mxu0 0.0
    %101 = vmatprep.subr.mxu0 0.0
    %102 = vmatpush1.msra.mxu0 0.0
    %103 = vmatprep.subr.mxu0 0.0
    %104 = vmatpush1.msra.mxu0 0.0
    %105 = vmatprep.subr.mxu0 0.0
    %106 = vmatpush1.msra.mxu0 0.0
    %107 = vmatprep.subr.mxu0 0.0
    %108 = vmatpush1.msra.mxu0 0.0
    %109 = vmatprep.subr.mxu0 0.0
    %110 = vmatpush1.msra.mxu0 0.0
    %111 = vmatprep.subr.mxu0 0.0
    %112 = vmatpush1.msra.mxu0 0.0
    %113 = vmatprep.subr.mxu0 0.0
    %114 = vmatpush1.msra.mxu0 0.0
    %115 = vmatprep.subr.mxu0 0.0
    %116 = vmatpush1.msra.mxu0 0.0
    %117 = vmatprep.subr.mxu0 0.0
    %118 = vmatpush1.msra.mxu0 0.0
    %119 = vmatprep.subr.mxu0 0.0
    %120 = vmatpush1.msra.mxu0 0.0
    %121 = vmatprep.subr.mxu0 0.0
    %122 = vmatpush1.msra.mxu0 0.0
    %123 = vmatprep.subr.mxu0 0.0
    %124 = vmatpush1.msra.mxu0 0.0
    %125 = vmatprep.subr.mxu0 0.0
    %126 = vmatpush1.msra.mxu0 0.0
    %127 = vmatprep.subr.mxu0 0.0
    %128 = vmatpush1.msra.mxu0 0.0
    %129 = vmatprep.subr.mxu0 0.0
    %130 = vmatpush1.msra.mxu0 0.0
    %131 = vmatprep.subr.mxu0 0.0
    %132 = vmatpush1.msra.mxu0 0.0
    %133 = vmatprep.subr.mxu0 0.0
    %134 = vmatpush1.msra.mxu0 0.0
    %135 = vmatprep.mubr.f32.mxu0 0.0
    %v136 = vand.u32 %v64, 4294901760
    %v137 = vsub.f32 %v64, %v136
    %v138 = vand.u32 %v137, 4294901760
    %v139 = vsub.f32 %v137, %v138
    %v140 = vand.u32 %v139, 4294901760
    %141 = vmatmul.mubr.f32.gmra.mrb[0].mxu0 %v140
    %v142 = vpop.f32.mrb[0].mxu0
    %v143 = vadd.f32 0.0, %v142
    %v144 = vpop.f32.mrb[0].mxu0
    %145 = vdwg.mxu0
    %146 = vmatprep.subr.mxu0 0.0
    %v147 = vand.u32 %v68, 4294901760
    %v148 = vsub.f32 %v68, %v147
    %v149 = vand.u32 %v148, 4294901760
    %v150 = vsub.f32 %v148, %v149
    %v151 = vand.u32 %v150, 4294901760
    %152 = vmatpush1.msra.mxu0 %v151
    %153 = vmatprep.subr.mxu0 0.0
    %154 = vmatpush1.msra.mxu0 0.0
    %155 = vmatprep.subr.mxu0 0.0
    %156 = vmatpush1.msra.mxu0 0.0
    %157 = vmatprep.subr.mxu0 0.0
    %158 = vmatpush1.msra.mxu0 0.0
    %159 = vmatprep.subr.mxu0 0.0
    %160 = vmatpush1.msra.mxu0 0.0
    %161 = vmatprep.subr.mxu0 0.0
    %162 = vmatpush1.msra.mxu0 0.0
    %163 = vmatprep.subr.mxu0 0.0
    %164 = vmatpush1.msra.mxu0 0.0
    %165 = vmatprep.subr.mxu0 0.0
    %166 = vmatpush1.msra.mxu0 0.0
    %167 = vmatprep.subr.mxu0 0.0
    %168 = vmatpush1.msra.mxu0 0.0
    %169 = vmatprep.subr.mxu0 0.0
    %170 = vmatpush1.msra.mxu0 0.0
    %171 = vmatprep.subr.mxu0 0.0
    %172 = vmatpush1.msra.mxu0 0.0
    %173 = vmatprep.subr.mxu0 0.0
    %174 = vmatpush1.msra.mxu0 0.0
    %175 = vmatprep.subr.mxu0 0.0
    %176 = vmatpush1.msra.mxu0 0.0
    %177 = vmatprep.subr.mxu0 0.0
    %178 = vmatpush1.msra.mxu0 0.0
    %179 = vmatprep.subr.mxu0 0.0
    %180 = vmatpush1.msra.mxu0 0.0
    %181 = vmatprep.subr.mxu0 0.0
    %182 = vmatpush1.msra.mxu0 0.0
    %183 = vmatprep.subr.mxu0 0.0
    %184 = vmatpush1.msra.mxu0 0.0
    %185 = vmatprep.subr.mxu0 0.0
    %186 = vmatpush1.msra.mxu0 0.0
    %187 = vmatprep.subr.mxu0 0.0
    %188 = vmatpush1.msra.mxu0 0.0
    %189 = vmatprep.subr.mxu0 0.0
    %190 = vmatpush1.msra.mxu0 0.0
    %191 = vmatprep.subr.mxu0 0.0
    %192 = vmatpush1.msra.mxu0 0.0
    %193 = vmatprep.subr.mxu0 0.0
    %194 = vmatpush1.msra.mxu0 0.0
    %195 = vmatprep.subr.mxu0 0.0
    %196 = vmatpush1.msra.mxu0 0.0
    %197 = vmatprep.subr.mxu0 0.0
    %198 = vmatpush1.msra.mxu0 0.0
    %199 = vmatprep.subr.mxu0 0.0
    %200 = vmatpush1.msra.mxu0 0.0
    %201 = vmatprep.subr.mxu0 0.0
    %202 = vmatpush1.msra.mxu0 0.0
    %203 = vmatprep.subr.mxu0 0.0
    %204 = vmatpush1.msra.mxu0 0.0
    %205 = vmatprep.subr.mxu0 0.0
    %206 = vmatpush1.msra.mxu0 0.0
    %207 = vmatprep.subr.mxu0 0.0
    %208 = vmatpush1.msra.mxu0 0.0
    %209 = vmatprep.subr.mxu0 0.0
    %210 = vmatpush1.msra.mxu0 0.0
    %211 = vmatprep.subr.mxu0 0.0
    %212 = vmatpush1.msra.mxu0 0.0
    %213 = vmatprep.subr.mxu0 0.0
    %214 = vmatpush1.msra.mxu0 0.0
    %215 = vmatprep.mubr.f32.mxu0 0.0
    %v216 = vand.u32 %v64, 4294901760
    %217 = vmatmul.mubr.f32.gmra.mrb[0].mxu0 %v216
    %v218 = vpop.f32.mrb[0].mxu0
    %v219 = vadd.f32 %v143, %v218
    %v220 = vpop.f32.mrb[0].mxu0
    %221 = vdwg.mxu0
    %222 = vmatprep.subr.mxu0 0.0
    %v223 = vand.u32 %v68, 4294901760
    %v224 = vsub.f32 %v68, %v223
    %225 = vmatpush1.msra.mxu0 %v224
    %226 = vmatprep.subr.mxu0 0.0
    %227 = vmatpush1.msra.mxu0 0.0
    %228 = vmatprep.subr.mxu0 0.0
    %229 = vmatpush1.msra.mxu0 0.0
    %230 = vmatprep.subr.mxu0 0.0
    %231 = vmatpush1.msra.mxu0 0.0
    %232 = vmatprep.subr.mxu0 0.0
    %233 = vmatpush1.msra.mxu0 0.0
    %234 = vmatprep.subr.mxu0 0.0
    %235 = vmatpush1.msra.mxu0 0.0
    %236 = vmatprep.subr.mxu0 0.0
    %237 = vmatpush1.msra.mxu0 0.0
    %238 = vmatprep.subr.mxu0 0.0
    %239 = vmatpush1.msra.mxu0 0.0
    %240 = vmatprep.subr.mxu0 0.0
    %241 = vmatpush1.msra.mxu0 0.0
    %242 = vmatprep.subr.mxu0 0.0
    %243 = vmatpush1.msra.mxu0 0.0
    %244 = vmatprep.subr.mxu0 0.0
    %245 = vmatpush1.msra.mxu0 0.0
    %246 = vmatprep.subr.mxu0 0.0
    %247 = vmatpush1.msra.mxu0 0.0
    %248 = vmatprep.subr.mxu0 0.0
    %249 = vmatpush1.msra.mxu0 0.0
    %250 = vmatprep.subr.mxu0 0.0
    %251 = vmatpush1.msra.mxu0 0.0
    %252 = vmatprep.subr.mxu0 0.0
    %253 = vmatpush1.msra.mxu0 0.0
    %254 = vmatprep.subr.mxu0 0.0
    %255 = vmatpush1.msra.mxu0 0.0
    %256 = vmatprep.subr.mxu0 0.0
    %257 = vmatpush1.msra.mxu0 0.0
    %258 = vmatprep.subr.mxu0 0.0
    %259 = vmatpush1.msra.mxu0 0.0
    %260 = vmatprep.subr.mxu0 0.0
    %261 = vmatpush1.msra.mxu0 0.0
    %262 = vmatprep.subr.mxu0 0.0
    %263 = vmatpush1.msra.mxu0 0.0
    %264 = vmatprep.subr.mxu0 0.0
    %265 = vmatpush1.msra.mxu0 0.0
    %266 = vmatprep.subr.mxu0 0.0
    %267 = vmatpush1.msra.mxu0 0.0
    %268 = vmatprep.subr.mxu0 0.0
    %269 = vmatpush1.msra.mxu0 0.0
    %270 = vmatprep.subr.mxu0 0.0
    %271 = vmatpush1.msra.mxu0 0.0
    %272 = vmatprep.subr.mxu0 0.0
    %273 = vmatpush1.msra.mxu0 0.0
    %274 = vmatprep.subr.mxu0 0.0
    %275 = vmatpush1.msra.mxu0 0.0
    %276 = vmatprep.subr.mxu0 0.0
    %277 = vmatpush1.msra.mxu0 0.0
    %278 = vmatprep.subr.mxu0 0.0
    %279 = vmatpush1.msra.mxu0 0.0
    %280 = vmatprep.subr.mxu0 0.0
    %281 = vmatpush1.msra.mxu0 0.0
    %282 = vmatprep.subr.mxu0 0.0
    %283 = vmatpush1.msra.mxu0 0.0
    %284 = vmatprep.subr.mxu0 0.0
    %285 = vmatpush1.msra.mxu0 0.0
    %286 = vmatprep.subr.mxu0 0.0
    %287 = vmatpush1.msra.mxu0 0.0
    %288 = vmatprep.mubr.f32.mxu0 0.0
    %v289 = vand.u32 %v64, 4294901760
    %v290 = vsub.f32 %v64, %v289
    %291 = vmatmul.mubr.f32.gmra.mrb[0].mxu0 %v290
    %v292 = vpop.f32.mrb[0].mxu0
    %v293 = vadd.f32 %v219, %v292
    %v294 = vpop.f32.mrb[0].mxu0
    %295 = vdwg.mxu0
    %296 = vmatprep.subr.mxu0 0.0
    %v297 = vand.u32 %v68, 4294901760
    %298 = vmatpush1.msra.mxu0 %v297
    %299 = vmatprep.subr.mxu0 0.0
    %300 = vmatpush1.msra.mxu0 0.0
    %301 = vmatprep.subr.mxu0 0.0
    %302 = vmatpush1.msra.mxu0 0.0
    %303 = vmatprep.subr.mxu0 0.0
    %304 = vmatpush1.msra.mxu0 0.0
    %305 = vmatprep.subr.mxu0 0.0
    %306 = vmatpush1.msra.mxu0 0.0
    %307 = vmatprep.subr.mxu0 0.0
    %308 = vmatpush1.msra.mxu0 0.0
    %309 = vmatprep.subr.mxu0 0.0
    %310 = vmatpush1.msra.mxu0 0.0
    %311 = vmatprep.subr.mxu0 0.0
    %312 = vmatpush1.msra.mxu0 0.0
    %313 = vmatprep.subr.mxu0 0.0
    %314 = vmatpush1.msra.mxu0 0.0
    %315 = vmatprep.subr.mxu0 0.0
    %316 = vmatpush1.msra.mxu0 0.0
    %317 = vmatprep.subr.mxu0 0.0
    %318 = vmatpush1.msra.mxu0 0.0
    %319 = vmatprep.subr.mxu0 0.0
    %320 = vmatpush1.msra.mxu0 0.0
    %321 = vmatprep.subr.mxu0 0.0
    %322 = vmatpush1.msra.mxu0 0.0
    %323 = vmatprep.subr.mxu0 0.0
    %324 = vmatpush1.msra.mxu0 0.0
    %325 = vmatprep.subr.mxu0 0.0
    %326 = vmatpush1.msra.mxu0 0.0
    %327 = vmatprep.subr.mxu0 0.0
    %328 = vmatpush1.msra.mxu0 0.0
    %329 = vmatprep.subr.mxu0 0.0
    %330 = vmatpush1.msra.mxu0 0.0
    %331 = vmatprep.subr.mxu0 0.0
    %332 = vmatpush1.msra.mxu0 0.0
    %333 = vmatprep.subr.mxu0 0.0
    %334 = vmatpush1.msra.mxu0 0.0
    %335 = vmatprep.subr.mxu0 0.0
    %336 = vmatpush1.msra.mxu0 0.0
    %337 = vmatprep.subr.mxu0 0.0
    %338 = vmatpush1.msra.mxu0 0.0
    %339 = vmatprep.subr.mxu0 0.0
    %340 = vmatpush1.msra.mxu0 0.0
    %341 = vmatprep.subr.mxu0 0.0
    %342 = vmatpush1.msra.mxu0 0.0
    %343 = vmatprep.subr.mxu0 0.0
    %344 = vmatpush1.msra.mxu0 0.0
    %345 = vmatprep.subr.mxu0 0.0
    %346 = vmatpush1.msra.mxu0 0.0
    %347 = vmatprep.subr.mxu0 0.0
    %348 = vmatpush1.msra.mxu0 0.0
    %349 = vmatprep.subr.mxu0 0.0
    %350 = vmatpush1.msra.mxu0 0.0
    %351 = vmatprep.subr.mxu0 0.0
    %352 = vmatpush1.msra.mxu0 0.0
    %353 = vmatprep.subr.mxu0 0.0
    %354 = vmatpush1.msra.mxu0 0.0
    %355 = vmatprep.subr.mxu0 0.0
    %356 = vmatpush1.msra.mxu0 0.0
    %357 = vmatprep.subr.mxu0 0.0
    %358 = vmatpush1.msra.mxu0 0.0
    %359 = vmatprep.subr.mxu0 0.0
    %360 = vmatpush1.msra.mxu0 0.0
    %361 = vmatprep.mubr.f32.mxu0 0.0
    %v362 = vand.u32 %v64, 4294901760
    %v363 = vsub.f32 %v64, %v362
    %v364 = vand.u32 %v363, 4294901760
    %365 = vmatmul.mubr.f32.gmra.mrb[0].mxu0 %v364
    %v366 = vpop.f32.mrb[0].mxu0
    %v367 = vadd.f32 %v293, %v366
    %v368 = vpop.f32.mrb[0].mxu0
    %369 = vdwg.mxu0
    %370 = vmatprep.subr.mxu0 0.0
    %v371 = vand.u32 %v68, 4294901760
    %v372 = vsub.f32 %v68, %v371
    %v373 = vand.u32 %v372, 4294901760
    %374 = vmatpush1.msra.mxu0 %v373
    %375 = vmatprep.subr.mxu0 0.0
    %376 = vmatpush1.msra.mxu0 0.0
    %377 = vmatprep.subr.mxu0 0.0
    %378 = vmatpush1.msra.mxu0 0.0
    %379 = vmatprep.subr.mxu0 0.0
    %380 = vmatpush1.msra.mxu0 0.0
    %381 = vmatprep.subr.mxu0 0.0
    %382 = vmatpush1.msra.mxu0 0.0
    %383 = vmatprep.subr.mxu0 0.0
    %384 = vmatpush1.msra.mxu0 0.0
    %385 = vmatprep.subr.mxu0 0.0
    %386 = vmatpush1.msra.mxu0 0.0
    %387 = vmatprep.subr.mxu0 0.0
    %388 = vmatpush1.msra.mxu0 0.0
    %389 = vmatprep.subr.mxu0 0.0
    %390 = vmatpush1.msra.mxu0 0.0
    %391 = vmatprep.subr.mxu0 0.0
    %392 = vmatpush1.msra.mxu0 0.0
    %393 = vmatprep.subr.mxu0 0.0
    %394 = vmatpush1.msra.mxu0 0.0
    %395 = vmatprep.subr.mxu0 0.0
    %396 = vmatpush1.msra.mxu0 0.0
    %397 = vmatprep.subr.mxu0 0.0
    %398 = vmatpush1.msra.mxu0 0.0
    %399 = vmatprep.subr.mxu0 0.0
    %400 = vmatpush1.msra.mxu0 0.0
    %401 = vmatprep.subr.mxu0 0.0
    %402 = vmatpush1.msra.mxu0 0.0
    %403 = vmatprep.subr.mxu0 0.0
    %404 = vmatpush1.msra.mxu0 0.0
    %405 = vmatprep.subr.mxu0 0.0
    %406 = vmatpush1.msra.mxu0 0.0
    %407 = vmatprep.subr.mxu0 0.0
    %408 = vmatpush1.msra.mxu0 0.0
    %409 = vmatprep.subr.mxu0 0.0
    %410 = vmatpush1.msra.mxu0 0.0
    %411 = vmatprep.subr.mxu0 0.0
    %412 = vmatpush1.msra.mxu0 0.0
    %413 = vmatprep.subr.mxu0 0.0
    %414 = vmatpush1.msra.mxu0 0.0
    %415 = vmatprep.subr.mxu0 0.0
    %416 = vmatpush1.msra.mxu0 0.0
    %417 = vmatprep.subr.mxu0 0.0
    %418 = vmatpush1.msra.mxu0 0.0
    %419 = vmatprep.subr.mxu0 0.0
    %420 = vmatpush1.msra.mxu0 0.0
    %421 = vmatprep.subr.mxu0 0.0
    %422 = vmatpush1.msra.mxu0 0.0
    %423 = vmatprep.subr.mxu0 0.0
    %424 = vmatpush1.msra.mxu0 0.0
    %425 = vmatprep.subr.mxu0 0.0
    %426 = vmatpush1.msra.mxu0 0.0
    %427 = vmatprep.subr.mxu0 0.0
    %428 = vmatpush1.msra.mxu0 0.0
    %429 = vmatprep.subr.mxu0 0.0
    %430 = vmatpush1.msra.mxu0 0.0
    %431 = vmatprep.subr.mxu0 0.0
    %432 = vmatpush1.msra.mxu0 0.0
    %433 = vmatprep.subr.mxu0 0.0
    %434 = vmatpush1.msra.mxu0 0.0
    %435 = vmatprep.subr.mxu0 0.0
    %436 = vmatpush1.msra.mxu0 0.0
    %437 = vmatprep.mubr.f32.mxu0 0.0
    %v438 = vand.u32 %v64, 4294901760
    %439 = vmatmul.mubr.f32.gmra.mrb[0].mxu0 %v438
    %v440 = vpop.f32.mrb[0].mxu0
    %v441 = vadd.f32 %v367, %v440
    %v442 = vpop.f32.mrb[0].mxu0
    %443 = vdwg.mxu0
    %444 = vmatprep.subr.mxu0 0.0
    %v445 = vand.u32 %v68, 4294901760
    %446 = vmatpush1.msra.mxu0 %v445
    %447 = vmatprep.subr.mxu0 0.0
    %448 = vmatpush1.msra.mxu0 0.0
    %449 = vmatprep.subr.mxu0 0.0
    %450 = vmatpush1.msra.mxu0 0.0
    %451 = vmatprep.subr.mxu0 0.0
    %452 = vmatpush1.msra.mxu0 0.0
    %453 = vmatprep.subr.mxu0 0.0
    %454 = vmatpush1.msra.mxu0 0.0
    %455 = vmatprep.subr.mxu0 0.0
    %456 = vmatpush1.msra.mxu0 0.0
    %457 = vmatprep.subr.mxu0 0.0
    %458 = vmatpush1.msra.mxu0 0.0
    %459 = vmatprep.subr.mxu0 0.0
    %460 = vmatpush1.msra.mxu0 0.0
    %461 = vmatprep.subr.mxu0 0.0
    %462 = vmatpush1.msra.mxu0 0.0
    %463 = vmatprep.subr.mxu0 0.0
    %464 = vmatpush1.msra.mxu0 0.0
    %465 = vmatprep.subr.mxu0 0.0
    %466 = vmatpush1.msra.mxu0 0.0
    %467 = vmatprep.subr.mxu0 0.0
    %468 = vmatpush1.msra.mxu0 0.0
    %469 = vmatprep.subr.mxu0 0.0
    %470 = vmatpush1.msra.mxu0 0.0
    %471 = vmatprep.subr.mxu0 0.0
    %472 = vmatpush1.msra.mxu0 0.0
    %473 = vmatprep.subr.mxu0 0.0
    %474 = vmatpush1.msra.mxu0 0.0
    %475 = vmatprep.subr.mxu0 0.0
    %476 = vmatpush1.msra.mxu0 0.0
    %477 = vmatprep.subr.mxu0 0.0
    %478 = vmatpush1.msra.mxu0 0.0
    %479 = vmatprep.subr.mxu0 0.0
    %480 = vmatpush1.msra.mxu0 0.0
    %481 = vmatprep.subr.mxu0 0.0
    %482 = vmatpush1.msra.mxu0 0.0
    %483 = vmatprep.subr.mxu0 0.0
    %484 = vmatpush1.msra.mxu0 0.0
    %485 = vmatprep.subr.mxu0 0.0
    %486 = vmatpush1.msra.mxu0 0.0
    %487 = vmatprep.subr.mxu0 0.0
    %488 = vmatpush1.msra.mxu0 0.0
    %489 = vmatprep.subr.mxu0 0.0
    %490 = vmatpush1.msra.mxu0 0.0
    %491 = vmatprep.subr.mxu0 0.0
    %492 = vmatpush1.msra.mxu0 0.0
    %493 = vmatprep.subr.mxu0 0.0
    %494 = vmatpush1.msra.mxu0 0.0
    %495 = vmatprep.subr.mxu0 0.0
    %496 = vmatpush1.msra.mxu0 0.0
    %497 = vmatprep.subr.mxu0 0.0
    %498 = vmatpush1.msra.mxu0 0.0
    %499 = vmatprep.subr.mxu0 0.0
    %500 = vmatpush1.msra.mxu0 0.0
    %501 = vmatprep.subr.mxu0 0.0
    %502 = vmatpush1.msra.mxu0 0.0
    %503 = vmatprep.subr.mxu0 0.0
    %504 = vmatpush1.msra.mxu0 0.0
    %505 = vmatprep.subr.mxu0 0.0
    %506 = vmatpush1.msra.mxu0 0.0
    %507 = vmatprep.subr.mxu0 0.0
    %508 = vmatpush1.msra.mxu0 0.0
    %509 = vmatprep.mubr.f32.mxu0 0.0
    %v510 = vand.u32 %v64, 4294901760
    %511 = vmatmul.mubr.f32.gmra.mrb[0].mxu0 %v510
    %v512 = vpop.f32.mrb[0].mxu0
    %v513 = vadd.f32 %v441, %v512
    %v514 = vpop.f32.mrb[0].mxu0
    %515 = vdwg.mxu0
    %v516 = vmul.f32 %v58, %v513
    %517 = vst.msk [vmem:[#allocation3] sm:$0xff] %vm62, %v516
    %v518 = vadd.f32 %v56, 0.0
    %v519 = vxor.u32 %v518, 2147483648
    %v520 = vmul.f32 %v519, 1.442695
    %v521 = vpow.pop %v520
    %v522 = vadd.f32 %v521, 1.0
    %v523 = vrcp.pop %v522
    %v524 = vmul.f32 1.0, %v523
    %v526 = vsel %vm62, %v524, 0
    %v529 = vsel %vm66, %v59, 0
    %531 = vmatprep.subr.mxu0 0.0
    %v532 = vand.u32 %v529, 4294901760
    %533 = vmatpush1.msra.mxu0 %v532
    %534 = vmatprep.subr.mxu0 0.0
    %535 = vmatpush1.msra.mxu0 0.0
    %536 = vmatprep.subr.mxu0 0.0
    %537 = vmatpush1.msra.mxu0 0.0
    %538 = vmatprep.subr.mxu0 0.0
    %539 = vmatpush1.msra.mxu0 0.0
    %540 = vmatprep.subr.mxu0 0.0
    %541 = vmatpush1.msra.mxu0 0.0
    %542 = vmatprep.subr.mxu0 0.0
    %543 = vmatpush1.msra.mxu0 0.0
    %544 = vmatprep.subr.mxu0 0.0
    %545 = vmatpush1.msra.mxu0 0.0
    %546 = vmatprep.subr.mxu0 0.0
    %547 = vmatpush1.msra.mxu0 0.0
    %548 = vmatprep.subr.mxu0 0.0
    %549 = vmatpush1.msra.mxu0 0.0
    %550 = vmatprep.subr.mxu0 0.0
    %551 = vmatpush1.msra.mxu0 0.0
    %552 = vmatprep.subr.mxu0 0.0
    %553 = vmatpush1.msra.mxu0 0.0
    %554 = vmatprep.subr.mxu0 0.0
    %555 = vmatpush1.msra.mxu0 0.0
    %556 = vmatprep.subr.mxu0 0.0
    %557 = vmatpush1.msra.mxu0 0.0
    %558 = vmatprep.subr.mxu0 0.0
    %559 = vmatpush1.msra.mxu0 0.0
    %560 = vmatprep.subr.mxu0 0.0
    %561 = vmatpush1.msra.mxu0 0.0
    %562 = vmatprep.subr.mxu0 0.0
    %563 = vmatpush1.msra.mxu0 0.0
    %564 = vmatprep.subr.mxu0 0.0
    %565 = vmatpush1.msra.mxu0 0.0
    %566 = vmatprep.subr.mxu0 0.0
    %567 = vmatpush1.msra.mxu0 0.0
    %568 = vmatprep.subr.mxu0 0.0
    %569 = vmatpush1.msra.mxu0 0.0
    %570 = vmatprep.subr.mxu0 0.0
    %571 = vmatpush1.msra.mxu0 0.0
    %572 = vmatprep.subr.mxu0 0.0
    %573 = vmatpush1.msra.mxu0 0.0
    %574 = vmatprep.subr.mxu0 0.0
    %575 = vmatpush1.msra.mxu0 0.0
    %576 = vmatprep.subr.mxu0 0.0
    %577 = vmatpush1.msra.mxu0 0.0
    %578 = vmatprep.subr.mxu0 0.0
    %579 = vmatpush1.msra.mxu0 0.0
    %580 = vmatprep.subr.mxu0 0.0
    %581 = vmatpush1.msra.mxu0 0.0
    %582 = vmatprep.subr.mxu0 0.0
    %583 = vmatpush1.msra.mxu0 0.0
    %584 = vmatprep.subr.mxu0 0.0
    %585 = vmatpush1.msra.mxu0 0.0
    %586 = vmatprep.subr.mxu0 0.0
    %587 = vmatpush1.msra.mxu0 0.0
    %588 = vmatprep.subr.mxu0 0.0
    %589 = vmatpush1.msra.mxu0 0.0
    %590 = vmatprep.subr.mxu0 0.0
    %591 = vmatpush1.msra.mxu0 0.0
    %592 = vmatprep.subr.mxu0 0.0
    %593 = vmatpush1.msra.mxu0 0.0
    %594 = vmatprep.subr.mxu0 0.0
    %595 = vmatpush1.msra.mxu0 0.0
    %596 = vmatprep.mubr.f32.mxu0 0.0
    %v597 = vand.u32 %v526, 4294901760
    %v598 = vsub.f32 %v526, %v597
    %v599 = vand.u32 %v598, 4294901760
    %v600 = vsub.f32 %v598, %v599
    %v601 = vand.u32 %v600, 4294901760
    %602 = vmatmul.mubr.f32.gmra.mrb[0].mxu0 %v601
    %v603 = vpop.f32.mrb[0].mxu0
    %v604 = vadd.f32 0.0, %v603
    %v605 = vpop.f32.mrb[0].mxu0
    %606 = vdwg.mxu0
    %607 = vmatprep.subr.mxu0 0.0
    %v608 = vand.u32 %v529, 4294901760
    %v609 = vsub.f32 %v529, %v608
    %v610 = vand.u32 %v609, 4294901760
    %v611 = vsub.f32 %v609, %v610
    %v612 = vand.u32 %v611, 4294901760
    %613 = vmatpush1.msra.mxu0 %v612
    %614 = vmatprep.subr.mxu0 0.0
    %615 = vmatpush1.msra.mxu0 0.0
    %616 = vmatprep.subr.mxu0 0.0
    %617 = vmatpush1.msra.mxu0 0.0
    %618 = vmatprep.subr.mxu0 0.0
    %619 = vmatpush1.msra.mxu0 0.0
    %620 = vmatprep.subr.mxu0 0.0
    %621 = vmatpush1.msra.mxu0 0.0
    %622 = vmatprep.subr.mxu0 0.0
    %623 = vmatpush1.msra.mxu0 0.0
    %624 = vmatprep.subr.mxu0 0.0
    %625 = vmatpush1.msra.mxu0 0.0
    %626 = vmatprep.subr.mxu0 0.0
    %627 = vmatpush1.msra.mxu0 0.0
    %628 = vmatprep.subr.mxu0 0.0
    %629 = vmatpush1.msra.mxu0 0.0
    %630 = vmatprep.subr.mxu0 0.0
    %631 = vmatpush1.msra.mxu0 0.0
    %632 = vmatprep.subr.mxu0 0.0
    %633 = vmatpush1.msra.mxu0 0.0
    %634 = vmatprep.subr.mxu0 0.0
    %635 = vmatpush1.msra.mxu0 0.0
    %636 = vmatprep.subr.mxu0 0.0
    %637 = vmatpush1.msra.mxu0 0.0
    %638 = vmatprep.subr.mxu0 0.0
    %639 = vmatpush1.msra.mxu0 0.0
    %640 = vmatprep.subr.mxu0 0.0
    %641 = vmatpush1.msra.mxu0 0.0
    %642 = vmatprep.subr.mxu0 0.0
    %643 = vmatpush1.msra.mxu0 0.0
    %644 = vmatprep.subr.mxu0 0.0
    %645 = vmatpush1.msra.mxu0 0.0
    %646 = vmatprep.subr.mxu0 0.0
    %647 = vmatpush1.msra.mxu0 0.0
    %648 = vmatprep.subr.mxu0 0.0
    %649 = vmatpush1.msra.mxu0 0.0
    %650 = vmatprep.subr.mxu0 0.0
    %651 = vmatpush1.msra.mxu0 0.0
    %652 = vmatprep.subr.mxu0 0.0
    %653 = vmatpush1.msra.mxu0 0.0
    %654 = vmatprep.subr.mxu0 0.0
    %655 = vmatpush1.msra.mxu0 0.0
    %656 = vmatprep.subr.mxu0 0.0
    %657 = vmatpush1.msra.mxu0 0.0
    %658 = vmatprep.subr.mxu0 0.0
    %659 = vmatpush1.msra.mxu0 0.0
    %660 = vmatprep.subr.mxu0 0.0
    %661 = vmatpush1.msra.mxu0 0.0
    %662 = vmatprep.subr.mxu0 0.0
    %663 = vmatpush1.msra.mxu0 0.0
    %664 = vmatprep.subr.mxu0 0.0
    %665 = vmatpush1.msra.mxu0 0.0
    %666 = vmatprep.subr.mxu0 0.0
    %667 = vmatpush1.msra.mxu0 0.0
    %668 = vmatprep.subr.mxu0 0.0
    %669 = vmatpush1.msra.mxu0 0.0
    %670 = vmatprep.subr.mxu0 0.0
    %671 = vmatpush1.msra.mxu0 0.0
    %672 = vmatprep.subr.mxu0 0.0
    %673 = vmatpush1.msra.mxu0 0.0
    %674 = vmatprep.subr.mxu0 0.0
    %675 = vmatpush1.msra.mxu0 0.0
    %676 = vmatprep.mubr.f32.mxu0 0.0
    %v677 = vand.u32 %v526, 4294901760
    %678 = vmatmul.mubr.f32.gmra.mrb[0].mxu0 %v677
    %v679 = vpop.f32.mrb[0].mxu0
    %v680 = vadd.f32 %v604, %v679
    %v681 = vpop.f32.mrb[0].mxu0
    %682 = vdwg.mxu0
    %683 = vmatprep.subr.mxu0 0.0
    %v684 = vand.u32 %v529, 4294901760
    %v685 = vsub.f32 %v529, %v684
    %686 = vmatpush1.msra.mxu0 %v685
    %687 = vmatprep.subr.mxu0 0.0
    %688 = vmatpush1.msra.mxu0 0.0
    %689 = vmatprep.subr.mxu0 0.0
    %690 = vmatpush1.msra.mxu0 0.0
    %691 = vmatprep.subr.mxu0 0.0
    %692 = vmatpush1.msra.mxu0 0.0
    %693 = vmatprep.subr.mxu0 0.0
    %694 = vmatpush1.msra.mxu0 0.0
    %695 = vmatprep.subr.mxu0 0.0
    %696 = vmatpush1.msra.mxu0 0.0
    %697 = vmatprep.subr.mxu0 0.0
    %698 = vmatpush1.msra.mxu0 0.0
    %699 = vmatprep.subr.mxu0 0.0
    %700 = vmatpush1.msra.mxu0 0.0
    %701 = vmatprep.subr.mxu0 0.0
    %702 = vmatpush1.msra.mxu0 0.0
    %703 = vmatprep.subr.mxu0 0.0
    %704 = vmatpush1.msra.mxu0 0.0
    %705 = vmatprep.subr.mxu0 0.0
    %706 = vmatpush1.msra.mxu0 0.0
    %707 = vmatprep.subr.mxu0 0.0
    %708 = vmatpush1.msra.mxu0 0.0
    %709 = vmatprep.subr.mxu0 0.0
    %710 = vmatpush1.msra.mxu0 0.0
    %711 = vmatprep.subr.mxu0 0.0
    %712 = vmatpush1.msra.mxu0 0.0
    %713 = vmatprep.subr.mxu0 0.0
    %714 = vmatpush1.msra.mxu0 0.0
    %715 = vmatprep.subr.mxu0 0.0
    %716 = vmatpush1.msra.mxu0 0.0
    %717 = vmatprep.subr.mxu0 0.0
    %718 = vmatpush1.msra.mxu0 0.0
    %719 = vmatprep.subr.mxu0 0.0
    %720 = vmatpush1.msra.mxu0 0.0
    %721 = vmatprep.subr.mxu0 0.0
    %722 = vmatpush1.msra.mxu0 0.0
    %723 = vmatprep.subr.mxu0 0.0
    %724 = vmatpush1.msra.mxu0 0.0
    %725 = vmatprep.subr.mxu0 0.0
    %726 = vmatpush1.msra.mxu0 0.0
    %727 = vmatprep.subr.mxu0 0.0
    %728 = vmatpush1.msra.mxu0 0.0
    %729 = vmatprep.subr.mxu0 0.0
    %730 = vmatpush1.msra.mxu0 0.0
    %731 = vmatprep.subr.mxu0 0.0
    %732 = vmatpush1.msra.mxu0 0.0
    %733 = vmatprep.subr.mxu0 0.0
    %734 = vmatpush1.msra.mxu0 0.0
    %735 = vmatprep.subr.mxu0 0.0
    %736 = vmatpush1.msra.mxu0 0.0
    %737 = vmatprep.subr.mxu0 0.0
    %738 = vmatpush1.msra.mxu0 0.0
    %739 = vmatprep.subr.mxu0 0.0
    %740 = vmatpush1.msra.mxu0 0.0
    %741 = vmatprep.subr.mxu0 0.0
    %742 = vmatpush1.msra.mxu0 0.0
    %743 = vmatprep.subr.mxu0 0.0
    %744 = vmatpush1.msra.mxu0 0.0
    %745 = vmatprep.subr.mxu0 0.0
    %746 = vmatpush1.msra.mxu0 0.0
    %747 = vmatprep.subr.mxu0 0.0
    %748 = vmatpush1.msra.mxu0 0.0
    %749 = vmatprep.mubr.f32.mxu0 0.0
    %v750 = vand.u32 %v526, 4294901760
    %v751 = vsub.f32 %v526, %v750
    %752 = vmatmul.mubr.f32.gmra.mrb[0].mxu0 %v751
    %v753 = vpop.f32.mrb[0].mxu0
    %v754 = vadd.f32 %v680, %v753
    %v755 = vpop.f32.mrb[0].mxu0
    %756 = vdwg.mxu0
    %757 = vmatprep.subr.mxu0 0.0
    %v758 = vand.u32 %v529, 4294901760
    %759 = vmatpush1.msra.mxu0 %v758
    %760 = vmatprep.subr.mxu0 0.0
    %761 = vmatpush1.msra.mxu0 0.0
    %762 = vmatprep.subr.mxu0 0.0
    %763 = vmatpush1.msra.mxu0 0.0
    %764 = vmatprep.subr.mxu0 0.0
    %765 = vmatpush1.msra.mxu0 0.0
    %766 = vmatprep.subr.mxu0 0.0
    %767 = vmatpush1.msra.mxu0 0.0
    %768 = vmatprep.subr.mxu0 0.0
    %769 = vmatpush1.msra.mxu0 0.0
    %770 = vmatprep.subr.mxu0 0.0
    %771 = vmatpush1.msra.mxu0 0.0
    %772 = vmatprep.subr.mxu0 0.0
    %773 = vmatpush1.msra.mxu0 0.0
    %774 = vmatprep.subr.mxu0 0.0
    %775 = vmatpush1.msra.mxu0 0.0
    %776 = vmatprep.subr.mxu0 0.0
    %777 = vmatpush1.msra.mxu0 0.0
    %778 = vmatprep.subr.mxu0 0.0
    %779 = vmatpush1.msra.mxu0 0.0
    %780 = vmatprep.subr.mxu0 0.0
    %781 = vmatpush1.msra.mxu0 0.0
    %782 = vmatprep.subr.mxu0 0.0
    %783 = vmatpush1.msra.mxu0 0.0
    %784 = vmatprep.subr.mxu0 0.0
    %785 = vmatpush1.msra.mxu0 0.0
    %786 = vmatprep.subr.mxu0 0.0
    %787 = vmatpush1.msra.mxu0 0.0
    %788 = vmatprep.subr.mxu0 0.0
    %789 = vmatpush1.msra.mxu0 0.0
    %790 = vmatprep.subr.mxu0 0.0
    %791 = vmatpush1.msra.mxu0 0.0
    %792 = vmatprep.subr.mxu0 0.0
    %793 = vmatpush1.msra.mxu0 0.0
    %794 = vmatprep.subr.mxu0 0.0
    %795 = vmatpush1.msra.mxu0 0.0
    %796 = vmatprep.subr.mxu0 0.0
    %797 = vmatpush1.msra.mxu0 0.0
    %798 = vmatprep.subr.mxu0 0.0
    %799 = vmatpush1.msra.mxu0 0.0
    %800 = vmatprep.subr.mxu0 0.0
    %801 = vmatpush1.msra.mxu0 0.0
    %802 = vmatprep.subr.mxu0 0.0
    %803 = vmatpush1.msra.mxu0 0.0
    %804 = vmatprep.subr.mxu0 0.0
    %805 = vmatpush1.msra.mxu0 0.0
    %806 = vmatprep.subr.mxu0 0.0
    %807 = vmatpush1.msra.mxu0 0.0
    %808 = vmatprep.subr.mxu0 0.0
    %809 = vmatpush1.msra.mxu0 0.0
    %810 = vmatprep.subr.mxu0 0.0
    %811 = vmatpush1.msra.mxu0 0.0
    %812 = vmatprep.subr.mxu0 0.0
    %813 = vmatpush1.msra.mxu0 0.0
    %814 = vmatprep.subr.mxu0 0.0
    %815 = vmatpush1.msra.mxu0 0.0
    %816 = vmatprep.subr.mxu0 0.0
    %817 = vmatpush1.msra.mxu0 0.0
    %818 = vmatprep.subr.mxu0 0.0
    %819 = vmatpush1.msra.mxu0 0.0
    %820 = vmatprep.subr.mxu0 0.0
    %821 = vmatpush1.msra.mxu0 0.0
    %822 = vmatprep.mubr.f32.mxu0 0.0
    %v823 = vand.u32 %v526, 4294901760
    %v824 = vsub.f32 %v526, %v823
    %v825 = vand.u32 %v824, 4294901760
    %826 = vmatmul.mubr.f32.gmra.mrb[0].mxu0 %v825
    %v827 = vpop.f32.mrb[0].mxu0
    %v828 = vadd.f32 %v754, %v827
    %v829 = vpop.f32.mrb[0].mxu0
    %830 = vdwg.mxu0
    %831 = vmatprep.subr.mxu0 0.0
    %v832 = vand.u32 %v529, 4294901760
    %v833 = vsub.f32 %v529, %v832
    %v834 = vand.u32 %v833, 4294901760
    %835 = vmatpush1.msra.mxu0 %v834
    %836 = vmatprep.subr.mxu0 0.0
    %837 = vmatpush1.msra.mxu0 0.0
    %838 = vmatprep.subr.mxu0 0.0
    %839 = vmatpush1.msra.mxu0 0.0
    %840 = vmatprep.subr.mxu0 0.0
    %841 = vmatpush1.msra.mxu0 0.0
    %842 = vmatprep.subr.mxu0 0.0
    %843 = vmatpush1.msra.mxu0 0.0
    %844 = vmatprep.subr.mxu0 0.0
    %845 = vmatpush1.msra.mxu0 0.0
    %846 = vmatprep.subr.mxu0 0.0
    %847 = vmatpush1.msra.mxu0 0.0
    %848 = vmatprep.subr.mxu0 0.0
    %849 = vmatpush1.msra.mxu0 0.0
    %850 = vmatprep.subr.mxu0 0.0
    %851 = vmatpush1.msra.mxu0 0.0
    %852 = vmatprep.subr.mxu0 0.0
    %853 = vmatpush1.msra.mxu0 0.0
    %854 = vmatprep.subr.mxu0 0.0
    %855 = vmatpush1.msra.mxu0 0.0
    %856 = vmatprep.subr.mxu0 0.0
    %857 = vmatpush1.msra.mxu0 0.0
    %858 = vmatprep.subr.mxu0 0.0
    %859 = vmatpush1.msra.mxu0 0.0
    %860 = vmatprep.subr.mxu0 0.0
    %861 = vmatpush1.msra.mxu0 0.0
    %862 = vmatprep.subr.mxu0 0.0
    %863 = vmatpush1.msra.mxu0 0.0
    %864 = vmatprep.subr.mxu0 0.0
    %865 = vmatpush1.msra.mxu0 0.0
    %866 = vmatprep.subr.mxu0 0.0
    %867 = vmatpush1.msra.mxu0 0.0
    %868 = vmatprep.subr.mxu0 0.0
    %869 = vmatpush1.msra.mxu0 0.0
    %870 = vmatprep.subr.mxu0 0.0
    %871 = vmatpush1.msra.mxu0 0.0
    %872 = vmatprep.subr.mxu0 0.0
    %873 = vmatpush1.msra.mxu0 0.0
    %874 = vmatprep.subr.mxu0 0.0
    %875 = vmatpush1.msra.mxu0 0.0
    %876 = vmatprep.subr.mxu0 0.0
    %877 = vmatpush1.msra.mxu0 0.0
    %878 = vmatprep.subr.mxu0 0.0
    %879 = vmatpush1.msra.mxu0 0.0
    %880 = vmatprep.subr.mxu0 0.0
    %881 = vmatpush1.msra.mxu0 0.0
    %882 = vmatprep.subr.mxu0 0.0
    %883 = vmatpush1.msra.mxu0 0.0
    %884 = vmatprep.subr.mxu0 0.0
    %885 = vmatpush1.msra.mxu0 0.0
    %886 = vmatprep.subr.mxu0 0.0
    %887 = vmatpush1.msra.mxu0 0.0
    %888 = vmatprep.subr.mxu0 0.0
    %889 = vmatpush1.msra.mxu0 0.0
    %890 = vmatprep.subr.mxu0 0.0
    %891 = vmatpush1.msra.mxu0 0.0
    %892 = vmatprep.subr.mxu0 0.0
    %893 = vmatpush1.msra.mxu0 0.0
    %894 = vmatprep.subr.mxu0 0.0
    %895 = vmatpush1.msra.mxu0 0.0
    %896 = vmatprep.subr.mxu0 0.0
    %897 = vmatpush1.msra.mxu0 0.0
    %898 = vmatprep.mubr.f32.mxu0 0.0
    %v899 = vand.u32 %v526, 4294901760
    %900 = vmatmul.mubr.f32.gmra.mrb[0].mxu0 %v899
    %v901 = vpop.f32.mrb[0].mxu0
    %v902 = vadd.f32 %v828, %v901
    %v903 = vpop.f32.mrb[0].mxu0
    %904 = vdwg.mxu0
    %905 = vmatprep.subr.mxu0 0.0
    %v906 = vand.u32 %v529, 4294901760
    %907 = vmatpush1.msra.mxu0 %v906
    %908 = vmatprep.subr.mxu0 0.0
    %909 = vmatpush1.msra.mxu0 0.0
    %910 = vmatprep.subr.mxu0 0.0
    %911 = vmatpush1.msra.mxu0 0.0
    %912 = vmatprep.subr.mxu0 0.0
    %913 = vmatpush1.msra.mxu0 0.0
    %914 = vmatprep.subr.mxu0 0.0
    %915 = vmatpush1.msra.mxu0 0.0
    %916 = vmatprep.subr.mxu0 0.0
    %917 = vmatpush1.msra.mxu0 0.0
    %918 = vmatprep.subr.mxu0 0.0
    %919 = vmatpush1.msra.mxu0 0.0
    %920 = vmatprep.subr.mxu0 0.0
    %921 = vmatpush1.msra.mxu0 0.0
    %922 = vmatprep.subr.mxu0 0.0
    %923 = vmatpush1.msra.mxu0 0.0
    %924 = vmatprep.subr.mxu0 0.0
    %925 = vmatpush1.msra.mxu0 0.0
    %926 = vmatprep.subr.mxu0 0.0
    %927 = vmatpush1.msra.mxu0 0.0
    %928 = vmatprep.subr.mxu0 0.0
    %929 = vmatpush1.msra.mxu0 0.0
    %930 = vmatprep.subr.mxu0 0.0
    %931 = vmatpush1.msra.mxu0 0.0
    %932 = vmatprep.subr.mxu0 0.0
    %933 = vmatpush1.msra.mxu0 0.0
    %934 = vmatprep.subr.mxu0 0.0
    %935 = vmatpush1.msra.mxu0 0.0
    %936 = vmatprep.subr.mxu0 0.0
    %937 = vmatpush1.msra.mxu0 0.0
    %938 = vmatprep.subr.mxu0 0.0
    %939 = vmatpush1.msra.mxu0 0.0
    %940 = vmatprep.subr.mxu0 0.0
    %941 = vmatpush1.msra.mxu0 0.0
    %942 = vmatprep.subr.mxu0 0.0
    %943 = vmatpush1.msra.mxu0 0.0
    %944 = vmatprep.subr.mxu0 0.0
    %945 = vmatpush1.msra.mxu0 0.0
    %946 = vmatprep.subr.mxu0 0.0
    %947 = vmatpush1.msra.mxu0 0.0
    %948 = vmatprep.subr.mxu0 0.0
    %949 = vmatpush1.msra.mxu0 0.0
    %950 = vmatprep.subr.mxu0 0.0
    %951 = vmatpush1.msra.mxu0 0.0
    %952 = vmatprep.subr.mxu0 0.0
    %953 = vmatpush1.msra.mxu0 0.0
    %954 = vmatprep.subr.mxu0 0.0
    %955 = vmatpush1.msra.mxu0 0.0
    %956 = vmatprep.subr.mxu0 0.0
    %957 = vmatpush1.msra.mxu0 0.0
    %958 = vmatprep.subr.mxu0 0.0
    %959 = vmatpush1.msra.mxu0 0.0
    %960 = vmatprep.subr.mxu0 0.0
    %961 = vmatpush1.msra.mxu0 0.0
    %962 = vmatprep.subr.mxu0 0.0
    %963 = vmatpush1.msra.mxu0 0.0
    %964 = vmatprep.subr.mxu0 0.0
    %965 = vmatpush1.msra.mxu0 0.0
    %966 = vmatprep.subr.mxu0 0.0
    %967 = vmatpush1.msra.mxu0 0.0
    %968 = vmatprep.subr.mxu0 0.0
    %969 = vmatpush1.msra.mxu0 0.0
    %970 = vmatprep.mubr.f32.mxu0 0.0
    %v971 = vand.u32 %v526, 4294901760
    %972 = vmatmul.mubr.f32.gmra.mrb[0].mxu0 %v971
    %v973 = vpop.f32.mrb[0].mxu0
    %v974 = vadd.f32 %v902, %v973
    %v975 = vpop.f32.mrb[0].mxu0
    %976 = vdwg.mxu0
    %v977 = vstv %s55
    %v978 = vmul.f32 %v977, 0.0
    %v979 = vadd.f32 %v978, %v974
    %v980 = vld [vmem:[#allocation3] sm:$0x1]
    %v981 = vadd.f32 %v979, %v980
    %vm982 = vcmask 16384
    %983 = vst.msk [vmem:[#allocation2] sm:$0x1] %vm982, %v981
    %v984 = vadd.f32 %v981, %v56
    %v985 = vxor.u32 %v984, 2147483648
    %v986 = vmul.f32 %v985, 1.442695
    %v987 = vpow.pop %v986
    %v988 = vadd.f32 %v987, 1.0
    %v989 = vrcp.pop %v988
    %v990 = vmul.f32 1.0, %v989
    %v992 = vsel %vm62, %v990, 0
    %994 = vmatprep.subr.mxu0 0.0
    %v995 = vand.u32 %v529, 4294901760
    %996 = vmatpush1.msra.mxu0 %v995
    %997 = vmatprep.subr.mxu0 0.0
    %998 = vmatpush1.msra.mxu0 0.0
    %999 = vmatprep.subr.mxu0 0.0
    %1000 = vmatpush1.msra.mxu0 0.0
    %1001 = vmatprep.subr.mxu0 0.0
    %1002 = vmatpush1.msra.mxu0 0.0
    %1003 = vmatprep.subr.mxu0 0.0
    %1004 = vmatpush1.msra.mxu0 0.0
    %1005 = vmatprep.subr.mxu0 0.0
    %1006 = vmatpush1.msra.mxu0 0.0
    %1007 = vmatprep.subr.mxu0 0.0
    %1008 = vmatpush1.msra.mxu0 0.0
    %1009 = vmatprep.subr.mxu0 0.0
    %1010 = vmatpush1.msra.mxu0 0.0
    %1011 = vmatprep.subr.mxu0 0.0
    %1012 = vmatpush1.msra.mxu0 0.0
    %1013 = vmatprep.subr.mxu0 0.0
    %1014 = vmatpush1.msra.mxu0 0.0
    %1015 = vmatprep.subr.mxu0 0.0
    %1016 = vmatpush1.msra.mxu0 0.0
    %1017 = vmatprep.subr.mxu0 0.0
    %1018 = vmatpush1.msra.mxu0 0.0
    %1019 = vmatprep.subr.mxu0 0.0
    %1020 = vmatpush1.msra.mxu0 0.0
    %1021 = vmatprep.subr.mxu0 0.0
    %1022 = vmatpush1.msra.mxu0 0.0
    %1023 = vmatprep.subr.mxu0 0.0
    %1024 = vmatpush1.msra.mxu0 0.0
    %1025 = vmatprep.subr.mxu0 0.0
    %1026 = vmatpush1.msra.mxu0 0.0
    %1027 = vmatprep.subr.mxu0 0.0
    %1028 = vmatpush1.msra.mxu0 0.0
    %1029 = vmatprep.subr.mxu0 0.0
    %1030 = vmatpush1.msra.mxu0 0.0
    %1031 = vmatprep.subr.mxu0 0.0
    %1032 = vmatpush1.msra.mxu0 0.0
    %1033 = vmatprep.subr.mxu0 0.0
    %1034 = vmatpush1.msra.mxu0 0.0
    %1035 = vmatprep.subr.mxu0 0.0
    %1036 = vmatpush1.msra.mxu0 0.0
    %1037 = vmatprep.subr.mxu0 0.0
    %1038 = vmatpush1.msra.mxu0 0.0
    %1039 = vmatprep.subr.mxu0 0.0
    %1040 = vmatpush1.msra.mxu0 0.0
    %1041 = vmatprep.subr.mxu0 0.0
    %1042 = vmatpush1.msra.mxu0 0.0
    %1043 = vmatprep.subr.mxu0 0.0
    %1044 = vmatpush1.msra.mxu0 0.0
    %1045 = vmatprep.subr.mxu0 0.0
    %1046 = vmatpush1.msra.mxu0 0.0
    %1047 = vmatprep.subr.mxu0 0.0
    %1048 = vmatpush1.msra.mxu0 0.0
    %1049 = vmatprep.subr.mxu0 0.0
    %1050 = vmatpush1.msra.mxu0 0.0
    %1051 = vmatprep.subr.mxu0 0.0
    %1052 = vmatpush1.msra.mxu0 0.0
    %1053 = vmatprep.subr.mxu0 0.0
    %1054 = vmatpush1.msra.mxu0 0.0
    %1055 = vmatprep.subr.mxu0 0.0
    %1056 = vmatpush1.msra.mxu0 0.0
    %1057 = vmatprep.subr.mxu0 0.0
    %1058 = vmatpush1.msra.mxu0 0.0
    %1059 = vmatprep.mubr.f32.mxu0 0.0
    %v1060 = vand.u32 %v992, 4294901760
    %v1061 = vsub.f32 %v992, %v1060
    %v1062 = vand.u32 %v1061, 4294901760
    %v1063 = vsub.f32 %v1061, %v1062
    %v1064 = vand.u32 %v1063, 4294901760
    %1065 = vmatmul.mubr.f32.gmra.mrb[0].mxu0 %v1064
    %v1066 = vpop.f32.mrb[0].mxu0
    %v1067 = vadd.f32 0.0, %v1066
    %v1068 = vpop.f32.mrb[0].mxu0
    %1069 = vdwg.mxu0
    %1070 = vmatprep.subr.mxu0 0.0
    %v1071 = vand.u32 %v529, 4294901760
    %v1072 = vsub.f32 %v529, %v1071
    %v1073 = vand.u32 %v1072, 4294901760
    %v1074 = vsub.f32 %v1072, %v1073
    %v1075 = vand.u32 %v1074, 4294901760
    %1076 = vmatpush1.msra.mxu0 %v1075
    %1077 = vmatprep.subr.mxu0 0.0
    %1078 = vmatpush1.msra.mxu0 0.0
    %1079 = vmatprep.subr.mxu0 0.0
    %1080 = vmatpush1.msra.mxu0 0.0
    %1081 = vmatprep.subr.mxu0 0.0
    %1082 = vmatpush1.msra.mxu0 0.0
    %1083 = vmatprep.subr.mxu0 0.0
    %1084 = vmatpush1.msra.mxu0 0.0
    %1085 = vmatprep.subr.mxu0 0.0
    %1086 = vmatpush1.msra.mxu0 0.0
    %1087 = vmatprep.subr.mxu0 0.0
    %1088 = vmatpush1.msra.mxu0 0.0
    %1089 = vmatprep.subr.mxu0 0.0
    %1090 = vmatpush1.msra.mxu0 0.0
    %1091 = vmatprep.subr.mxu0 0.0
    %1092 = vmatpush1.msra.mxu0 0.0
    %1093 = vmatprep.subr.mxu0 0.0
    %1094 = vmatpush1.msra.mxu0 0.0
    %1095 = vmatprep.subr.mxu0 0.0
    %1096 = vmatpush1.msra.mxu0 0.0
    %1097 = vmatprep.subr.mxu0 0.0
    %1098 = vmatpush1.msra.mxu0 0.0
    %1099 = vmatprep.subr.mxu0 0.0
    %1100 = vmatpush1.msra.mxu0 0.0
    %1101 = vmatprep.subr.mxu0 0.0
    %1102 = vmatpush1.msra.mxu0 0.0
    %1103 = vmatprep.subr.mxu0 0.0
    %1104 = vmatpush1.msra.mxu0 0.0
    %1105 = vmatprep.subr.mxu0 0.0
    %1106 = vmatpush1.msra.mxu0 0.0
    %1107 = vmatprep.subr.mxu0 0.0
    %1108 = vmatpush1.msra.mxu0 0.0
    %1109 = vmatprep.subr.mxu0 0.0
    %1110 = vmatpush1.msra.mxu0 0.0
    %1111 = vmatprep.subr.mxu0 0.0
    %1112 = vmatpush1.msra.mxu0 0.0
    %1113 = vmatprep.subr.mxu0 0.0
    %1114 = vmatpush1.msra.mxu0 0.0
    %1115 = vmatprep.subr.mxu0 0.0
    %1116 = vmatpush1.msra.mxu0 0.0
    %1117 = vmatprep.subr.mxu0 0.0
    %1118 = vmatpush1.msra.mxu0 0.0
    %1119 = vmatprep.subr.mxu0 0.0
    %1120 = vmatpush1.msra.mxu0 0.0
    %1121 = vmatprep.subr.mxu0 0.0
    %1122 = vmatpush1.msra.mxu0 0.0
    %1123 = vmatprep.subr.mxu0 0.0
    %1124 = vmatpush1.msra.mxu0 0.0
    %1125 = vmatprep.subr.mxu0 0.0
    %1126 = vmatpush1.msra.mxu0 0.0
    %1127 = vmatprep.subr.mxu0 0.0
    %1128 = vmatpush1.msra.mxu0 0.0
    %1129 = vmatprep.subr.mxu0 0.0
    %1130 = vmatpush1.msra.mxu0 0.0
    %1131 = vmatprep.subr.mxu0 0.0
    %1132 = vmatpush1.msra.mxu0 0.0
    %1133 = vmatprep.subr.mxu0 0.0
    %1134 = vmatpush1.msra.mxu0 0.0
    %1135 = vmatprep.subr.mxu0 0.0
    %1136 = vmatpush1.msra.mxu0 0.0
    %1137 = vmatprep.subr.mxu0 0.0
    %1138 = vmatpush1.msra.mxu0 0.0
    %1139 = vmatprep.mubr.f32.mxu0 0.0
    %v1140 = vand.u32 %v992, 4294901760
    %1141 = vmatmul.mubr.f32.gmra.mrb[0].mxu0 %v1140
    %v1142 = vpop.f32.mrb[0].mxu0
    %v1143 = vadd.f32 %v1067, %v1142
    %v1144 = vpop.f32.mrb[0].mxu0
    %1145 = vdwg.mxu0
    %1146 = vmatprep.subr.mxu0 0.0
    %v1147 = vand.u32 %v529, 4294901760
    %v1148 = vsub.f32 %v529, %v1147
    %1149 = vmatpush1.msra.mxu0 %v1148
    %1150 = vmatprep.subr.mxu0 0.0
    %1151 = vmatpush1.msra.mxu0 0.0
    %1152 = vmatprep.subr.mxu0 0.0
    %1153 = vmatpush1.msra.mxu0 0.0
    %1154 = vmatprep.subr.mxu0 0.0
    %1155 = vmatpush1.msra.mxu0 0.0
    %1156 = vmatprep.subr.mxu0 0.0
    %1157 = vmatpush1.msra.mxu0 0.0
    %1158 = vmatprep.subr.mxu0 0.0
    %1159 = vmatpush1.msra.mxu0 0.0
    %1160 = vmatprep.subr.mxu0 0.0
    %1161 = vmatpush1.msra.mxu0 0.0
    %1162 = vmatprep.subr.mxu0 0.0
    %1163 = vmatpush1.msra.mxu0 0.0
    %1164 = vmatprep.subr.mxu0 0.0
    %1165 = vmatpush1.msra.mxu0 0.0
    %1166 = vmatprep.subr.mxu0 0.0
    %1167 = vmatpush1.msra.mxu0 0.0
    %1168 = vmatprep.subr.mxu0 0.0
    %1169 = vmatpush1.msra.mxu0 0.0
    %1170 = vmatprep.subr.mxu0 0.0
    %1171 = vmatpush1.msra.mxu0 0.0
    %1172 = vmatprep.subr.mxu0 0.0
    %1173 = vmatpush1.msra.mxu0 0.0
    %1174 = vmatprep.subr.mxu0 0.0
    %1175 = vmatpush1.msra.mxu0 0.0
    %1176 = vmatprep.subr.mxu0 0.0
    %1177 = vmatpush1.msra.mxu0 0.0
    %1178 = vmatprep.subr.mxu0 0.0
    %1179 = vmatpush1.msra.mxu0 0.0
    %1180 = vmatprep.subr.mxu0 0.0
    %1181 = vmatpush1.msra.mxu0 0.0
    %1182 = vmatprep.subr.mxu0 0.0
    %1183 = vmatpush1.msra.mxu0 0.0
    %1184 = vmatprep.subr.mxu0 0.0
    %1185 = vmatpush1.msra.mxu0 0.0
    %1186 = vmatprep.subr.mxu0 0.0
    %1187 = vmatpush1.msra.mxu0 0.0
    %1188 = vmatprep.subr.mxu0 0.0
    %1189 = vmatpush1.msra.mxu0 0.0
    %1190 = vmatprep.subr.mxu0 0.0
    %1191 = vmatpush1.msra.mxu0 0.0
    %1192 = vmatprep.subr.mxu0 0.0
    %1193 = vmatpush1.msra.mxu0 0.0
    %1194 = vmatprep.subr.mxu0 0.0
    %1195 = vmatpush1.msra.mxu0 0.0
    %1196 = vmatprep.subr.mxu0 0.0
    %1197 = vmatpush1.msra.mxu0 0.0
    %1198 = vmatprep.subr.mxu0 0.0
    %1199 = vmatpush1.msra.mxu0 0.0
    %1200 = vmatprep.subr.mxu0 0.0
    %1201 = vmatpush1.msra.mxu0 0.0
    %1202 = vmatprep.subr.mxu0 0.0
    %1203 = vmatpush1.msra.mxu0 0.0
    %1204 = vmatprep.subr.mxu0 0.0
    %1205 = vmatpush1.msra.mxu0 0.0
    %1206 = vmatprep.subr.mxu0 0.0
    %1207 = vmatpush1.msra.mxu0 0.0
    %1208 = vmatprep.subr.mxu0 0.0
    %1209 = vmatpush1.msra.mxu0 0.0
    %1210 = vmatprep.subr.mxu0 0.0
    %1211 = vmatpush1.msra.mxu0 0.0
    %1212 = vmatprep.mubr.f32.mxu0 0.0
    %v1213 = vand.u32 %v992, 4294901760
    %v1214 = vsub.f32 %v992, %v1213
    %1215 = vmatmul.mubr.f32.gmra.mrb[0].mxu0 %v1214
    %v1216 = vpop.f32.mrb[0].mxu0
    %v1217 = vadd.f32 %v1143, %v1216
    %v1218 = vpop.f32.mrb[0].mxu0
    %1219 = vdwg.mxu0
    %1220 = vmatprep.subr.mxu0 0.0
    %v1221 = vand.u32 %v529, 4294901760
    %1222 = vmatpush1.msra.mxu0 %v1221
    %1223 = vmatprep.subr.mxu0 0.0
    %1224 = vmatpush1.msra.mxu0 0.0
    %1225 = vmatprep.subr.mxu0 0.0
    %1226 = vmatpush1.msra.mxu0 0.0
    %1227 = vmatprep.subr.mxu0 0.0
    %1228 = vmatpush1.msra.mxu0 0.0
    %1229 = vmatprep.subr.mxu0 0.0
    %1230 = vmatpush1.msra.mxu0 0.0
    %1231 = vmatprep.subr.mxu0 0.0
    %1232 = vmatpush1.msra.mxu0 0.0
    %1233 = vmatprep.subr.mxu0 0.0
    %1234 = vmatpush1.msra.mxu0 0.0
    %1235 = vmatprep.subr.mxu0 0.0
    %1236 = vmatpush1.msra.mxu0 0.0
    %1237 = vmatprep.subr.mxu0 0.0
    %1238 = vmatpush1.msra.mxu0 0.0
    %1239 = vmatprep.subr.mxu0 0.0
    %1240 = vmatpush1.msra.mxu0 0.0
    %1241 = vmatprep.subr.mxu0 0.0
    %1242 = vmatpush1.msra.mxu0 0.0
    %1243 = vmatprep.subr.mxu0 0.0
    %1244 = vmatpush1.msra.mxu0 0.0
    %1245 = vmatprep.subr.mxu0 0.0
    %1246 = vmatpush1.msra.mxu0 0.0
    %1247 = vmatprep.subr.mxu0 0.0
    %1248 = vmatpush1.msra.mxu0 0.0
    %1249 = vmatprep.subr.mxu0 0.0
    %1250 = vmatpush1.msra.mxu0 0.0
    %1251 = vmatprep.subr.mxu0 0.0
    %1252 = vmatpush1.msra.mxu0 0.0
    %1253 = vmatprep.subr.mxu0 0.0
    %1254 = vmatpush1.msra.mxu0 0.0
    %1255 = vmatprep.subr.mxu0 0.0
    %1256 = vmatpush1.msra.mxu0 0.0
    %1257 = vmatprep.subr.mxu0 0.0
    %1258 = vmatpush1.msra.mxu0 0.0
    %1259 = vmatprep.subr.mxu0 0.0
    %1260 = vmatpush1.msra.mxu0 0.0
    %1261 = vmatprep.subr.mxu0 0.0
    %1262 = vmatpush1.msra.mxu0 0.0
    %1263 = vmatprep.subr.mxu0 0.0
    %1264 = vmatpush1.msra.mxu0 0.0
    %1265 = vmatprep.subr.mxu0 0.0
    %1266 = vmatpush1.msra.mxu0 0.0
    %1267 = vmatprep.subr.mxu0 0.0
    %1268 = vmatpush1.msra.mxu0 0.0
    %1269 = vmatprep.subr.mxu0 0.0
    %1270 = vmatpush1.msra.mxu0 0.0
    %1271 = vmatprep.subr.mxu0 0.0
    %1272 = vmatpush1.msra.mxu0 0.0
    %1273 = vmatprep.subr.mxu0 0.0
    %1274 = vmatpush1.msra.mxu0 0.0
    %1275 = vmatprep.subr.mxu0 0.0
    %1276 = vmatpush1.msra.mxu0 0.0
    %1277 = vmatprep.subr.mxu0 0.0
    %1278 = vmatpush1.msra.mxu0 0.0
    %1279 = vmatprep.subr.mxu0 0.0
    %1280 = vmatpush1.msra.mxu0 0.0
    %1281 = vmatprep.subr.mxu0 0.0
    %1282 = vmatpush1.msra.mxu0 0.0
    %1283 = vmatprep.subr.mxu0 0.0
    %1284 = vmatpush1.msra.mxu0 0.0
    %1285 = vmatprep.mubr.f32.mxu0 0.0
    %v1286 = vand.u32 %v992, 4294901760
    %v1287 = vsub.f32 %v992, %v1286
    %v1288 = vand.u32 %v1287, 4294901760
    %1289 = vmatmul.mubr.f32.gmra.mrb[0].mxu0 %v1288
    %v1290 = vpop.f32.mrb[0].mxu0
    %v1291 = vadd.f32 %v1217, %v1290
    %v1292 = vpop.f32.mrb[0].mxu0
    %1293 = vdwg.mxu0
    %1294 = vmatprep.subr.mxu0 0.0
    %v1295 = vand.u32 %v529, 4294901760
    %v1296 = vsub.f32 %v529, %v1295
    %v1297 = vand.u32 %v1296, 4294901760
    %1298 = vmatpush1.msra.mxu0 %v1297
    %1299 = vmatprep.subr.mxu0 0.0
    %1300 = vmatpush1.msra.mxu0 0.0
    %1301 = vmatprep.subr.mxu0 0.0
    %1302 = vmatpush1.msra.mxu0 0.0
    %1303 = vmatprep.subr.mxu0 0.0
    %1304 = vmatpush1.msra.mxu0 0.0
    %1305 = vmatprep.subr.mxu0 0.0
    %1306 = vmatpush1.msra.mxu0 0.0
    %1307 = vmatprep.subr.mxu0 0.0
    %1308 = vmatpush1.msra.mxu0 0.0
    %1309 = vmatprep.subr.mxu0 0.0
    %1310 = vmatpush1.msra.mxu0 0.0
    %1311 = vmatprep.subr.mxu0 0.0
    %1312 = vmatpush1.msra.mxu0 0.0
    %1313 = vmatprep.subr.mxu0 0.0
    %1314 = vmatpush1.msra.mxu0 0.0
    %1315 = vmatprep.subr.mxu0 0.0
    %1316 = vmatpush1.msra.mxu0 0.0
    %1317 = vmatprep.subr.mxu0 0.0
    %1318 = vmatpush1.msra.mxu0 0.0
    %1319 = vmatprep.subr.mxu0 0.0
    %1320 = vmatpush1.msra.mxu0 0.0
    %1321 = vmatprep.subr.mxu0 0.0
    %1322 = vmatpush1.msra.mxu0 0.0
    %1323 = vmatprep.subr.mxu0 0.0
    %1324 = vmatpush1.msra.mxu0 0.0
    %1325 = vmatprep.subr.mxu0 0.0
    %1326 = vmatpush1.msra.mxu0 0.0
    %1327 = vmatprep.subr.mxu0 0.0
    %1328 = vmatpush1.msra.mxu0 0.0
    %1329 = vmatprep.subr.mxu0 0.0
    %1330 = vmatpush1.msra.mxu0 0.0
    %1331 = vmatprep.subr.mxu0 0.0
    %1332 = vmatpush1.msra.mxu0 0.0
    %1333 = vmatprep.subr.mxu0 0.0
    %1334 = vmatpush1.msra.mxu0 0.0
    %1335 = vmatprep.subr.mxu0 0.0
    %1336 = vmatpush1.msra.mxu0 0.0
    %1337 = vmatprep.subr.mxu0 0.0
    %1338 = vmatpush1.msra.mxu0 0.0
    %1339 = vmatprep.subr.mxu0 0.0
    %1340 = vmatpush1.msra.mxu0 0.0
    %1341 = vmatprep.subr.mxu0 0.0
    %1342 = vmatpush1.msra.mxu0 0.0
    %1343 = vmatprep.subr.mxu0 0.0
    %1344 = vmatpush1.msra.mxu0 0.0
    %1345 = vmatprep.subr.mxu0 0.0
    %1346 = vmatpush1.msra.mxu0 0.0
    %1347 = vmatprep.subr.mxu0 0.0
    %1348 = vmatpush1.msra.mxu0 0.0
    %1349 = vmatprep.subr.mxu0 0.0
    %1350 = vmatpush1.msra.mxu0 0.0
    %1351 = vmatprep.subr.mxu0 0.0
    %1352 = vmatpush1.msra.mxu0 0.0
    %1353 = vmatprep.subr.mxu0 0.0
    %1354 = vmatpush1.msra.mxu0 0.0
    %1355 = vmatprep.subr.mxu0 0.0
    %1356 = vmatpush1.msra.mxu0 0.0
    %1357 = vmatprep.subr.mxu0 0.0
    %1358 = vmatpush1.msra.mxu0 0.0
    %1359 = vmatprep.subr.mxu0 0.0
    %1360 = vmatpush1.msra.mxu0 0.0
    %1361 = vmatprep.mubr.f32.mxu0 0.0
    %v1362 = vand.u32 %v992, 4294901760
    %1363 = vmatmul.mubr.f32.gmra.mrb[0].mxu0 %v1362
    %v1364 = vpop.f32.mrb[0].mxu0
    %v1365 = vadd.f32 %v1291, %v1364
    %v1366 = vpop.f32.mrb[0].mxu0
    %1367 = vdwg.mxu0
    %1368 = vmatprep.subr.mxu0 0.0
    %v1369 = vand.u32 %v529, 4294901760
    %1370 = vmatpush1.msra.mxu0 %v1369
    %1371 = vmatprep.subr.mxu0 0.0
    %1372 = vmatpush1.msra.mxu0 0.0
    %1373 = vmatprep.subr.mxu0 0.0
    %1374 = vmatpush1.msra.mxu0 0.0
    %1375 = vmatprep.subr.mxu0 0.0
    %1376 = vmatpush1.msra.mxu0 0.0
    %1377 = vmatprep.subr.mxu0 0.0
    %1378 = vmatpush1.msra.mxu0 0.0
    %1379 = vmatprep.subr.mxu0 0.0
    %1380 = vmatpush1.msra.mxu0 0.0
    %1381 = vmatprep.subr.mxu0 0.0
    %1382 = vmatpush1.msra.mxu0 0.0
    %1383 = vmatprep.subr.mxu0 0.0
    %1384 = vmatpush1.msra.mxu0 0.0
    %1385 = vmatprep.subr.mxu0 0.0
    %1386 = vmatpush1.msra.mxu0 0.0
    %1387 = vmatprep.subr.mxu0 0.0
    %1388 = vmatpush1.msra.mxu0 0.0
    %1389 = vmatprep.subr.mxu0 0.0
    %1390 = vmatpush1.msra.mxu0 0.0
    %1391 = vmatprep.subr.mxu0 0.0
    %1392 = vmatpush1.msra.mxu0 0.0
    %1393 = vmatprep.subr.mxu0 0.0
    %1394 = vmatpush1.msra.mxu0 0.0
    %1395 = vmatprep.subr.mxu0 0.0
    %1396 = vmatpush1.msra.mxu0 0.0
    %1397 = vmatprep.subr.mxu0 0.0
    %1398 = vmatpush1.msra.mxu0 0.0
    %1399 = vmatprep.subr.mxu0 0.0
    %1400 = vmatpush1.msra.mxu0 0.0
    %1401 = vmatprep.subr.mxu0 0.0
    %1402 = vmatpush1.msra.mxu0 0.0
    %1403 = vmatprep.subr.mxu0 0.0
    %1404 = vmatpush1.msra.mxu0 0.0
    %1405 = vmatprep.subr.mxu0 0.0
    %1406 = vmatpush1.msra.mxu0 0.0
    %1407 = vmatprep.subr.mxu0 0.0
    %1408 = vmatpush1.msra.mxu0 0.0
    %1409 = vmatprep.subr.mxu0 0.0
    %1410 = vmatpush1.msra.mxu0 0.0
    %1411 = vmatprep.subr.mxu0 0.0
    %1412 = vmatpush1.msra.mxu0 0.0
    %1413 = vmatprep.subr.mxu0 0.0
    %1414 = vmatpush1.msra.mxu0 0.0
    %1415 = vmatprep.subr.mxu0 0.0
    %1416 = vmatpush1.msra.mxu0 0.0
    %1417 = vmatprep.subr.mxu0 0.0
    %1418 = vmatpush1.msra.mxu0 0.0
    %1419 = vmatprep.subr.mxu0 0.0
    %1420 = vmatpush1.msra.mxu0 0.0
    %1421 = vmatprep.subr.mxu0 0.0
    %1422 = vmatpush1.msra.mxu0 0.0
    %1423 = vmatprep.subr.mxu0 0.0
    %1424 = vmatpush1.msra.mxu0 0.0
    %1425 = vmatprep.subr.mxu0 0.0
    %1426 = vmatpush1.msra.mxu0 0.0
    %1427 = vmatprep.subr.mxu0 0.0
    %1428 = vmatpush1.msra.mxu0 0.0
    %1429 = vmatprep.subr.mxu0 0.0
    %1430 = vmatpush1.msra.mxu0 0.0
    %1431 = vmatprep.subr.mxu0 0.0
    %1432 = vmatpush1.msra.mxu0 0.0
    %1433 = vmatprep.mubr.f32.mxu0 0.0
    %v1434 = vand.u32 %v992, 4294901760
    %1435 = vmatmul.mubr.f32.gmra.mrb[0].mxu0 %v1434
    %v1436 = vpop.f32.mrb[0].mxu0
    %v1437 = vadd.f32 %v1365, %v1436
    %v1438 = vpop.f32.mrb[0].mxu0
    %1439 = vdwg.mxu0
    %v1440 = vmul.f32 %v981, %v977
    %v1441 = vadd.f32 %v1440, %v1437
    %v1442 = vld [vmem:[#allocation3 + $0x1] sm:$0x1]
    %v1443 = vadd.f32 %v1441, %v1442
    %1444 = vst.msk [vmem:[#allocation2 + $0x1] sm:$0x1] %vm982, %v1443
    %v1445 = vadd.f32 %v1443, %v56
    %v1446 = vxor.u32 %v1445, 2147483648
    %v1447 = vmul.f32 %v1446, 1.442695
    %v1448 = vpow.pop %v1447
    %v1449 = vadd.f32 %v1448, 1.0
    %v1450 = vrcp.pop %v1449
    %v1451 = vmul.f32 1.0, %v1450
    %v1453 = vsel %vm62, %v1451, 0
    %1455 = vmatprep.subr.mxu0 0.0
    %v1456 = vand.u32 %v529, 4294901760
    %1457 = vmatpush1.msra.mxu0 %v1456
    %1458 = vmatprep.subr.mxu0 0.0
    %1459 = vmatpush1.msra.mxu0 0.0
    %1460 = vmatprep.subr.mxu0 0.0
    %1461 = vmatpush1.msra.mxu0 0.0
    %1462 = vmatprep.subr.mxu0 0.0
    %1463 = vmatpush1.msra.mxu0 0.0
    %1464 = vmatprep.subr.mxu0 0.0
    %1465 = vmatpush1.msra.mxu0 0.0
    %1466 = vmatprep.subr.mxu0 0.0
    %1467 = vmatpush1.msra.mxu0 0.0
    %1468 = vmatprep.subr.mxu0 0.0
    %1469 = vmatpush1.msra.mxu0 0.0
    %1470 = vmatprep.subr.mxu0 0.0
    %1471 = vmatpush1.msra.mxu0 0.0
    %1472 = vmatprep.subr.mxu0 0.0
    %1473 = vmatpush1.msra.mxu0 0.0
    %1474 = vmatprep.subr.mxu0 0.0
    %1475 = vmatpush1.msra.mxu0 0.0
    %1476 = vmatprep.subr.mxu0 0.0
    %1477 = vmatpush1.msra.mxu0 0.0
    %1478 = vmatprep.subr.mxu0 0.0
    %1479 = vmatpush1.msra.mxu0 0.0
    %1480 = vmatprep.subr.mxu0 0.0
    %1481 = vmatpush1.msra.mxu0 0.0
    %1482 = vmatprep.subr.mxu0 0.0
    %1483 = vmatpush1.msra.mxu0 0.0
    %1484 = vmatprep.subr.mxu0 0.0
    %1485 = vmatpush1.msra.mxu0 0.0
    %1486 = vmatprep.subr.mxu0 0.0
    %1487 = vmatpush1.msra.mxu0 0.0
    %1488 = vmatprep.subr.mxu0 0.0
    %1489 = vmatpush1.msra.mxu0 0.0
    %1490 = vmatprep.subr.mxu0 0.0
    %1491 = vmatpush1.msra.mxu0 0.0
    %1492 = vmatprep.subr.mxu0 0.0
    %1493 = vmatpush1.msra.mxu0 0.0
    %1494 = vmatprep.subr.mxu0 0.0
    %1495 = vmatpush1.msra.mxu0 0.0
    %1496 = vmatprep.subr.mxu0 0.0
    %1497 = vmatpush1.msra.mxu0 0.0
    %1498 = vmatprep.subr.mxu0 0.0
    %1499 = vmatpush1.msra.mxu0 0.0
    %1500 = vmatprep.subr.mxu0 0.0
    %1501 = vmatpush1.msra.mxu0 0.0
    %1502 = vmatprep.subr.mxu0 0.0
    %1503 = vmatpush1.msra.mxu0 0.0
    %1504 = vmatprep.subr.mxu0 0.0
    %1505 = vmatpush1.msra.mxu0 0.0
    %1506 = vmatprep.subr.mxu0 0.0
    %1507 = vmatpush1.msra.mxu0 0.0
    %1508 = vmatprep.subr.mxu0 0.0
    %1509 = vmatpush1.msra.mxu0 0.0
    %1510 = vmatprep.subr.mxu0 0.0
    %1511 = vmatpush1.msra.mxu0 0.0
    %1512 = vmatprep.subr.mxu0 0.0
    %1513 = vmatpush1.msra.mxu0 0.0
    %1514 = vmatprep.subr.mxu0 0.0
    %1515 = vmatpush1.msra.mxu0 0.0
    %1516 = vmatprep.subr.mxu0 0.0
    %1517 = vmatpush1.msra.mxu0 0.0
    %1518 = vmatprep.subr.mxu0 0.0
    %1519 = vmatpush1.msra.mxu0 0.0
    %1520 = vmatprep.mubr.f32.mxu0 0.0
    %v1521 = vand.u32 %v1453, 4294901760
    %v1522 = vsub.f32 %v1453, %v1521
    %v1523 = vand.u32 %v1522, 4294901760
    %v1524 = vsub.f32 %v1522, %v1523
    %v1525 = vand.u32 %v1524, 4294901760
    %1526 = vmatmul.mubr.f32.gmra.mrb[0].mxu0 %v1525
    %v1527 = vpop.f32.mrb[0].mxu0
    %v1528 = vadd.f32 0.0, %v1527
    %v1529 = vpop.f32.mrb[0].mxu0
    %1530 = vdwg.mxu0
    %1531 = vmatprep.subr.mxu0 0.0
    %v1532 = vand.u32 %v529, 4294901760
    %v1533 = vsub.f32 %v529, %v1532
    %v1534 = vand.u32 %v1533, 4294901760
    %v1535 = vsub.f32 %v1533, %v1534
    %v1536 = vand.u32 %v1535, 4294901760
    %1537 = vmatpush1.msra.mxu0 %v1536
    %1538 = vmatprep.subr.mxu0 0.0
    %1539 = vmatpush1.msra.mxu0 0.0
    %1540 = vmatprep.subr.mxu0 0.0
    %1541 = vmatpush1.msra.mxu0 0.0
    %1542 = vmatprep.subr.mxu0 0.0
    %1543 = vmatpush1.msra.mxu0 0.0
    %1544 = vmatprep.subr.mxu0 0.0
    %1545 = vmatpush1.msra.mxu0 0.0
    %1546 = vmatprep.subr.mxu0 0.0
    %1547 = vmatpush1.msra.mxu0 0.0
    %1548 = vmatprep.subr.mxu0 0.0
    %1549 = vmatpush1.msra.mxu0 0.0
    %1550 = vmatprep.subr.mxu0 0.0
    %1551 = vmatpush1.msra.mxu0 0.0
    %1552 = vmatprep.subr.mxu0 0.0
    %1553 = vmatpush1.msra.mxu0 0.0
    %1554 = vmatprep.subr.mxu0 0.0
    %1555 = vmatpush1.msra.mxu0 0.0
    %1556 = vmatprep.subr.mxu0 0.0
    %1557 = vmatpush1.msra.mxu0 0.0
    %1558 = vmatprep.subr.mxu0 0.0
    %1559 = vmatpush1.msra.mxu0 0.0
    %1560 = vmatprep.subr.mxu0 0.0
    %1561 = vmatpush1.msra.mxu0 0.0
    %1562 = vmatprep.subr.mxu0 0.0
    %1563 = vmatpush1.msra.mxu0 0.0
    %1564 = vmatprep.subr.mxu0 0.0
    %1565 = vmatpush1.msra.mxu0 0.0
    %1566 = vmatprep.subr.mxu0 0.0
    %1567 = vmatpush1.msra.mxu0 0.0
    %1568 = vmatprep.subr.mxu0 0.0
    %1569 = vmatpush1.msra.mxu0 0.0
    %1570 = vmatprep.subr.mxu0 0.0
    %1571 = vmatpush1.msra.mxu0 0.0
    %1572 = vmatprep.subr.mxu0 0.0
    %1573 = vmatpush1.msra.mxu0 0.0
    %1574 = vmatprep.subr.mxu0 0.0
    %1575 = vmatpush1.msra.mxu0 0.0
    %1576 = vmatprep.subr.mxu0 0.0
    %1577 = vmatpush1.msra.mxu0 0.0
    %1578 = vmatprep.subr.mxu0 0.0
    %1579 = vmatpush1.msra.mxu0 0.0
    %1580 = vmatprep.subr.mxu0 0.0
    %1581 = vmatpush1.msra.mxu0 0.0
    %1582 = vmatprep.subr.mxu0 0.0
    %1583 = vmatpush1.msra.mxu0 0.0
    %1584 = vmatprep.subr.mxu0 0.0
    %1585 = vmatpush1.msra.mxu0 0.0
    %1586 = vmatprep.subr.mxu0 0.0
    %1587 = vmatpush1.msra.mxu0 0.0
    %1588 = vmatprep.subr.mxu0 0.0
    %1589 = vmatpush1.msra.mxu0 0.0
    %1590 = vmatprep.subr.mxu0 0.0
    %1591 = vmatpush1.msra.mxu0 0.0
    %1592 = vmatprep.subr.mxu0 0.0
    %1593 = vmatpush1.msra.mxu0 0.0
    %1594 = vmatprep.subr.mxu0 0.0
    %1595 = vmatpush1.msra.mxu0 0.0
    %1596 = vmatprep.subr.mxu0 0.0
    %1597 = vmatpush1.msra.mxu0 0.0
    %1598 = vmatprep.subr.mxu0 0.0
    %1599 = vmatpush1.msra.mxu0 0.0
    %1600 = vmatprep.mubr.f32.mxu0 0.0
    %v1601 = vand.u32 %v1453, 4294901760
    %1602 = vmatmul.mubr.f32.gmra.mrb[0].mxu0 %v1601
    %v1603 = vpop.f32.mrb[0].mxu0
    %v1604 = vadd.f32 %v1528, %v1603
    %v1605 = vpop.f32.mrb[0].mxu0
    %1606 = vdwg.mxu0
    %1607 = vmatprep.subr.mxu0 0.0
    %v1608 = vand.u32 %v529, 4294901760
    %v1609 = vsub.f32 %v529, %v1608
    %1610 = vmatpush1.msra.mxu0 %v1609
    %1611 = vmatprep.subr.mxu0 0.0
    %1612 = vmatpush1.msra.mxu0 0.0
    %1613 = vmatprep.subr.mxu0 0.0
    %1614 = vmatpush1.msra.mxu0 0.0
    %1615 = vmatprep.subr.mxu0 0.0
    %1616 = vmatpush1.msra.mxu0 0.0
    %1617 = vmatprep.subr.mxu0 0.0
    %1618 = vmatpush1.msra.mxu0 0.0
    %1619 = vmatprep.subr.mxu0 0.0
    %1620 = vmatpush1.msra.mxu0 0.0
    %1621 = vmatprep.subr.mxu0 0.0
    %1622 = vmatpush1.msra.mxu0 0.0
    %1623 = vmatprep.subr.mxu0 0.0
    %1624 = vmatpush1.msra.mxu0 0.0
    %1625 = vmatprep.subr.mxu0 0.0
    %1626 = vmatpush1.msra.mxu0 0.0
    %1627 = vmatprep.subr.mxu0 0.0
    %1628 = vmatpush1.msra.mxu0 0.0
    %1629 = vmatprep.subr.mxu0 0.0
    %1630 = vmatpush1.msra.mxu0 0.0
    %1631 = vmatprep.subr.mxu0 0.0
    %1632 = vmatpush1.msra.mxu0 0.0
    %1633 = vmatprep.subr.mxu0 0.0
    %1634 = vmatpush1.msra.mxu0 0.0
    %1635 = vmatprep.subr.mxu0 0.0
    %1636 = vmatpush1.msra.mxu0 0.0
    %1637 = vmatprep.subr.mxu0 0.0
    %1638 = vmatpush1.msra.mxu0 0.0
    %1639 = vmatprep.subr.mxu0 0.0
    %1640 = vmatpush1.msra.mxu0 0.0
    %1641 = vmatprep.subr.mxu0 0.0
    %1642 = vmatpush1.msra.mxu0 0.0
    %1643 = vmatprep.subr.mxu0 0.0
    %1644 = vmatpush1.msra.mxu0 0.0
    %1645 = vmatprep.subr.mxu0 0.0
    %1646 = vmatpush1.msra.mxu0 0.0
    %1647 = vmatprep.subr.mxu0 0.0
    %1648 = vmatpush1.msra.mxu0 0.0
    %1649 = vmatprep.subr.mxu0 0.0
    %1650 = vmatpush1.msra.mxu0 0.0
    %1651 = vmatprep.subr.mxu0 0.0
    %1652 = vmatpush1.msra.mxu0 0.0
    %1653 = vmatprep.subr.mxu0 0.0
    %1654 = vmatpush1.msra.mxu0 0.0
    %1655 = vmatprep.subr.mxu0 0.0
    %1656 = vmatpush1.msra.mxu0 0.0
    %1657 = vmatprep.subr.mxu0 0.0
    %1658 = vmatpush1.msra.mxu0 0.0
    %1659 = vmatprep.subr.mxu0 0.0
    %1660 = vmatpush1.msra.mxu0 0.0
    %1661 = vmatprep.subr.mxu0 0.0
    %1662 = vmatpush1.msra.mxu0 0.0
    %1663 = vmatprep.subr.mxu0 0.0
    %1664 = vmatpush1.msra.mxu0 0.0
    %1665 = vmatprep.subr.mxu0 0.0
    %1666 = vmatpush1.msra.mxu0 0.0
    %1667 = vmatprep.subr.mxu0 0.0
    %1668 = vmatpush1.msra.mxu0 0.0
    %1669 = vmatprep.subr.mxu0 0.0
    %1670 = vmatpush1.msra.mxu0 0.0
    %1671 = vmatprep.subr.mxu0 0.0
    %1672 = vmatpush1.msra.mxu0 0.0
    %1673 = vmatprep.mubr.f32.mxu0 0.0
    %v1674 = vand.u32 %v1453, 4294901760
    %v1675 = vsub.f32 %v1453, %v1674
    %1676 = vmatmul.mubr.f32.gmra.mrb[0].mxu0 %v1675
    %v1677 = vpop.f32.mrb[0].mxu0
    %v1678 = vadd.f32 %v1604, %v1677
    %v1679 = vpop.f32.mrb[0].mxu0
    %1680 = vdwg.mxu0
    %1681 = vmatprep.subr.mxu0 0.0
    %v1682 = vand.u32 %v529, 4294901760
    %1683 = vmatpush1.msra.mxu0 %v1682
    %1684 = vmatprep.subr.mxu0 0.0
    %1685 = vmatpush1.msra.mxu0 0.0
    %1686 = vmatprep.subr.mxu0 0.0
    %1687 = vmatpush1.msra.mxu0 0.0
    %1688 = vmatprep.subr.mxu0 0.0
    %1689 = vmatpush1.msra.mxu0 0.0
    %1690 = vmatprep.subr.mxu0 0.0
    %1691 = vmatpush1.msra.mxu0 0.0
    %1692 = vmatprep.subr.mxu0 0.0
    %1693 = vmatpush1.msra.mxu0 0.0
    %1694 = vmatprep.subr.mxu0 0.0
    %1695 = vmatpush1.msra.mxu0 0.0
    %1696 = vmatprep.subr.mxu0 0.0
    %1697 = vmatpush1.msra.mxu0 0.0
    %1698 = vmatprep.subr.mxu0 0.0
    %1699 = vmatpush1.msra.mxu0 0.0
    %1700 = vmatprep.subr.mxu0 0.0
    %1701 = vmatpush1.msra.mxu0 0.0
    %1702 = vmatprep.subr.mxu0 0.0
    %1703 = vmatpush1.msra.mxu0 0.0
    %1704 = vmatprep.subr.mxu0 0.0
    %1705 = vmatpush1.msra.mxu0 0.0
    %1706 = vmatprep.subr.mxu0 0.0
    %1707 = vmatpush1.msra.mxu0 0.0
    %1708 = vmatprep.subr.mxu0 0.0
    %1709 = vmatpush1.msra.mxu0 0.0
    %1710 = vmatprep.subr.mxu0 0.0
    %1711 = vmatpush1.msra.mxu0 0.0
    %1712 = vmatprep.subr.mxu0 0.0
    %1713 = vmatpush1.msra.mxu0 0.0
    %1714 = vmatprep.subr.mxu0 0.0
    %1715 = vmatpush1.msra.mxu0 0.0
    %1716 = vmatprep.subr.mxu0 0.0
    %1717 = vmatpush1.msra.mxu0 0.0
    %1718 = vmatprep.subr.mxu0 0.0
    %1719 = vmatpush1.msra.mxu0 0.0
    %1720 = vmatprep.subr.mxu0 0.0
    %1721 = vmatpush1.msra.mxu0 0.0
    %1722 = vmatprep.subr.mxu0 0.0
    %1723 = vmatpush1.msra.mxu0 0.0
    %1724 = vmatprep.subr.mxu0 0.0
    %1725 = vmatpush1.msra.mxu0 0.0
    %1726 = vmatprep.subr.mxu0 0.0
    %1727 = vmatpush1.msra.mxu0 0.0
    %1728 = vmatprep.subr.mxu0 0.0
    %1729 = vmatpush1.msra.mxu0 0.0
    %1730 = vmatprep.subr.mxu0 0.0
    %1731 = vmatpush1.msra.mxu0 0.0
    %1732 = vmatprep.subr.mxu0 0.0
    %1733 = vmatpush1.msra.mxu0 0.0
    %1734 = vmatprep.subr.mxu0 0.0
    %1735 = vmatpush1.msra.mxu0 0.0
    %1736 = vmatprep.subr.mxu0 0.0
    %1737 = vmatpush1.msra.mxu0 0.0
    %1738 = vmatprep.subr.mxu0 0.0
    %1739 = vmatpush1.msra.mxu0 0.0
    %1740 = vmatprep.subr.mxu0 0.0
    %1741 = vmatpush1.msra.mxu0 0.0
    %1742 = vmatprep.subr.mxu0 0.0
    %1743 = vmatpush1.msra.mxu0 0.0
    %1744 = vmatprep.subr.mxu0 0.0
    %1745 = vmatpush1.msra.mxu0 0.0
    %1746 = vmatprep.mubr.f32.mxu0 0.0
    %v1747 = vand.u32 %v1453, 4294901760
    %v1748 = vsub.f32 %v1453, %v1747
    %v1749 = vand.u32 %v1748, 4294901760
    %1750 = vmatmul.mubr.f32.gmra.mrb[0].mxu0 %v1749
    %v1751 = vpop.f32.mrb[0].mxu0
    %v1752 = vadd.f32 %v1678, %v1751
    %v1753 = vpop.f32.mrb[0].mxu0
    %1754 = vdwg.mxu0
    %1755 = vmatprep.subr.mxu0 0.0
    %v1756 = vand.u32 %v529, 4294901760
    %v1757 = vsub.f32 %v529, %v1756
    %v1758 = vand.u32 %v1757, 4294901760
    %1759 = vmatpush1.msra.mxu0 %v1758
    %1760 = vmatprep.subr.mxu0 0.0
    %1761 = vmatpush1.msra.mxu0 0.0
    %1762 = vmatprep.subr.mxu0 0.0
    %1763 = vmatpush1.msra.mxu0 0.0
    %1764 = vmatprep.subr.mxu0 0.0
    %1765 = vmatpush1.msra.mxu0 0.0
    %1766 = vmatprep.subr.mxu0 0.0
    %1767 = vmatpush1.msra.mxu0 0.0
    %1768 = vmatprep.subr.mxu0 0.0
    %1769 = vmatpush1.msra.mxu0 0.0
    %1770 = vmatprep.subr.mxu0 0.0
    %1771 = vmatpush1.msra.mxu0 0.0
    %1772 = vmatprep.subr.mxu0 0.0
    %1773 = vmatpush1.msra.mxu0 0.0
    %1774 = vmatprep.subr.mxu0 0.0
    %1775 = vmatpush1.msra.mxu0 0.0
    %1776 = vmatprep.subr.mxu0 0.0
    %1777 = vmatpush1.msra.mxu0 0.0
    %1778 = vmatprep.subr.mxu0 0.0
    %1779 = vmatpush1.msra.mxu0 0.0
    %1780 = vmatprep.subr.mxu0 0.0
    %1781 = vmatpush1.msra.mxu0 0.0
    %1782 = vmatprep.subr.mxu0 0.0
    %1783 = vmatpush1.msra.mxu0 0.0
    %1784 = vmatprep.subr.mxu0 0.0
    %1785 = vmatpush1.msra.mxu0 0.0
    %1786 = vmatprep.subr.mxu0 0.0
    %1787 = vmatpush1.msra.mxu0 0.0
    %1788 = vmatprep.subr.mxu0 0.0
    %1789 = vmatpush1.msra.mxu0 0.0
    %1790 = vmatprep.subr.mxu0 0.0
    %1791 = vmatpush1.msra.mxu0 0.0
    %1792 = vmatprep.subr.mxu0 0.0
    %1793 = vmatpush1.msra.mxu0 0.0
    %1794 = vmatprep.subr.mxu0 0.0
    %1795 = vmatpush1.msra.mxu0 0.0
    %1796 = vmatprep.subr.mxu0 0.0
    %1797 = vmatpush1.msra.mxu0 0.0
    %1798 = vmatprep.subr.mxu0 0.0
    %1799 = vmatpush1.msra.mxu0 0.0
    %1800 = vmatprep.subr.mxu0 0.0
    %1801 = vmatpush1.msra.mxu0 0.0
    %1802 = vmatprep.subr.mxu0 0.0
    %1803 = vmatpush1.msra.mxu0 0.0
    %1804 = vmatprep.subr.mxu0 0.0
    %1805 = vmatpush1.msra.mxu0 0.0
    %1806 = vmatprep.subr.mxu0 0.0
    %1807 = vmatpush1.msra.mxu0 0.0
    %1808 = vmatprep.subr.mxu0 0.0
    %1809 = vmatpush1.msra.mxu0 0.0
    %1810 = vmatprep.subr.mxu0 0.0
    %1811 = vmatpush1.msra.mxu0 0.0
    %1812 = vmatprep.subr.mxu0 0.0
    %1813 = vmatpush1.msra.mxu0 0.0
    %1814 = vmatprep.subr.mxu0 0.0
    %1815 = vmatpush1.msra.mxu0 0.0
    %1816 = vmatprep.subr.mxu0 0.0
    %1817 = vmatpush1.msra.mxu0 0.0
    %1818 = vmatprep.subr.mxu0 0.0
    %1819 = vmatpush1.msra.mxu0 0.0
    %1820 = vmatprep.subr.mxu0 0.0
    %1821 = vmatpush1.msra.mxu0 0.0
    %1822 = vmatprep.mubr.f32.mxu0 0.0
    %v1823 = vand.u32 %v1453, 4294901760
    %1824 = vmatmul.mubr.f32.gmra.mrb[0].mxu0 %v1823
    %v1825 = vpop.f32.mrb[0].mxu0
    %v1826 = vadd.f32 %v1752, %v1825
    %v1827 = vpop.f32.mrb[0].mxu0
    %1828 = vdwg.mxu0
    %1829 = vmatprep.subr.mxu0 0.0
    %v1830 = vand.u32 %v529, 4294901760
    %1831 = vmatpush1.msra.mxu0 %v1830
    %1832 = vmatprep.subr.mxu0 0.0
    %1833 = vmatpush1.msra.mxu0 0.0
    %1834 = vmatprep.subr.mxu0 0.0
    %1835 = vmatpush1.msra.mxu0 0.0
    %1836 = vmatprep.subr.mxu0 0.0
    %1837 = vmatpush1.msra.mxu0 0.0
    %1838 = vmatprep.subr.mxu0 0.0
    %1839 = vmatpush1.msra.mxu0 0.0
    %1840 = vmatprep.subr.mxu0 0.0
    %1841 = vmatpush1.msra.mxu0 0.0
    %1842 = vmatprep.subr.mxu0 0.0
    %1843 = vmatpush1.msra.mxu0 0.0
    %1844 = vmatprep.subr.mxu0 0.0
    %1845 = vmatpush1.msra.mxu0 0.0
    %1846 = vmatprep.subr.mxu0 0.0
    %1847 = vmatpush1.msra.mxu0 0.0
    %1848 = vmatprep.subr.mxu0 0.0
    %1849 = vmatpush1.msra.mxu0 0.0
    %1850 = vmatprep.subr.mxu0 0.0
    %1851 = vmatpush1.msra.mxu0 0.0
    %1852 = vmatprep.subr.mxu0 0.0
    %1853 = vmatpush1.msra.mxu0 0.0
    %1854 = vmatprep.subr.mxu0 0.0
    %1855 = vmatpush1.msra.mxu0 0.0
    %1856 = vmatprep.subr.mxu0 0.0
    %1857 = vmatpush1.msra.mxu0 0.0
    %1858 = vmatprep.subr.mxu0 0.0
    %1859 = vmatpush1.msra.mxu0 0.0
    %1860 = vmatprep.subr.mxu0 0.0
    %1861 = vmatpush1.msra.mxu0 0.0
    %1862 = vmatprep.subr.mxu0 0.0
    %1863 = vmatpush1.msra.mxu0 0.0
    %1864 = vmatprep.subr.mxu0 0.0
    %1865 = vmatpush1.msra.mxu0 0.0
    %1866 = vmatprep.subr.mxu0 0.0
    %1867 = vmatpush1.msra.mxu0 0.0
    %1868 = vmatprep.subr.mxu0 0.0
    %1869 = vmatpush1.msra.mxu0 0.0
    %1870 = vmatprep.subr.mxu0 0.0
    %1871 = vmatpush1.msra.mxu0 0.0
    %1872 = vmatprep.subr.mxu0 0.0
    %1873 = vmatpush1.msra.mxu0 0.0
    %1874 = vmatprep.subr.mxu0 0.0
    %1875 = vmatpush1.msra.mxu0 0.0
    %1876 = vmatprep.subr.mxu0 0.0
    %1877 = vmatpush1.msra.mxu0 0.0
    %1878 = vmatprep.subr.mxu0 0.0
    %1879 = vmatpush1.msra.mxu0 0.0
    %1880 = vmatprep.subr.mxu0 0.0
    %1881 = vmatpush1.msra.mxu0 0.0
    %1882 = vmatprep.subr.mxu0 0.0
    %1883 = vmatpush1.msra.mxu0 0.0
    %1884 = vmatprep.subr.mxu0 0.0
    %1885 = vmatpush1.msra.mxu0 0.0
    %1886 = vmatprep.subr.mxu0 0.0
    %1887 = vmatpush1.msra.mxu0 0.0
    %1888 = vmatprep.subr.mxu0 0.0
    %1889 = vmatpush1.msra.mxu0 0.0
    %1890 = vmatprep.subr.mxu0 0.0
    %1891 = vmatpush1.msra.mxu0 0.0
    %1892 = vmatprep.subr.mxu0 0.0
    %1893 = vmatpush1.msra.mxu0 0.0
    %1894 = vmatprep.mubr.f32.mxu0 0.0
    %v1895 = vand.u32 %v1453, 4294901760
    %1896 = vmatmul.mubr.f32.gmra.mrb[0].mxu0 %v1895
    %v1897 = vpop.f32.mrb[0].mxu0
    %v1898 = vadd.f32 %v1826, %v1897
    %v1899 = vpop.f32.mrb[0].mxu0
    %1900 = vdwg.mxu0
    %v1901 = vmul.f32 %v1443, %v977
    %v1902 = vadd.f32 %v1901, %v1898
    %v1903 = vld [vmem:[#allocation3 + $0x2] sm:$0x1]
    %v1904 = vadd.f32 %v1902, %v1903
    %1905 = vst.msk [vmem:[#allocation2 + $0x2] sm:$0x1] %vm982, %v1904
    %v1906 = vadd.f32 %v1904, %v56
    %v1907 = vxor.u32 %v1906, 2147483648
    %v1908 = vmul.f32 %v1907, 1.442695
    %v1909 = vpow.pop %v1908
    %v1910 = vadd.f32 %v1909, 1.0
    %v1911 = vrcp.pop %v1910
    %v1912 = vmul.f32 1.0, %v1911
    %v1914 = vsel %vm62, %v1912, 0
    %1916 = vmatprep.subr.mxu0 0.0
    %v1917 = vand.u32 %v529, 4294901760
    %1918 = vmatpush1.msra.mxu0 %v1917
    %1919 = vmatprep.subr.mxu0 0.0
    %1920 = vmatpush1.msra.mxu0 0.0
    %1921 = vmatprep.subr.mxu0 0.0
    %1922 = vmatpush1.msra.mxu0 0.0
    %1923 = vmatprep.subr.mxu0 0.0
    %1924 = vmatpush1.msra.mxu0 0.0
    %1925 = vmatprep.subr.mxu0 0.0
    %1926 = vmatpush1.msra.mxu0 0.0
    %1927 = vmatprep.subr.mxu0 0.0
    %1928 = vmatpush1.msra.mxu0 0.0
    %1929 = vmatprep.subr.mxu0 0.0
    %1930 = vmatpush1.msra.mxu0 0.0
    %1931 = vmatprep.subr.mxu0 0.0
    %1932 = vmatpush1.msra.mxu0 0.0
    %1933 = vmatprep.subr.mxu0 0.0
    %1934 = vmatpush1.msra.mxu0 0.0
    %1935 = vmatprep.subr.mxu0 0.0
    %1936 = vmatpush1.msra.mxu0 0.0
    %1937 = vmatprep.subr.mxu0 0.0
    %1938 = vmatpush1.msra.mxu0 0.0
    %1939 = vmatprep.subr.mxu0 0.0
    %1940 = vmatpush1.msra.mxu0 0.0
    %1941 = vmatprep.subr.mxu0 0.0
    %1942 = vmatpush1.msra.mxu0 0.0
    %1943 = vmatprep.subr.mxu0 0.0
    %1944 = vmatpush1.msra.mxu0 0.0
    %1945 = vmatprep.subr.mxu0 0.0
    %1946 = vmatpush1.msra.mxu0 0.0
    %1947 = vmatprep.subr.mxu0 0.0
    %1948 = vmatpush1.msra.mxu0 0.0
    %1949 = vmatprep.subr.mxu0 0.0
    %1950 = vmatpush1.msra.mxu0 0.0
    %1951 = vmatprep.subr.mxu0 0.0
    %1952 = vmatpush1.msra.mxu0 0.0
    %1953 = vmatprep.subr.mxu0 0.0
    %1954 = vmatpush1.msra.mxu0 0.0
    %1955 = vmatprep.subr.mxu0 0.0
    %1956 = vmatpush1.msra.mxu0 0.0
    %1957 = vmatprep.subr.mxu0 0.0
    %1958 = vmatpush1.msra.mxu0 0.0
    %1959 = vmatprep.subr.mxu0 0.0
    %1960 = vmatpush1.msra.mxu0 0.0
    %1961 = vmatprep.subr.mxu0 0.0
    %1962 = vmatpush1.msra.mxu0 0.0
    %1963 = vmatprep.subr.mxu0 0.0
    %1964 = vmatpush1.msra.mxu0 0.0
    %1965 = vmatprep.subr.mxu0 0.0
    %1966 = vmatpush1.msra.mxu0 0.0
    %1967 = vmatprep.subr.mxu0 0.0
    %1968 = vmatpush1.msra.mxu0 0.0
    %1969 = vmatprep.subr.mxu0 0.0
    %1970 = vmatpush1.msra.mxu0 0.0
    %1971 = vmatprep.subr.mxu0 0.0
    %1972 = vmatpush1.msra.mxu0 0.0
    %1973 = vmatprep.subr.mxu0 0.0
    %1974 = vmatpush1.msra.mxu0 0.0
    %1975 = vmatprep.subr.mxu0 0.0
    %1976 = vmatpush1.msra.mxu0 0.0
    %1977 = vmatprep.subr.mxu0 0.0
    %1978 = vmatpush1.msra.mxu0 0.0
    %1979 = vmatprep.subr.mxu0 0.0
    %1980 = vmatpush1.msra.mxu0 0.0
    %1981 = vmatprep.mubr.f32.mxu0 0.0
    %v1982 = vand.u32 %v1914, 4294901760
    %v1983 = vsub.f32 %v1914, %v1982
    %v1984 = vand.u32 %v1983, 4294901760
    %v1985 = vsub.f32 %v1983, %v1984
    %v1986 = vand.u32 %v1985, 4294901760
    %1987 = vmatmul.mubr.f32.gmra.mrb[0].mxu0 %v1986
    %v1988 = vpop.f32.mrb[0].mxu0
    %v1989 = vadd.f32 0.0, %v1988
    %v1990 = vpop.f32.mrb[0].mxu0
    %1991 = vdwg.mxu0
    %1992 = vmatprep.subr.mxu0 0.0
    %v1993 = vand.u32 %v529, 4294901760
    %v1994 = vsub.f32 %v529, %v1993
    %v1995 = vand.u32 %v1994, 4294901760
    %v1996 = vsub.f32 %v1994, %v1995
    %v1997 = vand.u32 %v1996, 4294901760
    %1998 = vmatpush1.msra.mxu0 %v1997
    %1999 = vmatprep.subr.mxu0 0.0
    %2000 = vmatpush1.msra.mxu0 0.0
    %2001 = vmatprep.subr.mxu0 0.0
    %2002 = vmatpush1.msra.mxu0 0.0
    %2003 = vmatprep.subr.mxu0 0.0
    %2004 = vmatpush1.msra.mxu0 0.0
    %2005 = vmatprep.subr.mxu0 0.0
    %2006 = vmatpush1.msra.mxu0 0.0
    %2007 = vmatprep.subr.mxu0 0.0
    %2008 = vmatpush1.msra.mxu0 0.0
    %2009 = vmatprep.subr.mxu0 0.0
    %2010 = vmatpush1.msra.mxu0 0.0
    %2011 = vmatprep.subr.mxu0 0.0
    %2012 = vmatpush1.msra.mxu0 0.0
    %2013 = vmatprep.subr.mxu0 0.0
    %2014 = vmatpush1.msra.mxu0 0.0
    %2015 = vmatprep.subr.mxu0 0.0
    %2016 = vmatpush1.msra.mxu0 0.0
    %2017 = vmatprep.subr.mxu0 0.0
    %2018 = vmatpush1.msra.mxu0 0.0
    %2019 = vmatprep.subr.mxu0 0.0
    %2020 = vmatpush1.msra.mxu0 0.0
    %2021 = vmatprep.subr.mxu0 0.0
    %2022 = vmatpush1.msra.mxu0 0.0
    %2023 = vmatprep.subr.mxu0 0.0
    %2024 = vmatpush1.msra.mxu0 0.0
    %2025 = vmatprep.subr.mxu0 0.0
    %2026 = vmatpush1.msra.mxu0 0.0
    %2027 = vmatprep.subr.mxu0 0.0
    %2028 = vmatpush1.msra.mxu0 0.0
    %2029 = vmatprep.subr.mxu0 0.0
    %2030 = vmatpush1.msra.mxu0 0.0
    %2031 = vmatprep.subr.mxu0 0.0
    %2032 = vmatpush1.msra.mxu0 0.0
    %2033 = vmatprep.subr.mxu0 0.0
    %2034 = vmatpush1.msra.mxu0 0.0
    %2035 = vmatprep.subr.mxu0 0.0
    %2036 = vmatpush1.msra.mxu0 0.0
    %2037 = vmatprep.subr.mxu0 0.0
    %2038 = vmatpush1.msra.mxu0 0.0
    %2039 = vmatprep.subr.mxu0 0.0
    %2040 = vmatpush1.msra.mxu0 0.0
    %2041 = vmatprep.subr.mxu0 0.0
    %2042 = vmatpush1.msra.mxu0 0.0
    %2043 = vmatprep.subr.mxu0 0.0
    %2044 = vmatpush1.msra.mxu0 0.0
    %2045 = vmatprep.subr.mxu0 0.0
    %2046 = vmatpush1.msra.mxu0 0.0
    %2047 = vmatprep.subr.mxu0 0.0
    %2048 = vmatpush1.msra.mxu0 0.0
    %2049 = vmatprep.subr.mxu0 0.0
    %2050 = vmatpush1.msra.mxu0 0.0
    %2051 = vmatprep.subr.mxu0 0.0
    %2052 = vmatpush1.msra.mxu0 0.0
    %2053 = vmatprep.subr.mxu0 0.0
    %2054 = vmatpush1.msra.mxu0 0.0
    %2055 = vmatprep.subr.mxu0 0.0
    %2056 = vmatpush1.msra.mxu0 0.0
    %2057 = vmatprep.subr.mxu0 0.0
    %2058 = vmatpush1.msra.mxu0 0.0
    %2059 = vmatprep.subr.mxu0 0.0
    %2060 = vmatpush1.msra.mxu0 0.0
    %2061 = vmatprep.mubr.f32.mxu0 0.0
    %v2062 = vand.u32 %v1914, 4294901760
    %2063 = vmatmul.mubr.f32.gmra.mrb[0].mxu0 %v2062
    %v2064 = vpop.f32.mrb[0].mxu0
    %v2065 = vadd.f32 %v1989, %v2064
    %v2066 = vpop.f32.mrb[0].mxu0
    %2067 = vdwg.mxu0
    %2068 = vmatprep.subr.mxu0 0.0
    %v2069 = vand.u32 %v529, 4294901760
    %v2070 = vsub.f32 %v529, %v2069
    %2071 = vmatpush1.msra.mxu0 %v2070
    %2072 = vmatprep.subr.mxu0 0.0
    %2073 = vmatpush1.msra.mxu0 0.0
    %2074 = vmatprep.subr.mxu0 0.0
    %2075 = vmatpush1.msra.mxu0 0.0
    %2076 = vmatprep.subr.mxu0 0.0
    %2077 = vmatpush1.msra.mxu0 0.0
    %2078 = vmatprep.subr.mxu0 0.0
    %2079 = vmatpush1.msra.mxu0 0.0
    %2080 = vmatprep.subr.mxu0 0.0
    %2081 = vmatpush1.msra.mxu0 0.0
    %2082 = vmatprep.subr.mxu0 0.0
    %2083 = vmatpush1.msra.mxu0 0.0
    %2084 = vmatprep.subr.mxu0 0.0
    %2085 = vmatpush1.msra.mxu0 0.0
    %2086 = vmatprep.subr.mxu0 0.0
    %2087 = vmatpush1.msra.mxu0 0.0
    %2088 = vmatprep.subr.mxu0 0.0
    %2089 = vmatpush1.msra.mxu0 0.0
    %2090 = vmatprep.subr.mxu0 0.0
    %2091 = vmatpush1.msra.mxu0 0.0
    %2092 = vmatprep.subr.mxu0 0.0
    %2093 = vmatpush1.msra.mxu0 0.0
    %2094 = vmatprep.subr.mxu0 0.0
    %2095 = vmatpush1.msra.mxu0 0.0
    %2096 = vmatprep.subr.mxu0 0.0
    %2097 = vmatpush1.msra.mxu0 0.0
    %2098 = vmatprep.subr.mxu0 0.0
    %2099 = vmatpush1.msra.mxu0 0.0
    %2100 = vmatprep.subr.mxu0 0.0
    %2101 = vmatpush1.msra.mxu0 0.0
    %2102 = vmatprep.subr.mxu0 0.0
    %2103 = vmatpush1.msra.mxu0 0.0
    %2104 = vmatprep.subr.mxu0 0.0
    %2105 = vmatpush1.msra.mxu0 0.0
    %2106 = vmatprep.subr.mxu0 0.0
    %2107 = vmatpush1.msra.mxu0 0.0
    %2108 = vmatprep.subr.mxu0 0.0
    %2109 = vmatpush1.msra.mxu0 0.0
    %2110 = vmatprep.subr.mxu0 0.0
    %2111 = vmatpush1.msra.mxu0 0.0
    %2112 = vmatprep.subr.mxu0 0.0
    %2113 = vmatpush1.msra.mxu0 0.0
    %2114 = vmatprep.subr.mxu0 0.0
    %2115 = vmatpush1.msra.mxu0 0.0
    %2116 = vmatprep.subr.mxu0 0.0
    %2117 = vmatpush1.msra.mxu0 0.0
    %2118 = vmatprep.subr.mxu0 0.0
    %2119 = vmatpush1.msra.mxu0 0.0
    %2120 = vmatprep.subr.mxu0 0.0
    %2121 = vmatpush1.msra.mxu0 0.0
    %2122 = vmatprep.subr.mxu0 0.0
    %2123 = vmatpush1.msra.mxu0 0.0
    %2124 = vmatprep.subr.mxu0 0.0
    %2125 = vmatpush1.msra.mxu0 0.0
    %2126 = vmatprep.subr.mxu0 0.0
    %2127 = vmatpush1.msra.mxu0 0.0
    %2128 = vmatprep.subr.mxu0 0.0
    %2129 = vmatpush1.msra.mxu0 0.0
    %2130 = vmatprep.subr.mxu0 0.0
    %2131 = vmatpush1.msra.mxu0 0.0
    %2132 = vmatprep.subr.mxu0 0.0
    %2133 = vmatpush1.msra.mxu0 0.0
    %2134 = vmatprep.mubr.f32.mxu0 0.0
    %v2135 = vand.u32 %v1914, 4294901760
    %v2136 = vsub.f32 %v1914, %v2135
    %2137 = vmatmul.mubr.f32.gmra.mrb[0].mxu0 %v2136
    %v2138 = vpop.f32.mrb[0].mxu0
    %v2139 = vadd.f32 %v2065, %v2138
    %v2140 = vpop.f32.mrb[0].mxu0
    %2141 = vdwg.mxu0
    %2142 = vmatprep.subr.mxu0 0.0
    %v2143 = vand.u32 %v529, 4294901760
    %2144 = vmatpush1.msra.mxu0 %v2143
    %2145 = vmatprep.subr.mxu0 0.0
    %2146 = vmatpush1.msra.mxu0 0.0
    %2147 = vmatprep.subr.mxu0 0.0
    %2148 = vmatpush1.msra.mxu0 0.0
    %2149 = vmatprep.subr.mxu0 0.0
    %2150 = vmatpush1.msra.mxu0 0.0
    %2151 = vmatprep.subr.mxu0 0.0
    %2152 = vmatpush1.msra.mxu0 0.0
    %2153 = vmatprep.subr.mxu0 0.0
    %2154 = vmatpush1.msra.mxu0 0.0
    %2155 = vmatprep.subr.mxu0 0.0
    %2156 = vmatpush1.msra.mxu0 0.0
    %2157 = vmatprep.subr.mxu0 0.0
    %2158 = vmatpush1.msra.mxu0 0.0
    %2159 = vmatprep.subr.mxu0 0.0
    %2160 = vmatpush1.msra.mxu0 0.0
    %2161 = vmatprep.subr.mxu0 0.0
    %2162 = vmatpush1.msra.mxu0 0.0
    %2163 = vmatprep.subr.mxu0 0.0
    %2164 = vmatpush1.msra.mxu0 0.0
    %2165 = vmatprep.subr.mxu0 0.0
    %2166 = vmatpush1.msra.mxu0 0.0
    %2167 = vmatprep.subr.mxu0 0.0
    %2168 = vmatpush1.msra.mxu0 0.0
    %2169 = vmatprep.subr.mxu0 0.0
    %2170 = vmatpush1.msra.mxu0 0.0
    %2171 = vmatprep.subr.mxu0 0.0
    %2172 = vmatpush1.msra.mxu0 0.0
    %2173 = vmatprep.subr.mxu0 0.0
    %2174 = vmatpush1.msra.mxu0 0.0
    %2175 = vmatprep.subr.mxu0 0.0
    %2176 = vmatpush1.msra.mxu0 0.0
    %2177 = vmatprep.subr.mxu0 0.0
    %2178 = vmatpush1.msra.mxu0 0.0
    %2179 = vmatprep.subr.mxu0 0.0
    %2180 = vmatpush1.msra.mxu0 0.0
    %2181 = vmatprep.subr.mxu0 0.0
    %2182 = vmatpush1.msra.mxu0 0.0
    %2183 = vmatprep.subr.mxu0 0.0
    %2184 = vmatpush1.msra.mxu0 0.0
    %2185 = vmatprep.subr.mxu0 0.0
    %2186 = vmatpush1.msra.mxu0 0.0
    %2187 = vmatprep.subr.mxu0 0.0
    %2188 = vmatpush1.msra.mxu0 0.0
    %2189 = vmatprep.subr.mxu0 0.0
    %2190 = vmatpush1.msra.mxu0 0.0
    %2191 = vmatprep.subr.mxu0 0.0
    %2192 = vmatpush1.msra.mxu0 0.0
    %2193 = vmatprep.subr.mxu0 0.0
    %2194 = vmatpush1.msra.mxu0 0.0
    %2195 = vmatprep.subr.mxu0 0.0
    %2196 = vmatpush1.msra.mxu0 0.0
    %2197 = vmatprep.subr.mxu0 0.0
    %2198 = vmatpush1.msra.mxu0 0.0
    %2199 = vmatprep.subr.mxu0 0.0
    %2200 = vmatpush1.msra.mxu0 0.0
    %2201 = vmatprep.subr.mxu0 0.0
    %2202 = vmatpush1.msra.mxu0 0.0
    %2203 = vmatprep.subr.mxu0 0.0
    %2204 = vmatpush1.msra.mxu0 0.0
    %2205 = vmatprep.subr.mxu0 0.0
    %2206 = vmatpush1.msra.mxu0 0.0
    %2207 = vmatprep.mubr.f32.mxu0 0.0
    %v2208 = vand.u32 %v1914, 4294901760
    %v2209 = vsub.f32 %v1914, %v2208
    %v2210 = vand.u32 %v2209, 4294901760
    %2211 = vmatmul.mubr.f32.gmra.mrb[0].mxu0 %v2210
    %v2212 = vpop.f32.mrb[0].mxu0
    %v2213 = vadd.f32 %v2139, %v2212
    %v2214 = vpop.f32.mrb[0].mxu0
    %2215 = vdwg.mxu0
    %2216 = vmatprep.subr.mxu0 0.0
    %v2217 = vand.u32 %v529, 4294901760
    %v2218 = vsub.f32 %v529, %v2217
    %v2219 = vand.u32 %v2218, 4294901760
    %2220 = vmatpush1.msra.mxu0 %v2219
    %2221 = vmatprep.subr.mxu0 0.0
    %2222 = vmatpush1.msra.mxu0 0.0
    %2223 = vmatprep.subr.mxu0 0.0
    %2224 = vmatpush1.msra.mxu0 0.0
    %2225 = vmatprep.subr.mxu0 0.0
    %2226 = vmatpush1.msra.mxu0 0.0
    %2227 = vmatprep.subr.mxu0 0.0
    %2228 = vmatpush1.msra.mxu0 0.0
    %2229 = vmatprep.subr.mxu0 0.0
    %2230 = vmatpush1.msra.mxu0 0.0
    %2231 = vmatprep.subr.mxu0 0.0
    %2232 = vmatpush1.msra.mxu0 0.0
    %2233 = vmatprep.subr.mxu0 0.0
    %2234 = vmatpush1.msra.mxu0 0.0
    %2235 = vmatprep.subr.mxu0 0.0
    %2236 = vmatpush1.msra.mxu0 0.0
    %2237 = vmatprep.subr.mxu0 0.0
    %2238 = vmatpush1.msra.mxu0 0.0
    %2239 = vmatprep.subr.mxu0 0.0
    %2240 = vmatpush1.msra.mxu0 0.0
    %2241 = vmatprep.subr.mxu0 0.0
    %2242 = vmatpush1.msra.mxu0 0.0
    %2243 = vmatprep.subr.mxu0 0.0
    %2244 = vmatpush1.msra.mxu0 0.0
    %2245 = vmatprep.subr.mxu0 0.0
    %2246 = vmatpush1.msra.mxu0 0.0
    %2247 = vmatprep.subr.mxu0 0.0
    %2248 = vmatpush1.msra.mxu0 0.0
    %2249 = vmatprep.subr.mxu0 0.0
    %2250 = vmatpush1.msra.mxu0 0.0
    %2251 = vmatprep.subr.mxu0 0.0
    %2252 = vmatpush1.msra.mxu0 0.0
    %2253 = vmatprep.subr.mxu0 0.0
    %2254 = vmatpush1.msra.mxu0 0.0
    %2255 = vmatprep.subr.mxu0 0.0
    %2256 = vmatpush1.msra.mxu0 0.0
    %2257 = vmatprep.subr.mxu0 0.0
    %2258 = vmatpush1.msra.mxu0 0.0
    %2259 = vmatprep.subr.mxu0 0.0
    %2260 = vmatpush1.msra.mxu0 0.0
    %2261 = vmatprep.subr.mxu0 0.0
    %2262 = vmatpush1.msra.mxu0 0.0
    %2263 = vmatprep.subr.mxu0 0.0
    %2264 = vmatpush1.msra.mxu0 0.0
    %2265 = vmatprep.subr.mxu0 0.0
    %2266 = vmatpush1.msra.mxu0 0.0
    %2267 = vmatprep.subr.mxu0 0.0
    %2268 = vmatpush1.msra.mxu0 0.0
    %2269 = vmatprep.subr.mxu0 0.0
    %2270 = vmatpush1.msra.mxu0 0.0
    %2271 = vmatprep.subr.mxu0 0.0
    %2272 = vmatpush1.msra.mxu0 0.0
    %2273 = vmatprep.subr.mxu0 0.0
    %2274 = vmatpush1.msra.mxu0 0.0
    %2275 = vmatprep.subr.mxu0 0.0
    %2276 = vmatpush1.msra.mxu0 0.0
    %2277 = vmatprep.subr.mxu0 0.0
    %2278 = vmatpush1.msra.mxu0 0.0
    %2279 = vmatprep.subr.mxu0 0.0
    %2280 = vmatpush1.msra.mxu0 0.0
    %2281 = vmatprep.subr.mxu0 0.0
    %2282 = vmatpush1.msra.mxu0 0.0
    %2283 = vmatprep.mubr.f32.mxu0 0.0
    %v2284 = vand.u32 %v1914, 4294901760
    %2285 = vmatmul.mubr.f32.gmra.mrb[0].mxu0 %v2284
    %v2286 = vpop.f32.mrb[0].mxu0
    %v2287 = vadd.f32 %v2213, %v2286
    %v2288 = vpop.f32.mrb[0].mxu0
    %2289 = vdwg.mxu0
    %2290 = vmatprep.subr.mxu0 0.0
    %v2291 = vand.u32 %v529, 4294901760
    %2292 = vmatpush1.msra.mxu0 %v2291
    %2293 = vmatprep.subr.mxu0 0.0
    %2294 = vmatpush1.msra.mxu0 0.0
    %2295 = vmatprep.subr.mxu0 0.0
    %2296 = vmatpush1.msra.mxu0 0.0
    %2297 = vmatprep.subr.mxu0 0.0
    %2298 = vmatpush1.msra.mxu0 0.0
    %2299 = vmatprep.subr.mxu0 0.0
    %2300 = vmatpush1.msra.mxu0 0.0
    %2301 = vmatprep.subr.mxu0 0.0
    %2302 = vmatpush1.msra.mxu0 0.0
    %2303 = vmatprep.subr.mxu0 0.0
    %2304 = vmatpush1.msra.mxu0 0.0
    %2305 = vmatprep.subr.mxu0 0.0
    %2306 = vmatpush1.msra.mxu0 0.0
    %2307 = vmatprep.subr.mxu0 0.0
    %2308 = vmatpush1.msra.mxu0 0.0
    %2309 = vmatprep.subr.mxu0 0.0
    %2310 = vmatpush1.msra.mxu0 0.0
    %2311 = vmatprep.subr.mxu0 0.0
    %2312 = vmatpush1.msra.mxu0 0.0
    %2313 = vmatprep.subr.mxu0 0.0
    %2314 = vmatpush1.msra.mxu0 0.0
    %2315 = vmatprep.subr.mxu0 0.0
    %2316 = vmatpush1.msra.mxu0 0.0
    %2317 = vmatprep.subr.mxu0 0.0
    %2318 = vmatpush1.msra.mxu0 0.0
    %2319 = vmatprep.subr.mxu0 0.0
    %2320 = vmatpush1.msra.mxu0 0.0
    %2321 = vmatprep.subr.mxu0 0.0
    %2322 = vmatpush1.msra.mxu0 0.0
    %2323 = vmatprep.subr.mxu0 0.0
    %2324 = vmatpush1.msra.mxu0 0.0
    %2325 = vmatprep.subr.mxu0 0.0
    %2326 = vmatpush1.msra.mxu0 0.0
    %2327 = vmatprep.subr.mxu0 0.0
    %2328 = vmatpush1.msra.mxu0 0.0
    %2329 = vmatprep.subr.mxu0 0.0
    %2330 = vmatpush1.msra.mxu0 0.0
    %2331 = vmatprep.subr.mxu0 0.0
    %2332 = vmatpush1.msra.mxu0 0.0
    %2333 = vmatprep.subr.mxu0 0.0
    %2334 = vmatpush1.msra.mxu0 0.0
    %2335 = vmatprep.subr.mxu0 0.0
    %2336 = vmatpush1.msra.mxu0 0.0
    %2337 = vmatprep.subr.mxu0 0.0
    %2338 = vmatpush1.msra.mxu0 0.0
    %2339 = vmatprep.subr.mxu0 0.0
    %2340 = vmatpush1.msra.mxu0 0.0
    %2341 = vmatprep.subr.mxu0 0.0
    %2342 = vmatpush1.msra.mxu0 0.0
    %2343 = vmatprep.subr.mxu0 0.0
    %2344 = vmatpush1.msra.mxu0 0.0
    %2345 = vmatprep.subr.mxu0 0.0
    %2346 = vmatpush1.msra.mxu0 0.0
    %2347 = vmatprep.subr.mxu0 0.0
    %2348 = vmatpush1.msra.mxu0 0.0
    %2349 = vmatprep.subr.mxu0 0.0
    %2350 = vmatpush1.msra.mxu0 0.0
    %2351 = vmatprep.subr.mxu0 0.0
    %2352 = vmatpush1.msra.mxu0 0.0
    %2353 = vmatprep.subr.mxu0 0.0
    %2354 = vmatpush1.msra.mxu0 0.0
    %2355 = vmatprep.mubr.f32.mxu0 0.0
    %v2356 = vand.u32 %v1914, 4294901760
    %2357 = vmatmul.mubr.f32.gmra.mrb[0].mxu0 %v2356
    %v2358 = vpop.f32.mrb[0].mxu0
    %v2359 = vadd.f32 %v2287, %v2358
    %v2360 = vpop.f32.mrb[0].mxu0
    %2361 = vdwg.mxu0
    %v2362 = vmul.f32 %v1904, %v977
    %v2363 = vadd.f32 %v2362, %v2359
    %v2364 = vld [vmem:[#allocation3 + $0x3] sm:$0x1]
    %v2365 = vadd.f32 %v2363, %v2364
    %2366 = vst.msk [vmem:[#allocation2 + $0x3] sm:$0x1] %vm982, %v2365
    %v2367 = vadd.f32 %v2365, %v56
    %v2368 = vxor.u32 %v2367, 2147483648
    %v2369 = vmul.f32 %v2368, 1.442695
    %v2370 = vpow.pop %v2369
    %v2371 = vadd.f32 %v2370, 1.0
    %v2372 = vrcp.pop %v2371
    %v2373 = vmul.f32 1.0, %v2372
    %v2375 = vsel %vm62, %v2373, 0
    %2377 = vmatprep.subr.mxu0 0.0
    %v2378 = vand.u32 %v529, 4294901760
    %2379 = vmatpush1.msra.mxu0 %v2378
    %2380 = vmatprep.subr.mxu0 0.0
    %2381 = vmatpush1.msra.mxu0 0.0
    %2382 = vmatprep.subr.mxu0 0.0
    %2383 = vmatpush1.msra.mxu0 0.0
    %2384 = vmatprep.subr.mxu0 0.0
    %2385 = vmatpush1.msra.mxu0 0.0
    %2386 = vmatprep.subr.mxu0 0.0
    %2387 = vmatpush1.msra.mxu0 0.0
    %2388 = vmatprep.subr.mxu0 0.0
    %2389 = vmatpush1.msra.mxu0 0.0
    %2390 = vmatprep.subr.mxu0 0.0
    %2391 = vmatpush1.msra.mxu0 0.0
    %2392 = vmatprep.subr.mxu0 0.0
    %2393 = vmatpush1.msra.mxu0 0.0
    %2394 = vmatprep.subr.mxu0 0.0
    %2395 = vmatpush1.msra.mxu0 0.0
    %2396 = vmatprep.subr.mxu0 0.0
    %2397 = vmatpush1.msra.mxu0 0.0
    %2398 = vmatprep.subr.mxu0 0.0
    %2399 = vmatpush1.msra.mxu0 0.0
    %2400 = vmatprep.subr.mxu0 0.0
    %2401 = vmatpush1.msra.mxu0 0.0
    %2402 = vmatprep.subr.mxu0 0.0
    %2403 = vmatpush1.msra.mxu0 0.0
    %2404 = vmatprep.subr.mxu0 0.0
    %2405 = vmatpush1.msra.mxu0 0.0
    %2406 = vmatprep.subr.mxu0 0.0
    %2407 = vmatpush1.msra.mxu0 0.0
    %2408 = vmatprep.subr.mxu0 0.0
    %2409 = vmatpush1.msra.mxu0 0.0
    %2410 = vmatprep.subr.mxu0 0.0
    %2411 = vmatpush1.msra.mxu0 0.0
    %2412 = vmatprep.subr.mxu0 0.0
    %2413 = vmatpush1.msra.mxu0 0.0
    %2414 = vmatprep.subr.mxu0 0.0
    %2415 = vmatpush1.msra.mxu0 0.0
    %2416 = vmatprep.subr.mxu0 0.0
    %2417 = vmatpush1.msra.mxu0 0.0
    %2418 = vmatprep.subr.mxu0 0.0
    %2419 = vmatpush1.msra.mxu0 0.0
    %2420 = vmatprep.subr.mxu0 0.0
    %2421 = vmatpush1.msra.mxu0 0.0
    %2422 = vmatprep.subr.mxu0 0.0
    %2423 = vmatpush1.msra.mxu0 0.0
    %2424 = vmatprep.subr.mxu0 0.0
    %2425 = vmatpush1.msra.mxu0 0.0
    %2426 = vmatprep.subr.mxu0 0.0
    %2427 = vmatpush1.msra.mxu0 0.0
    %2428 = vmatprep.subr.mxu0 0.0
    %2429 = vmatpush1.msra.mxu0 0.0
    %2430 = vmatprep.subr.mxu0 0.0
    %2431 = vmatpush1.msra.mxu0 0.0
    %2432 = vmatprep.subr.mxu0 0.0
    %2433 = vmatpush1.msra.mxu0 0.0
    %2434 = vmatprep.subr.mxu0 0.0
    %2435 = vmatpush1.msra.mxu0 0.0
    %2436 = vmatprep.subr.mxu0 0.0
    %2437 = vmatpush1.msra.mxu0 0.0
    %2438 = vmatprep.subr.mxu0 0.0
    %2439 = vmatpush1.msra.mxu0 0.0
    %2440 = vmatprep.subr.mxu0 0.0
    %2441 = vmatpush1.msra.mxu0 0.0
    %2442 = vmatprep.mubr.f32.mxu0 0.0
    %v2443 = vand.u32 %v2375, 4294901760
    %v2444 = vsub.f32 %v2375, %v2443
    %v2445 = vand.u32 %v2444, 4294901760
    %v2446 = vsub.f32 %v2444, %v2445
    %v2447 = vand.u32 %v2446, 4294901760
    %2448 = vmatmul.mubr.f32.gmra.mrb[0].mxu0 %v2447
    %v2449 = vpop.f32.mrb[0].mxu0
    %v2450 = vadd.f32 0.0, %v2449
    %v2451 = vpop.f32.mrb[0].mxu0
    %2452 = vdwg.mxu0
    %2453 = vmatprep.subr.mxu0 0.0
    %v2454 = vand.u32 %v529, 4294901760
    %v2455 = vsub.f32 %v529, %v2454
    %v2456 = vand.u32 %v2455, 4294901760
    %v2457 = vsub.f32 %v2455, %v2456
    %v2458 = vand.u32 %v2457, 4294901760
    %2459 = vmatpush1.msra.mxu0 %v2458
    %2460 = vmatprep.subr.mxu0 0.0
    %2461 = vmatpush1.msra.mxu0 0.0
    %2462 = vmatprep.subr.mxu0 0.0
    %2463 = vmatpush1.msra.mxu0 0.0
    %2464 = vmatprep.subr.mxu0 0.0
    %2465 = vmatpush1.msra.mxu0 0.0
    %2466 = vmatprep.subr.mxu0 0.0
    %2467 = vmatpush1.msra.mxu0 0.0
    %2468 = vmatprep.subr.mxu0 0.0
    %2469 = vmatpush1.msra.mxu0 0.0
    %2470 = vmatprep.subr.mxu0 0.0
    %2471 = vmatpush1.msra.mxu0 0.0
    %2472 = vmatprep.subr.mxu0 0.0
    %2473 = vmatpush1.msra.mxu0 0.0
    %2474 = vmatprep.subr.mxu0 0.0
    %2475 = vmatpush1.msra.mxu0 0.0
    %2476 = vmatprep.subr.mxu0 0.0
    %2477 = vmatpush1.msra.mxu0 0.0
    %2478 = vmatprep.subr.mxu0 0.0
    %2479 = vmatpush1.msra.mxu0 0.0
    %2480 = vmatprep.subr.mxu0 0.0
    %2481 = vmatpush1.msra.mxu0 0.0
    %2482 = vmatprep.subr.mxu0 0.0
    %2483 = vmatpush1.msra.mxu0 0.0
    %2484 = vmatprep.subr.mxu0 0.0
    %2485 = vmatpush1.msra.mxu0 0.0
    %2486 = vmatprep.subr.mxu0 0.0
    %2487 = vmatpush1.msra.mxu0 0.0
    %2488 = vmatprep.subr.mxu0 0.0
    %2489 = vmatpush1.msra.mxu0 0.0
    %2490 = vmatprep.subr.mxu0 0.0
    %2491 = vmatpush1.msra.mxu0 0.0
    %2492 = vmatprep.subr.mxu0 0.0
    %2493 = vmatpush1.msra.mxu0 0.0
    %2494 = vmatprep.subr.mxu0 0.0
    %2495 = vmatpush1.msra.mxu0 0.0
    %2496 = vmatprep.subr.mxu0 0.0
    %2497 = vmatpush1.msra.mxu0 0.0
    %2498 = vmatprep.subr.mxu0 0.0
    %2499 = vmatpush1.msra.mxu0 0.0
    %2500 = vmatprep.subr.mxu0 0.0
    %2501 = vmatpush1.msra.mxu0 0.0
    %2502 = vmatprep.subr.mxu0 0.0
    %2503 = vmatpush1.msra.mxu0 0.0
    %2504 = vmatprep.subr.mxu0 0.0
    %2505 = vmatpush1.msra.mxu0 0.0
    %2506 = vmatprep.subr.mxu0 0.0
    %2507 = vmatpush1.msra.mxu0 0.0
    %2508 = vmatprep.subr.mxu0 0.0
    %2509 = vmatpush1.msra.mxu0 0.0
    %2510 = vmatprep.subr.mxu0 0.0
    %2511 = vmatpush1.msra.mxu0 0.0
    %2512 = vmatprep.subr.mxu0 0.0
    %2513 = vmatpush1.msra.mxu0 0.0
    %2514 = vmatprep.subr.mxu0 0.0
    %2515 = vmatpush1.msra.mxu0 0.0
    %2516 = vmatprep.subr.mxu0 0.0
    %2517 = vmatpush1.msra.mxu0 0.0
    %2518 = vmatprep.subr.mxu0 0.0
    %2519 = vmatpush1.msra.mxu0 0.0
    %2520 = vmatprep.subr.mxu0 0.0
    %2521 = vmatpush1.msra.mxu0 0.0
    %2522 = vmatprep.mubr.f32.mxu0 0.0
    %v2523 = vand.u32 %v2375, 4294901760
    %2524 = vmatmul.mubr.f32.gmra.mrb[0].mxu0 %v2523
    %v2525 = vpop.f32.mrb[0].mxu0
    %v2526 = vadd.f32 %v2450, %v2525
    %v2527 = vpop.f32.mrb[0].mxu0
    %2528 = vdwg.mxu0
    %2529 = vmatprep.subr.mxu0 0.0
    %v2530 = vand.u32 %v529, 4294901760
    %v2531 = vsub.f32 %v529, %v2530
    %2532 = vmatpush1.msra.mxu0 %v2531
    %2533 = vmatprep.subr.mxu0 0.0
    %2534 = vmatpush1.msra.mxu0 0.0
    %2535 = vmatprep.subr.mxu0 0.0
    %2536 = vmatpush1.msra.mxu0 0.0
    %2537 = vmatprep.subr.mxu0 0.0
    %2538 = vmatpush1.msra.mxu0 0.0
    %2539 = vmatprep.subr.mxu0 0.0
    %2540 = vmatpush1.msra.mxu0 0.0
    %2541 = vmatprep.subr.mxu0 0.0
    %2542 = vmatpush1.msra.mxu0 0.0
    %2543 = vmatprep.subr.mxu0 0.0
    %2544 = vmatpush1.msra.mxu0 0.0
    %2545 = vmatprep.subr.mxu0 0.0
    %2546 = vmatpush1.msra.mxu0 0.0
    %2547 = vmatprep.subr.mxu0 0.0
    %2548 = vmatpush1.msra.mxu0 0.0
    %2549 = vmatprep.subr.mxu0 0.0
    %2550 = vmatpush1.msra.mxu0 0.0
    %2551 = vmatprep.subr.mxu0 0.0
    %2552 = vmatpush1.msra.mxu0 0.0
    %2553 = vmatprep.subr.mxu0 0.0
    %2554 = vmatpush1.msra.mxu0 0.0
    %2555 = vmatprep.subr.mxu0 0.0
    %2556 = vmatpush1.msra.mxu0 0.0
    %2557 = vmatprep.subr.mxu0 0.0
    %2558 = vmatpush1.msra.mxu0 0.0
    %2559 = vmatprep.subr.mxu0 0.0
    %2560 = vmatpush1.msra.mxu0 0.0
    %2561 = vmatprep.subr.mxu0 0.0
    %2562 = vmatpush1.msra.mxu0 0.0
    %2563 = vmatprep.subr.mxu0 0.0
    %2564 = vmatpush1.msra.mxu0 0.0
    %2565 = vmatprep.subr.mxu0 0.0
    %2566 = vmatpush1.msra.mxu0 0.0
    %2567 = vmatprep.subr.mxu0 0.0
    %2568 = vmatpush1.msra.mxu0 0.0
    %2569 = vmatprep.subr.mxu0 0.0
    %2570 = vmatpush1.msra.mxu0 0.0
    %2571 = vmatprep.subr.mxu0 0.0
    %2572 = vmatpush1.msra.mxu0 0.0
    %2573 = vmatprep.subr.mxu0 0.0
    %2574 = vmatpush1.msra.mxu0 0.0
    %2575 = vmatprep.subr.mxu0 0.0
    %2576 = vmatpush1.msra.mxu0 0.0
    %2577 = vmatprep.subr.mxu0 0.0
    %2578 = vmatpush1.msra.mxu0 0.0
    %2579 = vmatprep.subr.mxu0 0.0
    %2580 = vmatpush1.msra.mxu0 0.0
    %2581 = vmatprep.subr.mxu0 0.0
    %2582 = vmatpush1.msra.mxu0 0.0
    %2583 = vmatprep.subr.mxu0 0.0
    %2584 = vmatpush1.msra.mxu0 0.0
    %2585 = vmatprep.subr.mxu0 0.0
    %2586 = vmatpush1.msra.mxu0 0.0
    %2587 = vmatprep.subr.mxu0 0.0
    %2588 = vmatpush1.msra.mxu0 0.0
    %2589 = vmatprep.subr.mxu0 0.0
    %2590 = vmatpush1.msra.mxu0 0.0
    %2591 = vmatprep.subr.mxu0 0.0
    %2592 = vmatpush1.msra.mxu0 0.0
    %2593 = vmatprep.subr.mxu0 0.0
    %2594 = vmatpush1.msra.mxu0 0.0
    %2595 = vmatprep.mubr.f32.mxu0 0.0
    %v2596 = vand.u32 %v2375, 4294901760
    %v2597 = vsub.f32 %v2375, %v2596
    %2598 = vmatmul.mubr.f32.gmra.mrb[0].mxu0 %v2597
    %v2599 = vpop.f32.mrb[0].mxu0
    %v2600 = vadd.f32 %v2526, %v2599
    %v2601 = vpop.f32.mrb[0].mxu0
    %2602 = vdwg.mxu0
    %2603 = vmatprep.subr.mxu0 0.0
    %v2604 = vand.u32 %v529, 4294901760
    %2605 = vmatpush1.msra.mxu0 %v2604
    %2606 = vmatprep.subr.mxu0 0.0
    %2607 = vmatpush1.msra.mxu0 0.0
    %2608 = vmatprep.subr.mxu0 0.0
    %2609 = vmatpush1.msra.mxu0 0.0
    %2610 = vmatprep.subr.mxu0 0.0
    %2611 = vmatpush1.msra.mxu0 0.0
    %2612 = vmatprep.subr.mxu0 0.0
    %2613 = vmatpush1.msra.mxu0 0.0
    %2614 = vmatprep.subr.mxu0 0.0
    %2615 = vmatpush1.msra.mxu0 0.0
    %2616 = vmatprep.subr.mxu0 0.0
    %2617 = vmatpush1.msra.mxu0 0.0
    %2618 = vmatprep.subr.mxu0 0.0
    %2619 = vmatpush1.msra.mxu0 0.0
    %2620 = vmatprep.subr.mxu0 0.0
    %2621 = vmatpush1.msra.mxu0 0.0
    %2622 = vmatprep.subr.mxu0 0.0
    %2623 = vmatpush1.msra.mxu0 0.0
    %2624 = vmatprep.subr.mxu0 0.0
    %2625 = vmatpush1.msra.mxu0 0.0
    %2626 = vmatprep.subr.mxu0 0.0
    %2627 = vmatpush1.msra.mxu0 0.0
    %2628 = vmatprep.subr.mxu0 0.0
    %2629 = vmatpush1.msra.mxu0 0.0
    %2630 = vmatprep.subr.mxu0 0.0
    %2631 = vmatpush1.msra.mxu0 0.0
    %2632 = vmatprep.subr.mxu0 0.0
    %2633 = vmatpush1.msra.mxu0 0.0
    %2634 = vmatprep.subr.mxu0 0.0
    %2635 = vmatpush1.msra.mxu0 0.0
    %2636 = vmatprep.subr.mxu0 0.0
    %2637 = vmatpush1.msra.mxu0 0.0
    %2638 = vmatprep.subr.mxu0 0.0
    %2639 = vmatpush1.msra.mxu0 0.0
    %2640 = vmatprep.subr.mxu0 0.0
    %2641 = vmatpush1.msra.mxu0 0.0
    %2642 = vmatprep.subr.mxu0 0.0
    %2643 = vmatpush1.msra.mxu0 0.0
    %2644 = vmatprep.subr.mxu0 0.0
    %2645 = vmatpush1.msra.mxu0 0.0
    %2646 = vmatprep.subr.mxu0 0.0
    %2647 = vmatpush1.msra.mxu0 0.0
    %2648 = vmatprep.subr.mxu0 0.0
    %2649 = vmatpush1.msra.mxu0 0.0
    %2650 = vmatprep.subr.mxu0 0.0
    %2651 = vmatpush1.msra.mxu0 0.0
    %2652 = vmatprep.subr.mxu0 0.0
    %2653 = vmatpush1.msra.mxu0 0.0
    %2654 = vmatprep.subr.mxu0 0.0
    %2655 = vmatpush1.msra.mxu0 0.0
    %2656 = vmatprep.subr.mxu0 0.0
    %2657 = vmatpush1.msra.mxu0 0.0
    %2658 = vmatprep.subr.mxu0 0.0
    %2659 = vmatpush1.msra.mxu0 0.0
    %2660 = vmatprep.subr.mxu0 0.0
    %2661 = vmatpush1.msra.mxu0 0.0
    %2662 = vmatprep.subr.mxu0 0.0
    %2663 = vmatpush1.msra.mxu0 0.0
    %2664 = vmatprep.subr.mxu0 0.0
    %2665 = vmatpush1.msra.mxu0 0.0
    %2666 = vmatprep.subr.mxu0 0.0
    %2667 = vmatpush1.msra.mxu0 0.0
    %2668 = vmatprep.mubr.f32.mxu0 0.0
    %v2669 = vand.u32 %v2375, 4294901760
    %v2670 = vsub.f32 %v2375, %v2669
    %v2671 = vand.u32 %v2670, 4294901760
    %2672 = vmatmul.mubr.f32.gmra.mrb[0].mxu0 %v2671
    %v2673 = vpop.f32.mrb[0].mxu0
    %v2674 = vadd.f32 %v2600, %v2673
    %v2675 = vpop.f32.mrb[0].mxu0
    %2676 = vdwg.mxu0
    %2677 = vmatprep.subr.mxu0 0.0
    %v2678 = vand.u32 %v529, 4294901760
    %v2679 = vsub.f32 %v529, %v2678
    %v2680 = vand.u32 %v2679, 4294901760
    %2681 = vmatpush1.msra.mxu0 %v2680
    %2682 = vmatprep.subr.mxu0 0.0
    %2683 = vmatpush1.msra.mxu0 0.0
    %2684 = vmatprep.subr.mxu0 0.0
    %2685 = vmatpush1.msra.mxu0 0.0
    %2686 = vmatprep.subr.mxu0 0.0
    %2687 = vmatpush1.msra.mxu0 0.0
    %2688 = vmatprep.subr.mxu0 0.0
    %2689 = vmatpush1.msra.mxu0 0.0
    %2690 = vmatprep.subr.mxu0 0.0
    %2691 = vmatpush1.msra.mxu0 0.0
    %2692 = vmatprep.subr.mxu0 0.0
    %2693 = vmatpush1.msra.mxu0 0.0
    %2694 = vmatprep.subr.mxu0 0.0
    %2695 = vmatpush1.msra.mxu0 0.0
    %2696 = vmatprep.subr.mxu0 0.0
    %2697 = vmatpush1.msra.mxu0 0.0
    %2698 = vmatprep.subr.mxu0 0.0
    %2699 = vmatpush1.msra.mxu0 0.0
    %2700 = vmatprep.subr.mxu0 0.0
    %2701 = vmatpush1.msra.mxu0 0.0
    %2702 = vmatprep.subr.mxu0 0.0
    %2703 = vmatpush1.msra.mxu0 0.0
    %2704 = vmatprep.subr.mxu0 0.0
    %2705 = vmatpush1.msra.mxu0 0.0
    %2706 = vmatprep.subr.mxu0 0.0
    %2707 = vmatpush1.msra.mxu0 0.0
    %2708 = vmatprep.subr.mxu0 0.0
    %2709 = vmatpush1.msra.mxu0 0.0
    %2710 = vmatprep.subr.mxu0 0.0
    %2711 = vmatpush1.msra.mxu0 0.0
    %2712 = vmatprep.subr.mxu0 0.0
    %2713 = vmatpush1.msra.mxu0 0.0
    %2714 = vmatprep.subr.mxu0 0.0
    %2715 = vmatpush1.msra.mxu0 0.0
    %2716 = vmatprep.subr.mxu0 0.0
    %2717 = vmatpush1.msra.mxu0 0.0
    %2718 = vmatprep.subr.mxu0 0.0
    %2719 = vmatpush1.msra.mxu0 0.0
    %2720 = vmatprep.subr.mxu0 0.0
    %2721 = vmatpush1.msra.mxu0 0.0
    %2722 = vmatprep.subr.mxu0 0.0
    %2723 = vmatpush1.msra.mxu0 0.0
    %2724 = vmatprep.subr.mxu0 0.0
    %2725 = vmatpush1.msra.mxu0 0.0
    %2726 = vmatprep.subr.mxu0 0.0
    %2727 = vmatpush1.msra.mxu0 0.0
    %2728 = vmatprep.subr.mxu0 0.0
    %2729 = vmatpush1.msra.mxu0 0.0
    %2730 = vmatprep.subr.mxu0 0.0
    %2731 = vmatpush1.msra.mxu0 0.0
    %2732 = vmatprep.subr.mxu0 0.0
    %2733 = vmatpush1.msra.mxu0 0.0
    %2734 = vmatprep.subr.mxu0 0.0
    %2735 = vmatpush1.msra.mxu0 0.0
    %2736 = vmatprep.subr.mxu0 0.0
    %2737 = vmatpush1.msra.mxu0 0.0
    %2738 = vmatprep.subr.mxu0 0.0
    %2739 = vmatpush1.msra.mxu0 0.0
    %2740 = vmatprep.subr.mxu0 0.0
    %2741 = vmatpush1.msra.mxu0 0.0
    %2742 = vmatprep.subr.mxu0 0.0
    %2743 = vmatpush1.msra.mxu0 0.0
    %2744 = vmatprep.mubr.f32.mxu0 0.0
    %v2745 = vand.u32 %v2375, 4294901760
    %2746 = vmatmul.mubr.f32.gmra.mrb[0].mxu0 %v2745
    %v2747 = vpop.f32.mrb[0].mxu0
    %v2748 = vadd.f32 %v2674, %v2747
    %v2749 = vpop.f32.mrb[0].mxu0
    %2750 = vdwg.mxu0
    %2751 = vmatprep.subr.mxu0 0.0
    %v2752 = vand.u32 %v529, 4294901760
    %2753 = vmatpush1.msra.mxu0 %v2752
    %2754 = vmatprep.subr.mxu0 0.0
    %2755 = vmatpush1.msra.mxu0 0.0
    %2756 = vmatprep.subr.mxu0 0.0
    %2757 = vmatpush1.msra.mxu0 0.0
    %2758 = vmatprep.subr.mxu0 0.0
    %2759 = vmatpush1.msra.mxu0 0.0
    %2760 = vmatprep.subr.mxu0 0.0
    %2761 = vmatpush1.msra.mxu0 0.0
    %2762 = vmatprep.subr.mxu0 0.0
    %2763 = vmatpush1.msra.mxu0 0.0
    %2764 = vmatprep.subr.mxu0 0.0
    %2765 = vmatpush1.msra.mxu0 0.0
    %2766 = vmatprep.subr.mxu0 0.0
    %2767 = vmatpush1.msra.mxu0 0.0
    %2768 = vmatprep.subr.mxu0 0.0
    %2769 = vmatpush1.msra.mxu0 0.0
    %2770 = vmatprep.subr.mxu0 0.0
    %2771 = vmatpush1.msra.mxu0 0.0
    %2772 = vmatprep.subr.mxu0 0.0
    %2773 = vmatpush1.msra.mxu0 0.0
    %2774 = vmatprep.subr.mxu0 0.0
    %2775 = vmatpush1.msra.mxu0 0.0
    %2776 = vmatprep.subr.mxu0 0.0
    %2777 = vmatpush1.msra.mxu0 0.0
    %2778 = vmatprep.subr.mxu0 0.0
    %2779 = vmatpush1.msra.mxu0 0.0
    %2780 = vmatprep.subr.mxu0 0.0
    %2781 = vmatpush1.msra.mxu0 0.0
    %2782 = vmatprep.subr.mxu0 0.0
    %2783 = vmatpush1.msra.mxu0 0.0
    %2784 = vmatprep.subr.mxu0 0.0
    %2785 = vmatpush1.msra.mxu0 0.0
    %2786 = vmatprep.subr.mxu0 0.0
    %2787 = vmatpush1.msra.mxu0 0.0
    %2788 = vmatprep.subr.mxu0 0.0
    %2789 = vmatpush1.msra.mxu0 0.0
    %2790 = vmatprep.subr.mxu0 0.0
    %2791 = vmatpush1.msra.mxu0 0.0
    %2792 = vmatprep.subr.mxu0 0.0
    %2793 = vmatpush1.msra.mxu0 0.0
    %2794 = vmatprep.subr.mxu0 0.0
    %2795 = vmatpush1.msra.mxu0 0.0
    %2796 = vmatprep.subr.mxu0 0.0
    %2797 = vmatpush1.msra.mxu0 0.0
    %2798 = vmatprep.subr.mxu0 0.0
    %2799 = vmatpush1.msra.mxu0 0.0
    %2800 = vmatprep.subr.mxu0 0.0
    %2801 = vmatpush1.msra.mxu0 0.0
    %2802 = vmatprep.subr.mxu0 0.0
    %2803 = vmatpush1.msra.mxu0 0.0
    %2804 = vmatprep.subr.mxu0 0.0
    %2805 = vmatpush1.msra.mxu0 0.0
    %2806 = vmatprep.subr.mxu0 0.0
    %2807 = vmatpush1.msra.mxu0 0.0
    %2808 = vmatprep.subr.mxu0 0.0
    %2809 = vmatpush1.msra.mxu0 0.0
    %2810 = vmatprep.subr.mxu0 0.0
    %2811 = vmatpush1.msra.mxu0 0.0
    %2812 = vmatprep.subr.mxu0 0.0
    %2813 = vmatpush1.msra.mxu0 0.0
    %2814 = vmatprep.subr.mxu0 0.0
    %2815 = vmatpush1.msra.mxu0 0.0
    %2816 = vmatprep.mubr.f32.mxu0 0.0
    %v2817 = vand.u32 %v2375, 4294901760
    %2818 = vmatmul.mubr.f32.gmra.mrb[0].mxu0 %v2817
    %v2819 = vpop.f32.mrb[0].mxu0
    %v2820 = vadd.f32 %v2748, %v2819
    %v2821 = vpop.f32.mrb[0].mxu0
    %2822 = vdwg.mxu0
    %v2823 = vmul.f32 %v2365, %v977
    %v2824 = vadd.f32 %v2823, %v2820
    %v2825 = vld [vmem:[#allocation3 + $0x4] sm:$0x1]
    %v2826 = vadd.f32 %v2824, %v2825
    %2827 = vst.msk [vmem:[#allocation2 + $0x4] sm:$0x1] %vm982, %v2826
    %v2828 = vadd.f32 %v2826, %v56
    %v2829 = vxor.u32 %v2828, 2147483648
    %v2830 = vmul.f32 %v2829, 1.442695
    %v2831 = vpow.pop %v2830
    %v2832 = vadd.f32 %v2831, 1.0
    %v2833 = vrcp.pop %v2832
    %v2834 = vmul.f32 1.0, %v2833
    %v2836 = vsel %vm62, %v2834, 0
    %2838 = vmatprep.subr.mxu0 0.0
    %v2839 = vand.u32 %v529, 4294901760
    %2840 = vmatpush1.msra.mxu0 %v2839
    %2841 = vmatprep.subr.mxu0 0.0
    %2842 = vmatpush1.msra.mxu0 0.0
    %2843 = vmatprep.subr.mxu0 0.0
    %2844 = vmatpush1.msra.mxu0 0.0
    %2845 = vmatprep.subr.mxu0 0.0
    %2846 = vmatpush1.msra.mxu0 0.0
    %2847 = vmatprep.subr.mxu0 0.0
    %2848 = vmatpush1.msra.mxu0 0.0
    %2849 = vmatprep.subr.mxu0 0.0
    %2850 = vmatpush1.msra.mxu0 0.0
    %2851 = vmatprep.subr.mxu0 0.0
    %2852 = vmatpush1.msra.mxu0 0.0
    %2853 = vmatprep.subr.mxu0 0.0
    %2854 = vmatpush1.msra.mxu0 0.0
    %2855 = vmatprep.subr.mxu0 0.0
    %2856 = vmatpush1.msra.mxu0 0.0
    %2857 = vmatprep.subr.mxu0 0.0
    %2858 = vmatpush1.msra.mxu0 0.0
    %2859 = vmatprep.subr.mxu0 0.0
    %2860 = vmatpush1.msra.mxu0 0.0
    %2861 = vmatprep.subr.mxu0 0.0
    %2862 = vmatpush1.msra.mxu0 0.0
    %2863 = vmatprep.subr.mxu0 0.0
    %2864 = vmatpush1.msra.mxu0 0.0
    %2865 = vmatprep.subr.mxu0 0.0
    %2866 = vmatpush1.msra.mxu0 0.0
    %2867 = vmatprep.subr.mxu0 0.0
    %2868 = vmatpush1.msra.mxu0 0.0
    %2869 = vmatprep.subr.mxu0 0.0
    %2870 = vmatpush1.msra.mxu0 0.0
    %2871 = vmatprep.subr.mxu0 0.0
    %2872 = vmatpush1.msra.mxu0 0.0
    %2873 = vmatprep.subr.mxu0 0.0
    %2874 = vmatpush1.msra.mxu0 0.0
    %2875 = vmatprep.subr.mxu0 0.0
    %2876 = vmatpush1.msra.mxu0 0.0
    %2877 = vmatprep.subr.mxu0 0.0
    %2878 = vmatpush1.msra.mxu0 0.0
    %2879 = vmatprep.subr.mxu0 0.0
    %2880 = vmatpush1.msra.mxu0 0.0
    %2881 = vmatprep.subr.mxu0 0.0
    %2882 = vmatpush1.msra.mxu0 0.0
    %2883 = vmatprep.subr.mxu0 0.0
    %2884 = vmatpush1.msra.mxu0 0.0
    %2885 = vmatprep.subr.mxu0 0.0
    %2886 = vmatpush1.msra.mxu0 0.0
    %2887 = vmatprep.subr.mxu0 0.0
    %2888 = vmatpush1.msra.mxu0 0.0
    %2889 = vmatprep.subr.mxu0 0.0
    %2890 = vmatpush1.msra.mxu0 0.0
    %2891 = vmatprep.subr.mxu0 0.0
    %2892 = vmatpush1.msra.mxu0 0.0
    %2893 = vmatprep.subr.mxu0 0.0
    %2894 = vmatpush1.msra.mxu0 0.0
    %2895 = vmatprep.subr.mxu0 0.0
    %2896 = vmatpush1.msra.mxu0 0.0
    %2897 = vmatprep.subr.mxu0 0.0
    %2898 = vmatpush1.msra.mxu0 0.0
    %2899 = vmatprep.subr.mxu0 0.0
    %2900 = vmatpush1.msra.mxu0 0.0
    %2901 = vmatprep.subr.mxu0 0.0
    %2902 = vmatpush1.msra.mxu0 0.0
    %2903 = vmatprep.mubr.f32.mxu0 0.0
    %v2904 = vand.u32 %v2836, 4294901760
    %v2905 = vsub.f32 %v2836, %v2904
    %v2906 = vand.u32 %v2905, 4294901760
    %v2907 = vsub.f32 %v2905, %v2906
    %v2908 = vand.u32 %v2907, 4294901760
    %2909 = vmatmul.mubr.f32.gmra.mrb[0].mxu0 %v2908
    %v2910 = vpop.f32.mrb[0].mxu0
    %v2911 = vadd.f32 0.0, %v2910
    %v2912 = vpop.f32.mrb[0].mxu0
    %2913 = vdwg.mxu0
    %2914 = vmatprep.subr.mxu0 0.0
    %v2915 = vand.u32 %v529, 4294901760
    %v2916 = vsub.f32 %v529, %v2915
    %v2917 = vand.u32 %v2916, 4294901760
    %v2918 = vsub.f32 %v2916, %v2917
    %v2919 = vand.u32 %v2918, 4294901760
    %2920 = vmatpush1.msra.mxu0 %v2919
    %2921 = vmatprep.subr.mxu0 0.0
    %2922 = vmatpush1.msra.mxu0 0.0
    %2923 = vmatprep.subr.mxu0 0.0
    %2924 = vmatpush1.msra.mxu0 0.0
    %2925 = vmatprep.subr.mxu0 0.0
    %2926 = vmatpush1.msra.mxu0 0.0
    %2927 = vmatprep.subr.mxu0 0.0
    %2928 = vmatpush1.msra.mxu0 0.0
    %2929 = vmatprep.subr.mxu0 0.0
    %2930 = vmatpush1.msra.mxu0 0.0
    %2931 = vmatprep.subr.mxu0 0.0
    %2932 = vmatpush1.msra.mxu0 0.0
    %2933 = vmatprep.subr.mxu0 0.0
    %2934 = vmatpush1.msra.mxu0 0.0
    %2935 = vmatprep.subr.mxu0 0.0
    %2936 = vmatpush1.msra.mxu0 0.0
    %2937 = vmatprep.subr.mxu0 0.0
    %2938 = vmatpush1.msra.mxu0 0.0
    %2939 = vmatprep.subr.mxu0 0.0
    %2940 = vmatpush1.msra.mxu0 0.0
    %2941 = vmatprep.subr.mxu0 0.0
    %2942 = vmatpush1.msra.mxu0 0.0
    %2943 = vmatprep.subr.mxu0 0.0
    %2944 = vmatpush1.msra.mxu0 0.0
    %2945 = vmatprep.subr.mxu0 0.0
    %2946 = vmatpush1.msra.mxu0 0.0
    %2947 = vmatprep.subr.mxu0 0.0
    %2948 = vmatpush1.msra.mxu0 0.0
    %2949 = vmatprep.subr.mxu0 0.0
    %2950 = vmatpush1.msra.mxu0 0.0
    %2951 = vmatprep.subr.mxu0 0.0
    %2952 = vmatpush1.msra.mxu0 0.0
    %2953 = vmatprep.subr.mxu0 0.0
    %2954 = vmatpush1.msra.mxu0 0.0
    %2955 = vmatprep.subr.mxu0 0.0
    %2956 = vmatpush1.msra.mxu0 0.0
    %2957 = vmatprep.subr.mxu0 0.0
    %2958 = vmatpush1.msra.mxu0 0.0
    %2959 = vmatprep.subr.mxu0 0.0
    %2960 = vmatpush1.msra.mxu0 0.0
    %2961 = vmatprep.subr.mxu0 0.0
    %2962 = vmatpush1.msra.mxu0 0.0
    %2963 = vmatprep.subr.mxu0 0.0
    %2964 = vmatpush1.msra.mxu0 0.0
    %2965 = vmatprep.subr.mxu0 0.0
    %2966 = vmatpush1.msra.mxu0 0.0
    %2967 = vmatprep.subr.mxu0 0.0
    %2968 = vmatpush1.msra.mxu0 0.0
    %2969 = vmatprep.subr.mxu0 0.0
    %2970 = vmatpush1.msra.mxu0 0.0
    %2971 = vmatprep.subr.mxu0 0.0
    %2972 = vmatpush1.msra.mxu0 0.0
    %2973 = vmatprep.subr.mxu0 0.0
    %2974 = vmatpush1.msra.mxu0 0.0
    %2975 = vmatprep.subr.mxu0 0.0
    %2976 = vmatpush1.msra.mxu0 0.0
    %2977 = vmatprep.subr.mxu0 0.0
    %2978 = vmatpush1.msra.mxu0 0.0
    %2979 = vmatprep.subr.mxu0 0.0
    %2980 = vmatpush1.msra.mxu0 0.0
    %2981 = vmatprep.subr.mxu0 0.0
    %2982 = vmatpush1.msra.mxu0 0.0
    %2983 = vmatprep.mubr.f32.mxu0 0.0
    %v2984 = vand.u32 %v2836, 4294901760
    %2985 = vmatmul.mubr.f32.gmra.mrb[0].mxu0 %v2984
    %v2986 = vpop.f32.mrb[0].mxu0
    %v2987 = vadd.f32 %v2911, %v2986
    %v2988 = vpop.f32.mrb[0].mxu0
    %2989 = vdwg.mxu0
    %2990 = vmatprep.subr.mxu0 0.0
    %v2991 = vand.u32 %v529, 4294901760
    %v2992 = vsub.f32 %v529, %v2991
    %2993 = vmatpush1.msra.mxu0 %v2992
    %2994 = vmatprep.subr.mxu0 0.0
    %2995 = vmatpush1.msra.mxu0 0.0
    %2996 = vmatprep.subr.mxu0 0.0
    %2997 = vmatpush1.msra.mxu0 0.0
    %2998 = vmatprep.subr.mxu0 0.0
    %2999 = vmatpush1.msra.mxu0 0.0
    %3000 = vmatprep.subr.mxu0 0.0
    %3001 = vmatpush1.msra.mxu0 0.0
    %3002 = vmatprep.subr.mxu0 0.0
    %3003 = vmatpush1.msra.mxu0 0.0
    %3004 = vmatprep.subr.mxu0 0.0
    %3005 = vmatpush1.msra.mxu0 0.0
    %3006 = vmatprep.subr.mxu0 0.0
    %3007 = vmatpush1.msra.mxu0 0.0
    %3008 = vmatprep.subr.mxu0 0.0
    %3009 = vmatpush1.msra.mxu0 0.0
    %3010 = vmatprep.subr.mxu0 0.0
    %3011 = vmatpush1.msra.mxu0 0.0
    %3012 = vmatprep.subr.mxu0 0.0
    %3013 = vmatpush1.msra.mxu0 0.0
    %3014 = vmatprep.subr.mxu0 0.0
    %3015 = vmatpush1.msra.mxu0 0.0
    %3016 = vmatprep.subr.mxu0 0.0
    %3017 = vmatpush1.msra.mxu0 0.0
    %3018 = vmatprep.subr.mxu0 0.0
    %3019 = vmatpush1.msra.mxu0 0.0
    %3020 = vmatprep.subr.mxu0 0.0
    %3021 = vmatpush1.msra.mxu0 0.0
    %3022 = vmatprep.subr.mxu0 0.0
    %3023 = vmatpush1.msra.mxu0 0.0
    %3024 = vmatprep.subr.mxu0 0.0
    %3025 = vmatpush1.msra.mxu0 0.0
    %3026 = vmatprep.subr.mxu0 0.0
    %3027 = vmatpush1.msra.mxu0 0.0
    %3028 = vmatprep.subr.mxu0 0.0
    %3029 = vmatpush1.msra.mxu0 0.0
    %3030 = vmatprep.subr.mxu0 0.0
    %3031 = vmatpush1.msra.mxu0 0.0
    %3032 = vmatprep.subr.mxu0 0.0
    %3033 = vmatpush1.msra.mxu0 0.0
    %3034 = vmatprep.subr.mxu0 0.0
    %3035 = vmatpush1.msra.mxu0 0.0
    %3036 = vmatprep.subr.mxu0 0.0
    %3037 = vmatpush1.msra.mxu0 0.0
    %3038 = vmatprep.subr.mxu0 0.0
    %3039 = vmatpush1.msra.mxu0 0.0
    %3040 = vmatprep.subr.mxu0 0.0
    %3041 = vmatpush1.msra.mxu0 0.0
    %3042 = vmatprep.subr.mxu0 0.0
    %3043 = vmatpush1.msra.mxu0 0.0
    %3044 = vmatprep.subr.mxu0 0.0
    %3045 = vmatpush1.msra.mxu0 0.0
    %3046 = vmatprep.subr.mxu0 0.0
    %3047 = vmatpush1.msra.mxu0 0.0
    %3048 = vmatprep.subr.mxu0 0.0
    %3049 = vmatpush1.msra.mxu0 0.0
    %3050 = vmatprep.subr.mxu0 0.0
    %3051 = vmatpush1.msra.mxu0 0.0
    %3052 = vmatprep.subr.mxu0 0.0
    %3053 = vmatpush1.msra.mxu0 0.0
    %3054 = vmatprep.subr.mxu0 0.0
    %3055 = vmatpush1.msra.mxu0 0.0
    %3056 = vmatprep.mubr.f32.mxu0 0.0
    %v3057 = vand.u32 %v2836, 4294901760
    %v3058 = vsub.f32 %v2836, %v3057
    %3059 = vmatmul.mubr.f32.gmra.mrb[0].mxu0 %v3058
    %v3060 = vpop.f32.mrb[0].mxu0
    %v3061 = vadd.f32 %v2987, %v3060
    %v3062 = vpop.f32.mrb[0].mxu0
    %3063 = vdwg.mxu0
    %3064 = vmatprep.subr.mxu0 0.0
    %v3065 = vand.u32 %v529, 4294901760
    %3066 = vmatpush1.msra.mxu0 %v3065
    %3067 = vmatprep.subr.mxu0 0.0
    %3068 = vmatpush1.msra.mxu0 0.0
    %3069 = vmatprep.subr.mxu0 0.0
    %3070 = vmatpush1.msra.mxu0 0.0
    %3071 = vmatprep.subr.mxu0 0.0
    %3072 = vmatpush1.msra.mxu0 0.0
    %3073 = vmatprep.subr.mxu0 0.0
    %3074 = vmatpush1.msra.mxu0 0.0
    %3075 = vmatprep.subr.mxu0 0.0
    %3076 = vmatpush1.msra.mxu0 0.0
    %3077 = vmatprep.subr.mxu0 0.0
    %3078 = vmatpush1.msra.mxu0 0.0
    %3079 = vmatprep.subr.mxu0 0.0
    %3080 = vmatpush1.msra.mxu0 0.0
    %3081 = vmatprep.subr.mxu0 0.0
    %3082 = vmatpush1.msra.mxu0 0.0
    %3083 = vmatprep.subr.mxu0 0.0
    %3084 = vmatpush1.msra.mxu0 0.0
    %3085 = vmatprep.subr.mxu0 0.0
    %3086 = vmatpush1.msra.mxu0 0.0
    %3087 = vmatprep.subr.mxu0 0.0
    %3088 = vmatpush1.msra.mxu0 0.0
    %3089 = vmatprep.subr.mxu0 0.0
    %3090 = vmatpush1.msra.mxu0 0.0
    %3091 = vmatprep.subr.mxu0 0.0
    %3092 = vmatpush1.msra.mxu0 0.0
    %3093 = vmatprep.subr.mxu0 0.0
    %3094 = vmatpush1.msra.mxu0 0.0
    %3095 = vmatprep.subr.mxu0 0.0
    %3096 = vmatpush1.msra.mxu0 0.0
    %3097 = vmatprep.subr.mxu0 0.0
    %3098 = vmatpush1.msra.mxu0 0.0
    %3099 = vmatprep.subr.mxu0 0.0
    %3100 = vmatpush1.msra.mxu0 0.0
    %3101 = vmatprep.subr.mxu0 0.0
    %3102 = vmatpush1.msra.mxu0 0.0
    %3103 = vmatprep.subr.mxu0 0.0
    %3104 = vmatpush1.msra.mxu0 0.0
    %3105 = vmatprep.subr.mxu0 0.0
    %3106 = vmatpush1.msra.mxu0 0.0
    %3107 = vmatprep.subr.mxu0 0.0
    %3108 = vmatpush1.msra.mxu0 0.0
    %3109 = vmatprep.subr.mxu0 0.0
    %3110 = vmatpush1.msra.mxu0 0.0
    %3111 = vmatprep.subr.mxu0 0.0
    %3112 = vmatpush1.msra.mxu0 0.0
    %3113 = vmatprep.subr.mxu0 0.0
    %3114 = vmatpush1.msra.mxu0 0.0
    %3115 = vmatprep.subr.mxu0 0.0
    %3116 = vmatpush1.msra.mxu0 0.0
    %3117 = vmatprep.subr.mxu0 0.0
    %3118 = vmatpush1.msra.mxu0 0.0
    %3119 = vmatprep.subr.mxu0 0.0
    %3120 = vmatpush1.msra.mxu0 0.0
    %3121 = vmatprep.subr.mxu0 0.0
    %3122 = vmatpush1.msra.mxu0 0.0
    %3123 = vmatprep.subr.mxu0 0.0
    %3124 = vmatpush1.msra.mxu0 0.0
    %3125 = vmatprep.subr.mxu0 0.0
    %3126 = vmatpush1.msra.mxu0 0.0
    %3127 = vmatprep.subr.mxu0 0.0
    %3128 = vmatpush1.msra.mxu0 0.0
    %3129 = vmatprep.mubr.f32.mxu0 0.0
    %v3130 = vand.u32 %v2836, 4294901760
    %v3131 = vsub.f32 %v2836, %v3130
    %v3132 = vand.u32 %v3131, 4294901760
    %3133 = vmatmul.mubr.f32.gmra.mrb[0].mxu0 %v3132
    %v3134 = vpop.f32.mrb[0].mxu0
    %v3135 = vadd.f32 %v3061, %v3134
    %v3136 = vpop.f32.mrb[0].mxu0
    %3137 = vdwg.mxu0
    %3138 = vmatprep.subr.mxu0 0.0
    %v3139 = vand.u32 %v529, 4294901760
    %v3140 = vsub.f32 %v529, %v3139
    %v3141 = vand.u32 %v3140, 4294901760
    %3142 = vmatpush1.msra.mxu0 %v3141
    %3143 = vmatprep.subr.mxu0 0.0
    %3144 = vmatpush1.msra.mxu0 0.0
    %3145 = vmatprep.subr.mxu0 0.0
    %3146 = vmatpush1.msra.mxu0 0.0
    %3147 = vmatprep.subr.mxu0 0.0
    %3148 = vmatpush1.msra.mxu0 0.0
    %3149 = vmatprep.subr.mxu0 0.0
    %3150 = vmatpush1.msra.mxu0 0.0
    %3151 = vmatprep.subr.mxu0 0.0
    %3152 = vmatpush1.msra.mxu0 0.0
    %3153 = vmatprep.subr.mxu0 0.0
    %3154 = vmatpush1.msra.mxu0 0.0
    %3155 = vmatprep.subr.mxu0 0.0
    %3156 = vmatpush1.msra.mxu0 0.0
    %3157 = vmatprep.subr.mxu0 0.0
    %3158 = vmatpush1.msra.mxu0 0.0
    %3159 = vmatprep.subr.mxu0 0.0
    %3160 = vmatpush1.msra.mxu0 0.0
    %3161 = vmatprep.subr.mxu0 0.0
    %3162 = vmatpush1.msra.mxu0 0.0
    %3163 = vmatprep.subr.mxu0 0.0
    %3164 = vmatpush1.msra.mxu0 0.0
    %3165 = vmatprep.subr.mxu0 0.0
    %3166 = vmatpush1.msra.mxu0 0.0
    %3167 = vmatprep.subr.mxu0 0.0
    %3168 = vmatpush1.msra.mxu0 0.0
    %3169 = vmatprep.subr.mxu0 0.0
    %3170 = vmatpush1.msra.mxu0 0.0
    %3171 = vmatprep.subr.mxu0 0.0
    %3172 = vmatpush1.msra.mxu0 0.0
    %3173 = vmatprep.subr.mxu0 0.0
    %3174 = vmatpush1.msra.mxu0 0.0
    %3175 = vmatprep.subr.mxu0 0.0
    %3176 = vmatpush1.msra.mxu0 0.0
    %3177 = vmatprep.subr.mxu0 0.0
    %3178 = vmatpush1.msra.mxu0 0.0
    %3179 = vmatprep.subr.mxu0 0.0
    %3180 = vmatpush1.msra.mxu0 0.0
    %3181 = vmatprep.subr.mxu0 0.0
    %3182 = vmatpush1.msra.mxu0 0.0
    %3183 = vmatprep.subr.mxu0 0.0
    %3184 = vmatpush1.msra.mxu0 0.0
    %3185 = vmatprep.subr.mxu0 0.0
    %3186 = vmatpush1.msra.mxu0 0.0
    %3187 = vmatprep.subr.mxu0 0.0
    %3188 = vmatpush1.msra.mxu0 0.0
    %3189 = vmatprep.subr.mxu0 0.0
    %3190 = vmatpush1.msra.mxu0 0.0
    %3191 = vmatprep.subr.mxu0 0.0
    %3192 = vmatpush1.msra.mxu0 0.0
    %3193 = vmatprep.subr.mxu0 0.0
    %3194 = vmatpush1.msra.mxu0 0.0
    %3195 = vmatprep.subr.mxu0 0.0
    %3196 = vmatpush1.msra.mxu0 0.0
    %3197 = vmatprep.subr.mxu0 0.0
    %3198 = vmatpush1.msra.mxu0 0.0
    %3199 = vmatprep.subr.mxu0 0.0
    %3200 = vmatpush1.msra.mxu0 0.0
    %3201 = vmatprep.subr.mxu0 0.0
    %3202 = vmatpush1.msra.mxu0 0.0
    %3203 = vmatprep.subr.mxu0 0.0
    %3204 = vmatpush1.msra.mxu0 0.0
    %3205 = vmatprep.mubr.f32.mxu0 0.0
    %v3206 = vand.u32 %v2836, 4294901760
    %3207 = vmatmul.mubr.f32.gmra.mrb[0].mxu0 %v3206
    %v3208 = vpop.f32.mrb[0].mxu0
    %v3209 = vadd.f32 %v3135, %v3208
    %v3210 = vpop.f32.mrb[0].mxu0
    %3211 = vdwg.mxu0
    %3212 = vmatprep.subr.mxu0 0.0
    %v3213 = vand.u32 %v529, 4294901760
    %3214 = vmatpush1.msra.mxu0 %v3213
    %3215 = vmatprep.subr.mxu0 0.0
    %3216 = vmatpush1.msra.mxu0 0.0
    %3217 = vmatprep.subr.mxu0 0.0
    %3218 = vmatpush1.msra.mxu0 0.0
    %3219 = vmatprep.subr.mxu0 0.0
    %3220 = vmatpush1.msra.mxu0 0.0
    %3221 = vmatprep.subr.mxu0 0.0
    %3222 = vmatpush1.msra.mxu0 0.0
    %3223 = vmatprep.subr.mxu0 0.0
    %3224 = vmatpush1.msra.mxu0 0.0
    %3225 = vmatprep.subr.mxu0 0.0
    %3226 = vmatpush1.msra.mxu0 0.0
    %3227 = vmatprep.subr.mxu0 0.0
    %3228 = vmatpush1.msra.mxu0 0.0
    %3229 = vmatprep.subr.mxu0 0.0
    %3230 = vmatpush1.msra.mxu0 0.0
    %3231 = vmatprep.subr.mxu0 0.0
    %3232 = vmatpush1.msra.mxu0 0.0
    %3233 = vmatprep.subr.mxu0 0.0
    %3234 = vmatpush1.msra.mxu0 0.0
    %3235 = vmatprep.subr.mxu0 0.0
    %3236 = vmatpush1.msra.mxu0 0.0
    %3237 = vmatprep.subr.mxu0 0.0
    %3238 = vmatpush1.msra.mxu0 0.0
    %3239 = vmatprep.subr.mxu0 0.0
    %3240 = vmatpush1.msra.mxu0 0.0
    %3241 = vmatprep.subr.mxu0 0.0
    %3242 = vmatpush1.msra.mxu0 0.0
    %3243 = vmatprep.subr.mxu0 0.0
    %3244 = vmatpush1.msra.mxu0 0.0
    %3245 = vmatprep.subr.mxu0 0.0
    %3246 = vmatpush1.msra.mxu0 0.0
    %3247 = vmatprep.subr.mxu0 0.0
    %3248 = vmatpush1.msra.mxu0 0.0
    %3249 = vmatprep.subr.mxu0 0.0
    %3250 = vmatpush1.msra.mxu0 0.0
    %3251 = vmatprep.subr.mxu0 0.0
    %3252 = vmatpush1.msra.mxu0 0.0
    %3253 = vmatprep.subr.mxu0 0.0
    %3254 = vmatpush1.msra.mxu0 0.0
    %3255 = vmatprep.subr.mxu0 0.0
    %3256 = vmatpush1.msra.mxu0 0.0
    %3257 = vmatprep.subr.mxu0 0.0
    %3258 = vmatpush1.msra.mxu0 0.0
    %3259 = vmatprep.subr.mxu0 0.0
    %3260 = vmatpush1.msra.mxu0 0.0
    %3261 = vmatprep.subr.mxu0 0.0
    %3262 = vmatpush1.msra.mxu0 0.0
    %3263 = vmatprep.subr.mxu0 0.0
    %3264 = vmatpush1.msra.mxu0 0.0
    %3265 = vmatprep.subr.mxu0 0.0
    %3266 = vmatpush1.msra.mxu0 0.0
    %3267 = vmatprep.subr.mxu0 0.0
    %3268 = vmatpush1.msra.mxu0 0.0
    %3269 = vmatprep.subr.mxu0 0.0
    %3270 = vmatpush1.msra.mxu0 0.0
    %3271 = vmatprep.subr.mxu0 0.0
    %3272 = vmatpush1.msra.mxu0 0.0
    %3273 = vmatprep.subr.mxu0 0.0
    %3274 = vmatpush1.msra.mxu0 0.0
    %3275 = vmatprep.subr.mxu0 0.0
    %3276 = vmatpush1.msra.mxu0 0.0
    %3277 = vmatprep.mubr.f32.mxu0 0.0
    %v3278 = vand.u32 %v2836, 4294901760
    %3279 = vmatmul.mubr.f32.gmra.mrb[0].mxu0 %v3278
    %v3280 = vpop.f32.mrb[0].mxu0
    %v3281 = vadd.f32 %v3209, %v3280
    %v3282 = vpop.f32.mrb[0].mxu0
    %3283 = vdwg.mxu0
    %v3284 = vmul.f32 %v2826, %v977
    %v3285 = vadd.f32 %v3284, %v3281
    %v3286 = vld [vmem:[#allocation3 + $0x5] sm:$0x1]
    %v3287 = vadd.f32 %v3285, %v3286
    %3288 = vst.msk [vmem:[#allocation2 + $0x5] sm:$0x1] %vm982, %v3287
    %v3289 = vadd.f32 %v3287, %v56
    %v3290 = vxor.u32 %v3289, 2147483648
    %v3291 = vmul.f32 %v3290, 1.442695
    %v3292 = vpow.pop %v3291
    %v3293 = vadd.f32 %v3292, 1.0
    %v3294 = vrcp.pop %v3293
    %v3295 = vmul.f32 1.0, %v3294
    %v3297 = vsel %vm62, %v3295, 0
    %3299 = vmatprep.subr.mxu0 0.0
    %v3300 = vand.u32 %v529, 4294901760
    %3301 = vmatpush1.msra.mxu0 %v3300
    %3302 = vmatprep.subr.mxu0 0.0
    %3303 = vmatpush1.msra.mxu0 0.0
    %3304 = vmatprep.subr.mxu0 0.0
    %3305 = vmatpush1.msra.mxu0 0.0
    %3306 = vmatprep.subr.mxu0 0.0
    %3307 = vmatpush1.msra.mxu0 0.0
    %3308 = vmatprep.subr.mxu0 0.0
    %3309 = vmatpush1.msra.mxu0 0.0
    %3310 = vmatprep.subr.mxu0 0.0
    %3311 = vmatpush1.msra.mxu0 0.0
    %3312 = vmatprep.subr.mxu0 0.0
    %3313 = vmatpush1.msra.mxu0 0.0
    %3314 = vmatprep.subr.mxu0 0.0
    %3315 = vmatpush1.msra.mxu0 0.0
    %3316 = vmatprep.subr.mxu0 0.0
    %3317 = vmatpush1.msra.mxu0 0.0
    %3318 = vmatprep.subr.mxu0 0.0
    %3319 = vmatpush1.msra.mxu0 0.0
    %3320 = vmatprep.subr.mxu0 0.0
    %3321 = vmatpush1.msra.mxu0 0.0
    %3322 = vmatprep.subr.mxu0 0.0
    %3323 = vmatpush1.msra.mxu0 0.0
    %3324 = vmatprep.subr.mxu0 0.0
    %3325 = vmatpush1.msra.mxu0 0.0
    %3326 = vmatprep.subr.mxu0 0.0
    %3327 = vmatpush1.msra.mxu0 0.0
    %3328 = vmatprep.subr.mxu0 0.0
    %3329 = vmatpush1.msra.mxu0 0.0
    %3330 = vmatprep.subr.mxu0 0.0
    %3331 = vmatpush1.msra.mxu0 0.0
    %3332 = vmatprep.subr.mxu0 0.0
    %3333 = vmatpush1.msra.mxu0 0.0
    %3334 = vmatprep.subr.mxu0 0.0
    %3335 = vmatpush1.msra.mxu0 0.0
    %3336 = vmatprep.subr.mxu0 0.0
    %3337 = vmatpush1.msra.mxu0 0.0
    %3338 = vmatprep.subr.mxu0 0.0
    %3339 = vmatpush1.msra.mxu0 0.0
    %3340 = vmatprep.subr.mxu0 0.0
    %3341 = vmatpush1.msra.mxu0 0.0
    %3342 = vmatprep.subr.mxu0 0.0
    %3343 = vmatpush1.msra.mxu0 0.0
    %3344 = vmatprep.subr.mxu0 0.0
    %3345 = vmatpush1.msra.mxu0 0.0
    %3346 = vmatprep.subr.mxu0 0.0
    %3347 = vmatpush1.msra.mxu0 0.0
    %3348 = vmatprep.subr.mxu0 0.0
    %3349 = vmatpush1.msra.mxu0 0.0
    %3350 = vmatprep.subr.mxu0 0.0
    %3351 = vmatpush1.msra.mxu0 0.0
    %3352 = vmatprep.subr.mxu0 0.0
    %3353 = vmatpush1.msra.mxu0 0.0
    %3354 = vmatprep.subr.mxu0 0.0
    %3355 = vmatpush1.msra.mxu0 0.0
    %3356 = vmatprep.subr.mxu0 0.0
    %3357 = vmatpush1.msra.mxu0 0.0
    %3358 = vmatprep.subr.mxu0 0.0
    %3359 = vmatpush1.msra.mxu0 0.0
    %3360 = vmatprep.subr.mxu0 0.0
    %3361 = vmatpush1.msra.mxu0 0.0
    %3362 = vmatprep.subr.mxu0 0.0
    %3363 = vmatpush1.msra.mxu0 0.0
    %3364 = vmatprep.mubr.f32.mxu0 0.0
    %v3365 = vand.u32 %v3297, 4294901760
    %v3366 = vsub.f32 %v3297, %v3365
    %v3367 = vand.u32 %v3366, 4294901760
    %v3368 = vsub.f32 %v3366, %v3367
    %v3369 = vand.u32 %v3368, 4294901760
    %3370 = vmatmul.mubr.f32.gmra.mrb[0].mxu0 %v3369
    %v3371 = vpop.f32.mrb[0].mxu0
    %v3372 = vadd.f32 0.0, %v3371
    %v3373 = vpop.f32.mrb[0].mxu0
    %3374 = vdwg.mxu0
    %3375 = vmatprep.subr.mxu0 0.0
    %v3376 = vand.u32 %v529, 4294901760
    %v3377 = vsub.f32 %v529, %v3376
    %v3378 = vand.u32 %v3377, 4294901760
    %v3379 = vsub.f32 %v3377, %v3378
    %v3380 = vand.u32 %v3379, 4294901760
    %3381 = vmatpush1.msra.mxu0 %v3380
    %3382 = vmatprep.subr.mxu0 0.0
    %3383 = vmatpush1.msra.mxu0 0.0
    %3384 = vmatprep.subr.mxu0 0.0
    %3385 = vmatpush1.msra.mxu0 0.0
    %3386 = vmatprep.subr.mxu0 0.0
    %3387 = vmatpush1.msra.mxu0 0.0
    %3388 = vmatprep.subr.mxu0 0.0
    %3389 = vmatpush1.msra.mxu0 0.0
    %3390 = vmatprep.subr.mxu0 0.0
    %3391 = vmatpush1.msra.mxu0 0.0
    %3392 = vmatprep.subr.mxu0 0.0
    %3393 = vmatpush1.msra.mxu0 0.0
    %3394 = vmatprep.subr.mxu0 0.0
    %3395 = vmatpush1.msra.mxu0 0.0
    %3396 = vmatprep.subr.mxu0 0.0
    %3397 = vmatpush1.msra.mxu0 0.0
    %3398 = vmatprep.subr.mxu0 0.0
    %3399 = vmatpush1.msra.mxu0 0.0
    %3400 = vmatprep.subr.mxu0 0.0
    %3401 = vmatpush1.msra.mxu0 0.0
    %3402 = vmatprep.subr.mxu0 0.0
    %3403 = vmatpush1.msra.mxu0 0.0
    %3404 = vmatprep.subr.mxu0 0.0
    %3405 = vmatpush1.msra.mxu0 0.0
    %3406 = vmatprep.subr.mxu0 0.0
    %3407 = vmatpush1.msra.mxu0 0.0
    %3408 = vmatprep.subr.mxu0 0.0
    %3409 = vmatpush1.msra.mxu0 0.0
    %3410 = vmatprep.subr.mxu0 0.0
    %3411 = vmatpush1.msra.mxu0 0.0
    %3412 = vmatprep.subr.mxu0 0.0
    %3413 = vmatpush1.msra.mxu0 0.0
    %3414 = vmatprep.subr.mxu0 0.0
    %3415 = vmatpush1.msra.mxu0 0.0
    %3416 = vmatprep.subr.mxu0 0.0
    %3417 = vmatpush1.msra.mxu0 0.0
    %3418 = vmatprep.subr.mxu0 0.0
    %3419 = vmatpush1.msra.mxu0 0.0
    %3420 = vmatprep.subr.mxu0 0.0
    %3421 = vmatpush1.msra.mxu0 0.0
    %3422 = vmatprep.subr.mxu0 0.0
    %3423 = vmatpush1.msra.mxu0 0.0
    %3424 = vmatprep.subr.mxu0 0.0
    %3425 = vmatpush1.msra.mxu0 0.0
    %3426 = vmatprep.subr.mxu0 0.0
    %3427 = vmatpush1.msra.mxu0 0.0
    %3428 = vmatprep.subr.mxu0 0.0
    %3429 = vmatpush1.msra.mxu0 0.0
    %3430 = vmatprep.subr.mxu0 0.0
    %3431 = vmatpush1.msra.mxu0 0.0
    %3432 = vmatprep.subr.mxu0 0.0
    %3433 = vmatpush1.msra.mxu0 0.0
    %3434 = vmatprep.subr.mxu0 0.0
    %3435 = vmatpush1.msra.mxu0 0.0
    %3436 = vmatprep.subr.mxu0 0.0
    %3437 = vmatpush1.msra.mxu0 0.0
    %3438 = vmatprep.subr.mxu0 0.0
    %3439 = vmatpush1.msra.mxu0 0.0
    %3440 = vmatprep.subr.mxu0 0.0
    %3441 = vmatpush1.msra.mxu0 0.0
    %3442 = vmatprep.subr.mxu0 0.0
    %3443 = vmatpush1.msra.mxu0 0.0
    %3444 = vmatprep.mubr.f32.mxu0 0.0
    %v3445 = vand.u32 %v3297, 4294901760
    %3446 = vmatmul.mubr.f32.gmra.mrb[0].mxu0 %v3445
    %v3447 = vpop.f32.mrb[0].mxu0
    %v3448 = vadd.f32 %v3372, %v3447
    %v3449 = vpop.f32.mrb[0].mxu0
    %3450 = vdwg.mxu0
    %3451 = vmatprep.subr.mxu0 0.0
    %v3452 = vand.u32 %v529, 4294901760
    %v3453 = vsub.f32 %v529, %v3452
    %3454 = vmatpush1.msra.mxu0 %v3453
    %3455 = vmatprep.subr.mxu0 0.0
    %3456 = vmatpush1.msra.mxu0 0.0
    %3457 = vmatprep.subr.mxu0 0.0
    %3458 = vmatpush1.msra.mxu0 0.0
    %3459 = vmatprep.subr.mxu0 0.0
    %3460 = vmatpush1.msra.mxu0 0.0
    %3461 = vmatprep.subr.mxu0 0.0
    %3462 = vmatpush1.msra.mxu0 0.0
    %3463 = vmatprep.subr.mxu0 0.0
    %3464 = vmatpush1.msra.mxu0 0.0
    %3465 = vmatprep.subr.mxu0 0.0
    %3466 = vmatpush1.msra.mxu0 0.0
    %3467 = vmatprep.subr.mxu0 0.0
    %3468 = vmatpush1.msra.mxu0 0.0
    %3469 = vmatprep.subr.mxu0 0.0
    %3470 = vmatpush1.msra.mxu0 0.0
    %3471 = vmatprep.subr.mxu0 0.0
    %3472 = vmatpush1.msra.mxu0 0.0
    %3473 = vmatprep.subr.mxu0 0.0
    %3474 = vmatpush1.msra.mxu0 0.0
    %3475 = vmatprep.subr.mxu0 0.0
    %3476 = vmatpush1.msra.mxu0 0.0
    %3477 = vmatprep.subr.mxu0 0.0
    %3478 = vmatpush1.msra.mxu0 0.0
    %3479 = vmatprep.subr.mxu0 0.0
    %3480 = vmatpush1.msra.mxu0 0.0
    %3481 = vmatprep.subr.mxu0 0.0
    %3482 = vmatpush1.msra.mxu0 0.0
    %3483 = vmatprep.subr.mxu0 0.0
    %3484 = vmatpush1.msra.mxu0 0.0
    %3485 = vmatprep.subr.mxu0 0.0
    %3486 = vmatpush1.msra.mxu0 0.0
    %3487 = vmatprep.subr.mxu0 0.0
    %3488 = vmatpush1.msra.mxu0 0.0
    %3489 = vmatprep.subr.mxu0 0.0
    %3490 = vmatpush1.msra.mxu0 0.0
    %3491 = vmatprep.subr.mxu0 0.0
    %3492 = vmatpush1.msra.mxu0 0.0
    %3493 = vmatprep.subr.mxu0 0.0
    %3494 = vmatpush1.msra.mxu0 0.0
    %3495 = vmatprep.subr.mxu0 0.0
    %3496 = vmatpush1.msra.mxu0 0.0
    %3497 = vmatprep.subr.mxu0 0.0
    %3498 = vmatpush1.msra.mxu0 0.0
    %3499 = vmatprep.subr.mxu0 0.0
    %3500 = vmatpush1.msra.mxu0 0.0
    %3501 = vmatprep.subr.mxu0 0.0
    %3502 = vmatpush1.msra.mxu0 0.0
    %3503 = vmatprep.subr.mxu0 0.0
    %3504 = vmatpush1.msra.mxu0 0.0
    %3505 = vmatprep.subr.mxu0 0.0
    %3506 = vmatpush1.msra.mxu0 0.0
    %3507 = vmatprep.subr.mxu0 0.0
    %3508 = vmatpush1.msra.mxu0 0.0
    %3509 = vmatprep.subr.mxu0 0.0
    %3510 = vmatpush1.msra.mxu0 0.0
    %3511 = vmatprep.subr.mxu0 0.0
    %3512 = vmatpush1.msra.mxu0 0.0
    %3513 = vmatprep.subr.mxu0 0.0
    %3514 = vmatpush1.msra.mxu0 0.0
    %3515 = vmatprep.subr.mxu0 0.0
    %3516 = vmatpush1.msra.mxu0 0.0
    %3517 = vmatprep.mubr.f32.mxu0 0.0
    %v3518 = vand.u32 %v3297, 4294901760
    %v3519 = vsub.f32 %v3297, %v3518
    %3520 = vmatmul.mubr.f32.gmra.mrb[0].mxu0 %v3519
    %v3521 = vpop.f32.mrb[0].mxu0
    %v3522 = vadd.f32 %v3448, %v3521
    %v3523 = vpop.f32.mrb[0].mxu0
    %3524 = vdwg.mxu0
    %3525 = vmatprep.subr.mxu0 0.0
    %v3526 = vand.u32 %v529, 4294901760
    %3527 = vmatpush1.msra.mxu0 %v3526
    %3528 = vmatprep.subr.mxu0 0.0
    %3529 = vmatpush1.msra.mxu0 0.0
    %3530 = vmatprep.subr.mxu0 0.0
    %3531 = vmatpush1.msra.mxu0 0.0
    %3532 = vmatprep.subr.mxu0 0.0
    %3533 = vmatpush1.msra.mxu0 0.0
    %3534 = vmatprep.subr.mxu0 0.0
    %3535 = vmatpush1.msra.mxu0 0.0
    %3536 = vmatprep.subr.mxu0 0.0
    %3537 = vmatpush1.msra.mxu0 0.0
    %3538 = vmatprep.subr.mxu0 0.0
    %3539 = vmatpush1.msra.mxu0 0.0
    %3540 = vmatprep.subr.mxu0 0.0
    %3541 = vmatpush1.msra.mxu0 0.0
    %3542 = vmatprep.subr.mxu0 0.0
    %3543 = vmatpush1.msra.mxu0 0.0
    %3544 = vmatprep.subr.mxu0 0.0
    %3545 = vmatpush1.msra.mxu0 0.0
    %3546 = vmatprep.subr.mxu0 0.0
    %3547 = vmatpush1.msra.mxu0 0.0
    %3548 = vmatprep.subr.mxu0 0.0
    %3549 = vmatpush1.msra.mxu0 0.0
    %3550 = vmatprep.subr.mxu0 0.0
    %3551 = vmatpush1.msra.mxu0 0.0
    %3552 = vmatprep.subr.mxu0 0.0
    %3553 = vmatpush1.msra.mxu0 0.0
    %3554 = vmatprep.subr.mxu0 0.0
    %3555 = vmatpush1.msra.mxu0 0.0
    %3556 = vmatprep.subr.mxu0 0.0
    %3557 = vmatpush1.msra.mxu0 0.0
    %3558 = vmatprep.subr.mxu0 0.0
    %3559 = vmatpush1.msra.mxu0 0.0
    %3560 = vmatprep.subr.mxu0 0.0
    %3561 = vmatpush1.msra.mxu0 0.0
    %3562 = vmatprep.subr.mxu0 0.0
    %3563 = vmatpush1.msra.mxu0 0.0
    %3564 = vmatprep.subr.mxu0 0.0
    %3565 = vmatpush1.msra.mxu0 0.0
    %3566 = vmatprep.subr.mxu0 0.0
    %3567 = vmatpush1.msra.mxu0 0.0
    %3568 = vmatprep.subr.mxu0 0.0
    %3569 = vmatpush1.msra.mxu0 0.0
    %3570 = vmatprep.subr.mxu0 0.0
    %3571 = vmatpush1.msra.mxu0 0.0
    %3572 = vmatprep.subr.mxu0 0.0
    %3573 = vmatpush1.msra.mxu0 0.0
    %3574 = vmatprep.subr.mxu0 0.0
    %3575 = vmatpush1.msra.mxu0 0.0
    %3576 = vmatprep.subr.mxu0 0.0
    %3577 = vmatpush1.msra.mxu0 0.0
    %3578 = vmatprep.subr.mxu0 0.0
    %3579 = vmatpush1.msra.mxu0 0.0
    %3580 = vmatprep.subr.mxu0 0.0
    %3581 = vmatpush1.msra.mxu0 0.0
    %3582 = vmatprep.subr.mxu0 0.0
    %3583 = vmatpush1.msra.mxu0 0.0
    %3584 = vmatprep.subr.mxu0 0.0
    %3585 = vmatpush1.msra.mxu0 0.0
    %3586 = vmatprep.subr.mxu0 0.0
    %3587 = vmatpush1.msra.mxu0 0.0
    %3588 = vmatprep.subr.mxu0 0.0
    %3589 = vmatpush1.msra.mxu0 0.0
    %3590 = vmatprep.mubr.f32.mxu0 0.0
    %v3591 = vand.u32 %v3297, 4294901760
    %v3592 = vsub.f32 %v3297, %v3591
    %v3593 = vand.u32 %v3592, 4294901760
    %3594 = vmatmul.mubr.f32.gmra.mrb[0].mxu0 %v3593
    %v3595 = vpop.f32.mrb[0].mxu0
    %v3596 = vadd.f32 %v3522, %v3595
    %v3597 = vpop.f32.mrb[0].mxu0
    %3598 = vdwg.mxu0
    %3599 = vmatprep.subr.mxu0 0.0
    %v3600 = vand.u32 %v529, 4294901760
    %v3601 = vsub.f32 %v529, %v3600
    %v3602 = vand.u32 %v3601, 4294901760
    %3603 = vmatpush1.msra.mxu0 %v3602
    %3604 = vmatprep.subr.mxu0 0.0
    %3605 = vmatpush1.msra.mxu0 0.0
    %3606 = vmatprep.subr.mxu0 0.0
    %3607 = vmatpush1.msra.mxu0 0.0
    %3608 = vmatprep.subr.mxu0 0.0
    %3609 = vmatpush1.msra.mxu0 0.0
    %3610 = vmatprep.subr.mxu0 0.0
    %3611 = vmatpush1.msra.mxu0 0.0
    %3612 = vmatprep.subr.mxu0 0.0
    %3613 = vmatpush1.msra.mxu0 0.0
    %3614 = vmatprep.subr.mxu0 0.0
    %3615 = vmatpush1.msra.mxu0 0.0
    %3616 = vmatprep.subr.mxu0 0.0
    %3617 = vmatpush1.msra.mxu0 0.0
    %3618 = vmatprep.subr.mxu0 0.0
    %3619 = vmatpush1.msra.mxu0 0.0
    %3620 = vmatprep.subr.mxu0 0.0
    %3621 = vmatpush1.msra.mxu0 0.0
    %3622 = vmatprep.subr.mxu0 0.0
    %3623 = vmatpush1.msra.mxu0 0.0
    %3624 = vmatprep.subr.mxu0 0.0
    %3625 = vmatpush1.msra.mxu0 0.0
    %3626 = vmatprep.subr.mxu0 0.0
    %3627 = vmatpush1.msra.mxu0 0.0
    %3628 = vmatprep.subr.mxu0 0.0
    %3629 = vmatpush1.msra.mxu0 0.0
    %3630 = vmatprep.subr.mxu0 0.0
    %3631 = vmatpush1.msra.mxu0 0.0
    %3632 = vmatprep.subr.mxu0 0.0
    %3633 = vmatpush1.msra.mxu0 0.0
    %3634 = vmatprep.subr.mxu0 0.0
    %3635 = vmatpush1.msra.mxu0 0.0
    %3636 = vmatprep.subr.mxu0 0.0
    %3637 = vmatpush1.msra.mxu0 0.0
    %3638 = vmatprep.subr.mxu0 0.0
    %3639 = vmatpush1.msra.mxu0 0.0
    %3640 = vmatprep.subr.mxu0 0.0
    %3641 = vmatpush1.msra.mxu0 0.0
    %3642 = vmatprep.subr.mxu0 0.0
    %3643 = vmatpush1.msra.mxu0 0.0
    %3644 = vmatprep.subr.mxu0 0.0
    %3645 = vmatpush1.msra.mxu0 0.0
    %3646 = vmatprep.subr.mxu0 0.0
    %3647 = vmatpush1.msra.mxu0 0.0
    %3648 = vmatprep.subr.mxu0 0.0
    %3649 = vmatpush1.msra.mxu0 0.0
    %3650 = vmatprep.subr.mxu0 0.0
    %3651 = vmatpush1.msra.mxu0 0.0
    %3652 = vmatprep.subr.mxu0 0.0
    %3653 = vmatpush1.msra.mxu0 0.0
    %3654 = vmatprep.subr.mxu0 0.0
    %3655 = vmatpush1.msra.mxu0 0.0
    %3656 = vmatprep.subr.mxu0 0.0
    %3657 = vmatpush1.msra.mxu0 0.0
    %3658 = vmatprep.subr.mxu0 0.0
    %3659 = vmatpush1.msra.mxu0 0.0
    %3660 = vmatprep.subr.mxu0 0.0
    %3661 = vmatpush1.msra.mxu0 0.0
    %3662 = vmatprep.subr.mxu0 0.0
    %3663 = vmatpush1.msra.mxu0 0.0
    %3664 = vmatprep.subr.mxu0 0.0
    %3665 = vmatpush1.msra.mxu0 0.0
    %3666 = vmatprep.mubr.f32.mxu0 0.0
    %v3667 = vand.u32 %v3297, 4294901760
    %3668 = vmatmul.mubr.f32.gmra.mrb[0].mxu0 %v3667
    %v3669 = vpop.f32.mrb[0].mxu0
    %v3670 = vadd.f32 %v3596, %v3669
    %v3671 = vpop.f32.mrb[0].mxu0
    %3672 = vdwg.mxu0
    %3673 = vmatprep.subr.mxu0 0.0
    %v3674 = vand.u32 %v529, 4294901760
    %3675 = vmatpush1.msra.mxu0 %v3674
    %3676 = vmatprep.subr.mxu0 0.0
    %3677 = vmatpush1.msra.mxu0 0.0
    %3678 = vmatprep.subr.mxu0 0.0
    %3679 = vmatpush1.msra.mxu0 0.0
    %3680 = vmatprep.subr.mxu0 0.0
    %3681 = vmatpush1.msra.mxu0 0.0
    %3682 = vmatprep.subr.mxu0 0.0
    %3683 = vmatpush1.msra.mxu0 0.0
    %3684 = vmatprep.subr.mxu0 0.0
    %3685 = vmatpush1.msra.mxu0 0.0
    %3686 = vmatprep.subr.mxu0 0.0
    %3687 = vmatpush1.msra.mxu0 0.0
    %3688 = vmatprep.subr.mxu0 0.0
    %3689 = vmatpush1.msra.mxu0 0.0
    %3690 = vmatprep.subr.mxu0 0.0
    %3691 = vmatpush1.msra.mxu0 0.0
    %3692 = vmatprep.subr.mxu0 0.0
    %3693 = vmatpush1.msra.mxu0 0.0
    %3694 = vmatprep.subr.mxu0 0.0
    %3695 = vmatpush1.msra.mxu0 0.0
    %3696 = vmatprep.subr.mxu0 0.0
    %3697 = vmatpush1.msra.mxu0 0.0
    %3698 = vmatprep.subr.mxu0 0.0
    %3699 = vmatpush1.msra.mxu0 0.0
    %3700 = vmatprep.subr.mxu0 0.0
    %3701 = vmatpush1.msra.mxu0 0.0
    %3702 = vmatprep.subr.mxu0 0.0
    %3703 = vmatpush1.msra.mxu0 0.0
    %3704 = vmatprep.subr.mxu0 0.0
    %3705 = vmatpush1.msra.mxu0 0.0
    %3706 = vmatprep.subr.mxu0 0.0
    %3707 = vmatpush1.msra.mxu0 0.0
    %3708 = vmatprep.subr.mxu0 0.0
    %3709 = vmatpush1.msra.mxu0 0.0
    %3710 = vmatprep.subr.mxu0 0.0
    %3711 = vmatpush1.msra.mxu0 0.0
    %3712 = vmatprep.subr.mxu0 0.0
    %3713 = vmatpush1.msra.mxu0 0.0
    %3714 = vmatprep.subr.mxu0 0.0
    %3715 = vmatpush1.msra.mxu0 0.0
    %3716 = vmatprep.subr.mxu0 0.0
    %3717 = vmatpush1.msra.mxu0 0.0
    %3718 = vmatprep.subr.mxu0 0.0
    %3719 = vmatpush1.msra.mxu0 0.0
    %3720 = vmatprep.subr.mxu0 0.0
    %3721 = vmatpush1.msra.mxu0 0.0
    %3722 = vmatprep.subr.mxu0 0.0
    %3723 = vmatpush1.msra.mxu0 0.0
    %3724 = vmatprep.subr.mxu0 0.0
    %3725 = vmatpush1.msra.mxu0 0.0
    %3726 = vmatprep.subr.mxu0 0.0
    %3727 = vmatpush1.msra.mxu0 0.0
    %3728 = vmatprep.subr.mxu0 0.0
    %3729 = vmatpush1.msra.mxu0 0.0
    %3730 = vmatprep.subr.mxu0 0.0
    %3731 = vmatpush1.msra.mxu0 0.0
    %3732 = vmatprep.subr.mxu0 0.0
    %3733 = vmatpush1.msra.mxu0 0.0
    %3734 = vmatprep.subr.mxu0 0.0
    %3735 = vmatpush1.msra.mxu0 0.0
    %3736 = vmatprep.subr.mxu0 0.0
    %3737 = vmatpush1.msra.mxu0 0.0
    %3738 = vmatprep.mubr.f32.mxu0 0.0
    %v3739 = vand.u32 %v3297, 4294901760
    %3740 = vmatmul.mubr.f32.gmra.mrb[0].mxu0 %v3739
    %v3741 = vpop.f32.mrb[0].mxu0
    %v3742 = vadd.f32 %v3670, %v3741
    %v3743 = vpop.f32.mrb[0].mxu0
    %3744 = vdwg.mxu0
    %v3745 = vmul.f32 %v3287, %v977
    %v3746 = vadd.f32 %v3745, %v3742
    %v3747 = vld [vmem:[#allocation3 + $0x6] sm:$0x1]
    %v3748 = vadd.f32 %v3746, %v3747
    %3749 = vst.msk [vmem:[#allocation2 + $0x6] sm:$0x1] %vm982, %v3748
    %v3750 = vadd.f32 %v3748, %v56
    %v3751 = vxor.u32 %v3750, 2147483648
    %v3752 = vmul.f32 %v3751, 1.442695
    %v3753 = vpow.pop %v3752
    %v3754 = vadd.f32 %v3753, 1.0
    %v3755 = vrcp.pop %v3754
    %v3756 = vmul.f32 1.0, %v3755
    %v3758 = vsel %vm62, %v3756, 0
    %3760 = vmatprep.subr.mxu0 0.0
    %v3761 = vand.u32 %v529, 4294901760
    %3762 = vmatpush1.msra.mxu0 %v3761
    %3763 = vmatprep.subr.mxu0 0.0
    %3764 = vmatpush1.msra.mxu0 0.0
    %3765 = vmatprep.subr.mxu0 0.0
    %3766 = vmatpush1.msra.mxu0 0.0
    %3767 = vmatprep.subr.mxu0 0.0
    %3768 = vmatpush1.msra.mxu0 0.0
    %3769 = vmatprep.subr.mxu0 0.0
    %3770 = vmatpush1.msra.mxu0 0.0
    %3771 = vmatprep.subr.mxu0 0.0
    %3772 = vmatpush1.msra.mxu0 0.0
    %3773 = vmatprep.subr.mxu0 0.0
    %3774 = vmatpush1.msra.mxu0 0.0
    %3775 = vmatprep.subr.mxu0 0.0
    %3776 = vmatpush1.msra.mxu0 0.0
    %3777 = vmatprep.subr.mxu0 0.0
    %3778 = vmatpush1.msra.mxu0 0.0
    %3779 = vmatprep.subr.mxu0 0.0
    %3780 = vmatpush1.msra.mxu0 0.0
    %3781 = vmatprep.subr.mxu0 0.0
    %3782 = vmatpush1.msra.mxu0 0.0
    %3783 = vmatprep.subr.mxu0 0.0
    %3784 = vmatpush1.msra.mxu0 0.0
    %3785 = vmatprep.subr.mxu0 0.0
    %3786 = vmatpush1.msra.mxu0 0.0
    %3787 = vmatprep.subr.mxu0 0.0
    %3788 = vmatpush1.msra.mxu0 0.0
    %3789 = vmatprep.subr.mxu0 0.0
    %3790 = vmatpush1.msra.mxu0 0.0
    %3791 = vmatprep.subr.mxu0 0.0
    %3792 = vmatpush1.msra.mxu0 0.0
    %3793 = vmatprep.subr.mxu0 0.0
    %3794 = vmatpush1.msra.mxu0 0.0
    %3795 = vmatprep.subr.mxu0 0.0
    %3796 = vmatpush1.msra.mxu0 0.0
    %3797 = vmatprep.subr.mxu0 0.0
    %3798 = vmatpush1.msra.mxu0 0.0
    %3799 = vmatprep.subr.mxu0 0.0
    %3800 = vmatpush1.msra.mxu0 0.0
    %3801 = vmatprep.subr.mxu0 0.0
    %3802 = vmatpush1.msra.mxu0 0.0
    %3803 = vmatprep.subr.mxu0 0.0
    %3804 = vmatpush1.msra.mxu0 0.0
    %3805 = vmatprep.subr.mxu0 0.0
    %3806 = vmatpush1.msra.mxu0 0.0
    %3807 = vmatprep.subr.mxu0 0.0
    %3808 = vmatpush1.msra.mxu0 0.0
    %3809 = vmatprep.subr.mxu0 0.0
    %3810 = vmatpush1.msra.mxu0 0.0
    %3811 = vmatprep.subr.mxu0 0.0
    %3812 = vmatpush1.msra.mxu0 0.0
    %3813 = vmatprep.subr.mxu0 0.0
    %3814 = vmatpush1.msra.mxu0 0.0
    %3815 = vmatprep.subr.mxu0 0.0
    %3816 = vmatpush1.msra.mxu0 0.0
    %3817 = vmatprep.subr.mxu0 0.0
    %3818 = vmatpush1.msra.mxu0 0.0
    %3819 = vmatprep.subr.mxu0 0.0
    %3820 = vmatpush1.msra.mxu0 0.0
    %3821 = vmatprep.subr.mxu0 0.0
    %3822 = vmatpush1.msra.mxu0 0.0
    %3823 = vmatprep.subr.mxu0 0.0
    %3824 = vmatpush1.msra.mxu0 0.0
    %3825 = vmatprep.mubr.f32.mxu0 0.0
    %v3826 = vand.u32 %v3758, 4294901760
    %v3827 = vsub.f32 %v3758, %v3826
    %v3828 = vand.u32 %v3827, 4294901760
    %v3829 = vsub.f32 %v3827, %v3828
    %v3830 = vand.u32 %v3829, 4294901760
    %3831 = vmatmul.mubr.f32.gmra.mrb[0].mxu0 %v3830
    %v3832 = vpop.f32.mrb[0].mxu0
    %v3833 = vadd.f32 0.0, %v3832
    %v3834 = vpop.f32.mrb[0].mxu0
    %3835 = vdwg.mxu0
    %3836 = vmatprep.subr.mxu0 0.0
    %v3837 = vand.u32 %v529, 4294901760
    %v3838 = vsub.f32 %v529, %v3837
    %v3839 = vand.u32 %v3838, 4294901760
    %v3840 = vsub.f32 %v3838, %v3839
    %v3841 = vand.u32 %v3840, 4294901760
    %3842 = vmatpush1.msra.mxu0 %v3841
    %3843 = vmatprep.subr.mxu0 0.0
    %3844 = vmatpush1.msra.mxu0 0.0
    %3845 = vmatprep.subr.mxu0 0.0
    %3846 = vmatpush1.msra.mxu0 0.0
    %3847 = vmatprep.subr.mxu0 0.0
    %3848 = vmatpush1.msra.mxu0 0.0
    %3849 = vmatprep.subr.mxu0 0.0
    %3850 = vmatpush1.msra.mxu0 0.0
    %3851 = vmatprep.subr.mxu0 0.0
    %3852 = vmatpush1.msra.mxu0 0.0
    %3853 = vmatprep.subr.mxu0 0.0
    %3854 = vmatpush1.msra.mxu0 0.0
    %3855 = vmatprep.subr.mxu0 0.0
    %3856 = vmatpush1.msra.mxu0 0.0
    %3857 = vmatprep.subr.mxu0 0.0
    %3858 = vmatpush1.msra.mxu0 0.0
    %3859 = vmatprep.subr.mxu0 0.0
    %3860 = vmatpush1.msra.mxu0 0.0
    %3861 = vmatprep.subr.mxu0 0.0
    %3862 = vmatpush1.msra.mxu0 0.0
    %3863 = vmatprep.subr.mxu0 0.0
    %3864 = vmatpush1.msra.mxu0 0.0
    %3865 = vmatprep.subr.mxu0 0.0
    %3866 = vmatpush1.msra.mxu0 0.0
    %3867 = vmatprep.subr.mxu0 0.0
    %3868 = vmatpush1.msra.mxu0 0.0
    %3869 = vmatprep.subr.mxu0 0.0
    %3870 = vmatpush1.msra.mxu0 0.0
    %3871 = vmatprep.subr.mxu0 0.0
    %3872 = vmatpush1.msra.mxu0 0.0
    %3873 = vmatprep.subr.mxu0 0.0
    %3874 = vmatpush1.msra.mxu0 0.0
    %3875 = vmatprep.subr.mxu0 0.0
    %3876 = vmatpush1.msra.mxu0 0.0
    %3877 = vmatprep.subr.mxu0 0.0
    %3878 = vmatpush1.msra.mxu0 0.0
    %3879 = vmatprep.subr.mxu0 0.0
    %3880 = vmatpush1.msra.mxu0 0.0
    %3881 = vmatprep.subr.mxu0 0.0
    %3882 = vmatpush1.msra.mxu0 0.0
    %3883 = vmatprep.subr.mxu0 0.0
    %3884 = vmatpush1.msra.mxu0 0.0
    %3885 = vmatprep.subr.mxu0 0.0
    %3886 = vmatpush1.msra.mxu0 0.0
    %3887 = vmatprep.subr.mxu0 0.0
    %3888 = vmatpush1.msra.mxu0 0.0
    %3889 = vmatprep.subr.mxu0 0.0
    %3890 = vmatpush1.msra.mxu0 0.0
    %3891 = vmatprep.subr.mxu0 0.0
    %3892 = vmatpush1.msra.mxu0 0.0
    %3893 = vmatprep.subr.mxu0 0.0
    %3894 = vmatpush1.msra.mxu0 0.0
    %3895 = vmatprep.subr.mxu0 0.0
    %3896 = vmatpush1.msra.mxu0 0.0
    %3897 = vmatprep.subr.mxu0 0.0
    %3898 = vmatpush1.msra.mxu0 0.0
    %3899 = vmatprep.subr.mxu0 0.0
    %3900 = vmatpush1.msra.mxu0 0.0
    %3901 = vmatprep.subr.mxu0 0.0
    %3902 = vmatpush1.msra.mxu0 0.0
    %3903 = vmatprep.subr.mxu0 0.0
    %3904 = vmatpush1.msra.mxu0 0.0
    %3905 = vmatprep.mubr.f32.mxu0 0.0
    %v3906 = vand.u32 %v3758, 4294901760
    %3907 = vmatmul.mubr.f32.gmra.mrb[0].mxu0 %v3906
    %v3908 = vpop.f32.mrb[0].mxu0
    %v3909 = vadd.f32 %v3833, %v3908
    %v3910 = vpop.f32.mrb[0].mxu0
    %3911 = vdwg.mxu0
    %3912 = vmatprep.subr.mxu0 0.0
    %v3913 = vand.u32 %v529, 4294901760
    %v3914 = vsub.f32 %v529, %v3913
    %3915 = vmatpush1.msra.mxu0 %v3914
    %3916 = vmatprep.subr.mxu0 0.0
    %3917 = vmatpush1.msra.mxu0 0.0
    %3918 = vmatprep.subr.mxu0 0.0
    %3919 = vmatpush1.msra.mxu0 0.0
    %3920 = vmatprep.subr.mxu0 0.0
    %3921 = vmatpush1.msra.mxu0 0.0
    %3922 = vmatprep.subr.mxu0 0.0
    %3923 = vmatpush1.msra.mxu0 0.0
    %3924 = vmatprep.subr.mxu0 0.0
    %3925 = vmatpush1.msra.mxu0 0.0
    %3926 = vmatprep.subr.mxu0 0.0
    %3927 = vmatpush1.msra.mxu0 0.0
    %3928 = vmatprep.subr.mxu0 0.0
    %3929 = vmatpush1.msra.mxu0 0.0
    %3930 = vmatprep.subr.mxu0 0.0
    %3931 = vmatpush1.msra.mxu0 0.0
    %3932 = vmatprep.subr.mxu0 0.0
    %3933 = vmatpush1.msra.mxu0 0.0
    %3934 = vmatprep.subr.mxu0 0.0
    %3935 = vmatpush1.msra.mxu0 0.0
    %3936 = vmatprep.subr.mxu0 0.0
    %3937 = vmatpush1.msra.mxu0 0.0
    %3938 = vmatprep.subr.mxu0 0.0
    %3939 = vmatpush1.msra.mxu0 0.0
    %3940 = vmatprep.subr.mxu0 0.0
    %3941 = vmatpush1.msra.mxu0 0.0
    %3942 = vmatprep.subr.mxu0 0.0
    %3943 = vmatpush1.msra.mxu0 0.0
    %3944 = vmatprep.subr.mxu0 0.0
    %3945 = vmatpush1.msra.mxu0 0.0
    %3946 = vmatprep.subr.mxu0 0.0
    %3947 = vmatpush1.msra.mxu0 0.0
    %3948 = vmatprep.subr.mxu0 0.0
    %3949 = vmatpush1.msra.mxu0 0.0
    %3950 = vmatprep.subr.mxu0 0.0
    %3951 = vmatpush1.msra.mxu0 0.0
    %3952 = vmatprep.subr.mxu0 0.0
    %3953 = vmatpush1.msra.mxu0 0.0
    %3954 = vmatprep.subr.mxu0 0.0
    %3955 = vmatpush1.msra.mxu0 0.0
    %3956 = vmatprep.subr.mxu0 0.0
    %3957 = vmatpush1.msra.mxu0 0.0
    %3958 = vmatprep.subr.mxu0 0.0
    %3959 = vmatpush1.msra.mxu0 0.0
    %3960 = vmatprep.subr.mxu0 0.0
    %3961 = vmatpush1.msra.mxu0 0.0
    %3962 = vmatprep.subr.mxu0 0.0
    %3963 = vmatpush1.msra.mxu0 0.0
    %3964 = vmatprep.subr.mxu0 0.0
    %3965 = vmatpush1.msra.mxu0 0.0
    %3966 = vmatprep.subr.mxu0 0.0
    %3967 = vmatpush1.msra.mxu0 0.0
    %3968 = vmatprep.subr.mxu0 0.0
    %3969 = vmatpush1.msra.mxu0 0.0
    %3970 = vmatprep.subr.mxu0 0.0
    %3971 = vmatpush1.msra.mxu0 0.0
    %3972 = vmatprep.subr.mxu0 0.0
    %3973 = vmatpush1.msra.mxu0 0.0
    %3974 = vmatprep.subr.mxu0 0.0
    %3975 = vmatpush1.msra.mxu0 0.0
    %3976 = vmatprep.subr.mxu0 0.0
    %3977 = vmatpush1.msra.mxu0 0.0
    %3978 = vmatprep.mubr.f32.mxu0 0.0
    %v3979 = vand.u32 %v3758, 4294901760
    %v3980 = vsub.f32 %v3758, %v3979
    %3981 = vmatmul.mubr.f32.gmra.mrb[0].mxu0 %v3980
    %v3982 = vpop.f32.mrb[0].mxu0
    %v3983 = vadd.f32 %v3909, %v3982
    %v3984 = vpop.f32.mrb[0].mxu0
    %3985 = vdwg.mxu0
    %3986 = vmatprep.subr.mxu0 0.0
    %v3987 = vand.u32 %v529, 4294901760
    %3988 = vmatpush1.msra.mxu0 %v3987
    %3989 = vmatprep.subr.mxu0 0.0
    %3990 = vmatpush1.msra.mxu0 0.0
    %3991 = vmatprep.subr.mxu0 0.0
    %3992 = vmatpush1.msra.mxu0 0.0
    %3993 = vmatprep.subr.mxu0 0.0
    %3994 = vmatpush1.msra.mxu0 0.0
    %3995 = vmatprep.subr.mxu0 0.0
    %3996 = vmatpush1.msra.mxu0 0.0
    %3997 = vmatprep.subr.mxu0 0.0
    %3998 = vmatpush1.msra.mxu0 0.0
    %3999 = vmatprep.subr.mxu0 0.0
    %4000 = vmatpush1.msra.mxu0 0.0
    %4001 = vmatprep.subr.mxu0 0.0
    %4002 = vmatpush1.msra.mxu0 0.0
    %4003 = vmatprep.subr.mxu0 0.0
    %4004 = vmatpush1.msra.mxu0 0.0
    %4005 = vmatprep.subr.mxu0 0.0
    %4006 = vmatpush1.msra.mxu0 0.0
    %4007 = vmatprep.subr.mxu0 0.0
    %4008 = vmatpush1.msra.mxu0 0.0
    %4009 = vmatprep.subr.mxu0 0.0
    %4010 = vmatpush1.msra.mxu0 0.0
    %4011 = vmatprep.subr.mxu0 0.0
    %4012 = vmatpush1.msra.mxu0 0.0
    %4013 = vmatprep.subr.mxu0 0.0
    %4014 = vmatpush1.msra.mxu0 0.0
    %4015 = vmatprep.subr.mxu0 0.0
    %4016 = vmatpush1.msra.mxu0 0.0
    %4017 = vmatprep.subr.mxu0 0.0
    %4018 = vmatpush1.msra.mxu0 0.0
    %4019 = vmatprep.subr.mxu0 0.0
    %4020 = vmatpush1.msra.mxu0 0.0
    %4021 = vmatprep.subr.mxu0 0.0
    %4022 = vmatpush1.msra.mxu0 0.0
    %4023 = vmatprep.subr.mxu0 0.0
    %4024 = vmatpush1.msra.mxu0 0.0
    %4025 = vmatprep.subr.mxu0 0.0
    %4026 = vmatpush1.msra.mxu0 0.0
    %4027 = vmatprep.subr.mxu0 0.0
    %4028 = vmatpush1.msra.mxu0 0.0
    %4029 = vmatprep.subr.mxu0 0.0
    %4030 = vmatpush1.msra.mxu0 0.0
    %4031 = vmatprep.subr.mxu0 0.0
    %4032 = vmatpush1.msra.mxu0 0.0
    %4033 = vmatprep.subr.mxu0 0.0
    %4034 = vmatpush1.msra.mxu0 0.0
    %4035 = vmatprep.subr.mxu0 0.0
    %4036 = vmatpush1.msra.mxu0 0.0
    %4037 = vmatprep.subr.mxu0 0.0
    %4038 = vmatpush1.msra.mxu0 0.0
    %4039 = vmatprep.subr.mxu0 0.0
    %4040 = vmatpush1.msra.mxu0 0.0
    %4041 = vmatprep.subr.mxu0 0.0
    %4042 = vmatpush1.msra.mxu0 0.0
    %4043 = vmatprep.subr.mxu0 0.0
    %4044 = vmatpush1.msra.mxu0 0.0
    %4045 = vmatprep.subr.mxu0 0.0
    %4046 = vmatpush1.msra.mxu0 0.0
    %4047 = vmatprep.subr.mxu0 0.0
    %4048 = vmatpush1.msra.mxu0 0.0
    %4049 = vmatprep.subr.mxu0 0.0
    %4050 = vmatpush1.msra.mxu0 0.0
    %4051 = vmatprep.mubr.f32.mxu0 0.0
    %v4052 = vand.u32 %v3758, 4294901760
    %v4053 = vsub.f32 %v3758, %v4052
    %v4054 = vand.u32 %v4053, 4294901760
    %4055 = vmatmul.mubr.f32.gmra.mrb[0].mxu0 %v4054
    %v4056 = vpop.f32.mrb[0].mxu0
    %v4057 = vadd.f32 %v3983, %v4056
    %v4058 = vpop.f32.mrb[0].mxu0
    %4059 = vdwg.mxu0
    %4060 = vmatprep.subr.mxu0 0.0
    %v4061 = vand.u32 %v529, 4294901760
    %v4062 = vsub.f32 %v529, %v4061
    %v4063 = vand.u32 %v4062, 4294901760
    %4064 = vmatpush1.msra.mxu0 %v4063
    %4065 = vmatprep.subr.mxu0 0.0
    %4066 = vmatpush1.msra.mxu0 0.0
    %4067 = vmatprep.subr.mxu0 0.0
    %4068 = vmatpush1.msra.mxu0 0.0
    %4069 = vmatprep.subr.mxu0 0.0
    %4070 = vmatpush1.msra.mxu0 0.0
    %4071 = vmatprep.subr.mxu0 0.0
    %4072 = vmatpush1.msra.mxu0 0.0
    %4073 = vmatprep.subr.mxu0 0.0
    %4074 = vmatpush1.msra.mxu0 0.0
    %4075 = vmatprep.subr.mxu0 0.0
    %4076 = vmatpush1.msra.mxu0 0.0
    %4077 = vmatprep.subr.mxu0 0.0
    %4078 = vmatpush1.msra.mxu0 0.0
    %4079 = vmatprep.subr.mxu0 0.0
    %4080 = vmatpush1.msra.mxu0 0.0
    %4081 = vmatprep.subr.mxu0 0.0
    %4082 = vmatpush1.msra.mxu0 0.0
    %4083 = vmatprep.subr.mxu0 0.0
    %4084 = vmatpush1.msra.mxu0 0.0
    %4085 = vmatprep.subr.mxu0 0.0
    %4086 = vmatpush1.msra.mxu0 0.0
    %4087 = vmatprep.subr.mxu0 0.0
    %4088 = vmatpush1.msra.mxu0 0.0
    %4089 = vmatprep.subr.mxu0 0.0
    %4090 = vmatpush1.msra.mxu0 0.0
    %4091 = vmatprep.subr.mxu0 0.0
    %4092 = vmatpush1.msra.mxu0 0.0
    %4093 = vmatprep.subr.mxu0 0.0
    %4094 = vmatpush1.msra.mxu0 0.0
    %4095 = vmatprep.subr.mxu0 0.0
    %4096 = vmatpush1.msra.mxu0 0.0
    %4097 = vmatprep.subr.mxu0 0.0
    %4098 = vmatpush1.msra.mxu0 0.0
    %4099 = vmatprep.subr.mxu0 0.0
    %4100 = vmatpush1.msra.mxu0 0.0
    %4101 = vmatprep.subr.mxu0 0.0
    %4102 = vmatpush1.msra.mxu0 0.0
    %4103 = vmatprep.subr.mxu0 0.0
    %4104 = vmatpush1.msra.mxu0 0.0
    %4105 = vmatprep.subr.mxu0 0.0
    %4106 = vmatpush1.msra.mxu0 0.0
    %4107 = vmatprep.subr.mxu0 0.0
    %4108 = vmatpush1.msra.mxu0 0.0
    %4109 = vmatprep.subr.mxu0 0.0
    %4110 = vmatpush1.msra.mxu0 0.0
    %4111 = vmatprep.subr.mxu0 0.0
    %4112 = vmatpush1.msra.mxu0 0.0
    %4113 = vmatprep.subr.mxu0 0.0
    %4114 = vmatpush1.msra.mxu0 0.0
    %4115 = vmatprep.subr.mxu0 0.0
    %4116 = vmatpush1.msra.mxu0 0.0
    %4117 = vmatprep.subr.mxu0 0.0
    %4118 = vmatpush1.msra.mxu0 0.0
    %4119 = vmatprep.subr.mxu0 0.0
    %4120 = vmatpush1.msra.mxu0 0.0
    %4121 = vmatprep.subr.mxu0 0.0
    %4122 = vmatpush1.msra.mxu0 0.0
    %4123 = vmatprep.subr.mxu0 0.0
    %4124 = vmatpush1.msra.mxu0 0.0
    %4125 = vmatprep.subr.mxu0 0.0
    %4126 = vmatpush1.msra.mxu0 0.0
    %4127 = vmatprep.mubr.f32.mxu0 0.0
    %v4128 = vand.u32 %v3758, 4294901760
    %4129 = vmatmul.mubr.f32.gmra.mrb[0].mxu0 %v4128
    %v4130 = vpop.f32.mrb[0].mxu0
    %v4131 = vadd.f32 %v4057, %v4130
    %v4132 = vpop.f32.mrb[0].mxu0
    %4133 = vdwg.mxu0
    %4134 = vmatprep.subr.mxu0 0.0
    %v4135 = vand.u32 %v529, 4294901760
    %4136 = vmatpush1.msra.mxu0 %v4135
    %4137 = vmatprep.subr.mxu0 0.0
    %4138 = vmatpush1.msra.mxu0 0.0
    %4139 = vmatprep.subr.mxu0 0.0
    %4140 = vmatpush1.msra.mxu0 0.0
    %4141 = vmatprep.subr.mxu0 0.0
    %4142 = vmatpush1.msra.mxu0 0.0
    %4143 = vmatprep.subr.mxu0 0.0
    %4144 = vmatpush1.msra.mxu0 0.0
    %4145 = vmatprep.subr.mxu0 0.0
    %4146 = vmatpush1.msra.mxu0 0.0
    %4147 = vmatprep.subr.mxu0 0.0
    %4148 = vmatpush1.msra.mxu0 0.0
    %4149 = vmatprep.subr.mxu0 0.0
    %4150 = vmatpush1.msra.mxu0 0.0
    %4151 = vmatprep.subr.mxu0 0.0
    %4152 = vmatpush1.msra.mxu0 0.0
    %4153 = vmatprep.subr.mxu0 0.0
    %4154 = vmatpush1.msra.mxu0 0.0
    %4155 = vmatprep.subr.mxu0 0.0
    %4156 = vmatpush1.msra.mxu0 0.0
    %4157 = vmatprep.subr.mxu0 0.0
    %4158 = vmatpush1.msra.mxu0 0.0
    %4159 = vmatprep.subr.mxu0 0.0
    %4160 = vmatpush1.msra.mxu0 0.0
    %4161 = vmatprep.subr.mxu0 0.0
    %4162 = vmatpush1.msra.mxu0 0.0
    %4163 = vmatprep.subr.mxu0 0.0
    %4164 = vmatpush1.msra.mxu0 0.0
    %4165 = vmatprep.subr.mxu0 0.0
    %4166 = vmatpush1.msra.mxu0 0.0
    %4167 = vmatprep.subr.mxu0 0.0
    %4168 = vmatpush1.msra.mxu0 0.0
    %4169 = vmatprep.subr.mxu0 0.0
    %4170 = vmatpush1.msra.mxu0 0.0
    %4171 = vmatprep.subr.mxu0 0.0
    %4172 = vmatpush1.msra.mxu0 0.0
    %4173 = vmatprep.subr.mxu0 0.0
    %4174 = vmatpush1.msra.mxu0 0.0
    %4175 = vmatprep.subr.mxu0 0.0
    %4176 = vmatpush1.msra.mxu0 0.0
    %4177 = vmatprep.subr.mxu0 0.0
    %4178 = vmatpush1.msra.mxu0 0.0
    %4179 = vmatprep.subr.mxu0 0.0
    %4180 = vmatpush1.msra.mxu0 0.0
    %4181 = vmatprep.subr.mxu0 0.0
    %4182 = vmatpush1.msra.mxu0 0.0
    %4183 = vmatprep.subr.mxu0 0.0
    %4184 = vmatpush1.msra.mxu0 0.0
    %4185 = vmatprep.subr.mxu0 0.0
    %4186 = vmatpush1.msra.mxu0 0.0
    %4187 = vmatprep.subr.mxu0 0.0
    %4188 = vmatpush1.msra.mxu0 0.0
    %4189 = vmatprep.subr.mxu0 0.0
    %4190 = vmatpush1.msra.mxu0 0.0
    %4191 = vmatprep.subr.mxu0 0.0
    %4192 = vmatpush1.msra.mxu0 0.0
    %4193 = vmatprep.subr.mxu0 0.0
    %4194 = vmatpush1.msra.mxu0 0.0
    %4195 = vmatprep.subr.mxu0 0.0
    %4196 = vmatpush1.msra.mxu0 0.0
    %4197 = vmatprep.subr.mxu0 0.0
    %4198 = vmatpush1.msra.mxu0 0.0
    %4199 = vmatprep.mubr.f32.mxu0 0.0
    %v4200 = vand.u32 %v3758, 4294901760
    %4201 = vmatmul.mubr.f32.gmra.mrb[0].mxu0 %v4200
    %v4202 = vpop.f32.mrb[0].mxu0
    %v4203 = vadd.f32 %v4131, %v4202
    %v4204 = vpop.f32.mrb[0].mxu0
    %4205 = vdwg.mxu0
    %v4206 = vmul.f32 %v3748, %v977
    %v4207 = vadd.f32 %v4206, %v4203
    %v4208 = vld [vmem:[#allocation3 + $0x7] sm:$0x1]
    %v4209 = vadd.f32 %v4207, %v4208
    %4210 = vst.msk [vmem:[#allocation2 + $0x7] sm:$0x1] %vm982, %v4209
    %v4211 = vld [vmem:[#allocation2] sm:$0xff]
    %v4212 = vlaneseq
    %v4213 = vshrl.u32 %v4212, 7
    %v4214 = vlaneseq
    %v4215 = vand.u32 %v4214, 127
    %vm4216 = vcmp.eq.s32.totalorder %v4213, %v4215
    %v4217 = vsel %vm4216, 1.0, 0.0
    %v4219 = vsel %vm62, %v4217, 0
    %v4222 = vsel %vm62, %v4211, 0
    %4224 = vmatprep.subr.mxu0 0.0
    %v4225 = vand.u32 %v4222, 4294901760
    %4226 = vmatpush1.xpose.msra.mxu0 %v4225
    %4227 = vmatprep.subr.mxu0 0.0
    %4228 = vmatpush1.xpose.msra.mxu0 0.0
    %4229 = vmatprep.subr.mxu0 0.0
    %4230 = vmatpush1.xpose.msra.mxu0 0.0
    %4231 = vmatprep.subr.mxu0 0.0
    %4232 = vmatpush1.xpose.msra.mxu0 0.0
    %4233 = vmatprep.subr.mxu0 0.0
    %4234 = vmatpush1.xpose.msra.mxu0 0.0
    %4235 = vmatprep.subr.mxu0 0.0
    %4236 = vmatpush1.xpose.msra.mxu0 0.0
    %4237 = vmatprep.subr.mxu0 0.0
    %4238 = vmatpush1.xpose.msra.mxu0 0.0
    %4239 = vmatprep.subr.mxu0 0.0
    %4240 = vmatpush1.xpose.msra.mxu0 0.0
    %4241 = vmatprep.subr.mxu0 0.0
    %4242 = vmatpush1.xpose.msra.mxu0 0.0
    %4243 = vmatprep.subr.mxu0 0.0
    %4244 = vmatpush1.xpose.msra.mxu0 0.0
    %4245 = vmatprep.subr.mxu0 0.0
    %4246 = vmatpush1.xpose.msra.mxu0 0.0
    %4247 = vmatprep.subr.mxu0 0.0
    %4248 = vmatpush1.xpose.msra.mxu0 0.0
    %4249 = vmatprep.subr.mxu0 0.0
    %4250 = vmatpush1.xpose.msra.mxu0 0.0
    %4251 = vmatprep.subr.mxu0 0.0
    %4252 = vmatpush1.xpose.msra.mxu0 0.0
    %4253 = vmatprep.subr.mxu0 0.0
    %4254 = vmatpush1.xpose.msra.mxu0 0.0
    %4255 = vmatprep.subr.mxu0 0.0
    %4256 = vmatpush1.xpose.msra.mxu0 0.0
    %4257 = vmatprep.subr.mxu0 0.0
    %4258 = vmatpush1.xpose.msra.mxu0 0.0
    %4259 = vmatprep.subr.mxu0 0.0
    %4260 = vmatpush1.xpose.msra.mxu0 0.0
    %4261 = vmatprep.subr.mxu0 0.0
    %4262 = vmatpush1.xpose.msra.mxu0 0.0
    %4263 = vmatprep.subr.mxu0 0.0
    %4264 = vmatpush1.xpose.msra.mxu0 0.0
    %4265 = vmatprep.subr.mxu0 0.0
    %4266 = vmatpush1.xpose.msra.mxu0 0.0
    %4267 = vmatprep.subr.mxu0 0.0
    %4268 = vmatpush1.xpose.msra.mxu0 0.0
    %4269 = vmatprep.subr.mxu0 0.0
    %4270 = vmatpush1.xpose.msra.mxu0 0.0
    %4271 = vmatprep.subr.mxu0 0.0
    %4272 = vmatpush1.xpose.msra.mxu0 0.0
    %4273 = vmatprep.subr.mxu0 0.0
    %4274 = vmatpush1.xpose.msra.mxu0 0.0
    %4275 = vmatprep.subr.mxu0 0.0
    %4276 = vmatpush1.xpose.msra.mxu0 0.0
    %4277 = vmatprep.subr.mxu0 0.0
    %4278 = vmatpush1.xpose.msra.mxu0 0.0
    %4279 = vmatprep.subr.mxu0 0.0
    %4280 = vmatpush1.xpose.msra.mxu0 0.0
    %4281 = vmatprep.subr.mxu0 0.0
    %4282 = vmatpush1.xpose.msra.mxu0 0.0
    %4283 = vmatprep.subr.mxu0 0.0
    %4284 = vmatpush1.xpose.msra.mxu0 0.0
    %4285 = vmatprep.subr.mxu0 0.0
    %4286 = vmatpush1.xpose.msra.mxu0 0.0
    %4287 = vmatprep.subr.mxu0 0.0
    %4288 = vmatpush1.xpose.msra.mxu0 0.0
    %4289 = vmatprep.mubr.f32.mxu0 0.0
    %v4290 = vand.u32 %v4219, 4294901760
    %v4291 = vsub.f32 %v4219, %v4290
    %v4292 = vand.u32 %v4291, 4294901760
    %v4293 = vsub.f32 %v4291, %v4292
    %v4294 = vand.u32 %v4293, 4294901760
    %4295 = vmatmul.mubr.f32.gmra.mrb[0].mxu0 %v4294
    %v4296 = vpop.f32.mrb[0].mxu0
    %v4297 = vadd.f32 0.0, %v4296
    %v4298 = vpop.f32.mrb[0].mxu0
    %4299 = vdwg.mxu0
    %4300 = vmatprep.subr.mxu0 0.0
    %v4301 = vand.u32 %v4222, 4294901760
    %v4302 = vsub.f32 %v4222, %v4301
    %v4303 = vand.u32 %v4302, 4294901760
    %v4304 = vsub.f32 %v4302, %v4303
    %v4305 = vand.u32 %v4304, 4294901760
    %4306 = vmatpush1.xpose.msra.mxu0 %v4305
    %4307 = vmatprep.subr.mxu0 0.0
    %4308 = vmatpush1.xpose.msra.mxu0 0.0
    %4309 = vmatprep.subr.mxu0 0.0
    %4310 = vmatpush1.xpose.msra.mxu0 0.0
    %4311 = vmatprep.subr.mxu0 0.0
    %4312 = vmatpush1.xpose.msra.mxu0 0.0
    %4313 = vmatprep.subr.mxu0 0.0
    %4314 = vmatpush1.xpose.msra.mxu0 0.0
    %4315 = vmatprep.subr.mxu0 0.0
    %4316 = vmatpush1.xpose.msra.mxu0 0.0
    %4317 = vmatprep.subr.mxu0 0.0
    %4318 = vmatpush1.xpose.msra.mxu0 0.0
    %4319 = vmatprep.subr.mxu0 0.0
    %4320 = vmatpush1.xpose.msra.mxu0 0.0
    %4321 = vmatprep.subr.mxu0 0.0
    %4322 = vmatpush1.xpose.msra.mxu0 0.0
    %4323 = vmatprep.subr.mxu0 0.0
    %4324 = vmatpush1.xpose.msra.mxu0 0.0
    %4325 = vmatprep.subr.mxu0 0.0
    %4326 = vmatpush1.xpose.msra.mxu0 0.0
    %4327 = vmatprep.subr.mxu0 0.0
    %4328 = vmatpush1.xpose.msra.mxu0 0.0
    %4329 = vmatprep.subr.mxu0 0.0
    %4330 = vmatpush1.xpose.msra.mxu0 0.0
    %4331 = vmatprep.subr.mxu0 0.0
    %4332 = vmatpush1.xpose.msra.mxu0 0.0
    %4333 = vmatprep.subr.mxu0 0.0
    %4334 = vmatpush1.xpose.msra.mxu0 0.0
    %4335 = vmatprep.subr.mxu0 0.0
    %4336 = vmatpush1.xpose.msra.mxu0 0.0
    %4337 = vmatprep.subr.mxu0 0.0
    %4338 = vmatpush1.xpose.msra.mxu0 0.0
    %4339 = vmatprep.subr.mxu0 0.0
    %4340 = vmatpush1.xpose.msra.mxu0 0.0
    %4341 = vmatprep.subr.mxu0 0.0
    %4342 = vmatpush1.xpose.msra.mxu0 0.0
    %4343 = vmatprep.subr.mxu0 0.0
    %4344 = vmatpush1.xpose.msra.mxu0 0.0
    %4345 = vmatprep.subr.mxu0 0.0
    %4346 = vmatpush1.xpose.msra.mxu0 0.0
    %4347 = vmatprep.subr.mxu0 0.0
    %4348 = vmatpush1.xpose.msra.mxu0 0.0
    %4349 = vmatprep.subr.mxu0 0.0
    %4350 = vmatpush1.xpose.msra.mxu0 0.0
    %4351 = vmatprep.subr.mxu0 0.0
    %4352 = vmatpush1.xpose.msra.mxu0 0.0
    %4353 = vmatprep.subr.mxu0 0.0
    %4354 = vmatpush1.xpose.msra.mxu0 0.0
    %4355 = vmatprep.subr.mxu0 0.0
    %4356 = vmatpush1.xpose.msra.mxu0 0.0
    %4357 = vmatprep.subr.mxu0 0.0
    %4358 = vmatpush1.xpose.msra.mxu0 0.0
    %4359 = vmatprep.subr.mxu0 0.0
    %4360 = vmatpush1.xpose.msra.mxu0 0.0
    %4361 = vmatprep.subr.mxu0 0.0
    %4362 = vmatpush1.xpose.msra.mxu0 0.0
    %4363 = vmatprep.subr.mxu0 0.0
    %4364 = vmatpush1.xpose.msra.mxu0 0.0
    %4365 = vmatprep.subr.mxu0 0.0
    %4366 = vmatpush1.xpose.msra.mxu0 0.0
    %4367 = vmatprep.subr.mxu0 0.0
    %4368 = vmatpush1.xpose.msra.mxu0 0.0
    %4369 = vmatprep.mubr.f32.mxu0 0.0
    %v4370 = vand.u32 %v4219, 4294901760
    %4371 = vmatmul.mubr.f32.gmra.mrb[0].mxu0 %v4370
    %v4372 = vpop.f32.mrb[0].mxu0
    %v4373 = vadd.f32 %v4297, %v4372
    %v4374 = vpop.f32.mrb[0].mxu0
    %4375 = vdwg.mxu0
    %4376 = vmatprep.subr.mxu0 0.0
    %v4377 = vand.u32 %v4222, 4294901760
    %v4378 = vsub.f32 %v4222, %v4377
    %4379 = vmatpush1.xpose.msra.mxu0 %v4378
    %4380 = vmatprep.subr.mxu0 0.0
    %4381 = vmatpush1.xpose.msra.mxu0 0.0
    %4382 = vmatprep.subr.mxu0 0.0
    %4383 = vmatpush1.xpose.msra.mxu0 0.0
    %4384 = vmatprep.subr.mxu0 0.0
    %4385 = vmatpush1.xpose.msra.mxu0 0.0
    %4386 = vmatprep.subr.mxu0 0.0
    %4387 = vmatpush1.xpose.msra.mxu0 0.0
    %4388 = vmatprep.subr.mxu0 0.0
    %4389 = vmatpush1.xpose.msra.mxu0 0.0
    %4390 = vmatprep.subr.mxu0 0.0
    %4391 = vmatpush1.xpose.msra.mxu0 0.0
    %4392 = vmatprep.subr.mxu0 0.0
    %4393 = vmatpush1.xpose.msra.mxu0 0.0
    %4394 = vmatprep.subr.mxu0 0.0
    %4395 = vmatpush1.xpose.msra.mxu0 0.0
    %4396 = vmatprep.subr.mxu0 0.0
    %4397 = vmatpush1.xpose.msra.mxu0 0.0
    %4398 = vmatprep.subr.mxu0 0.0
    %4399 = vmatpush1.xpose.msra.mxu0 0.0
    %4400 = vmatprep.subr.mxu0 0.0
    %4401 = vmatpush1.xpose.msra.mxu0 0.0
    %4402 = vmatprep.subr.mxu0 0.0
    %4403 = vmatpush1.xpose.msra.mxu0 0.0
    %4404 = vmatprep.subr.mxu0 0.0
    %4405 = vmatpush1.xpose.msra.mxu0 0.0
    %4406 = vmatprep.subr.mxu0 0.0
    %4407 = vmatpush1.xpose.msra.mxu0 0.0
    %4408 = vmatprep.subr.mxu0 0.0
    %4409 = vmatpush1.xpose.msra.mxu0 0.0
    %4410 = vmatprep.subr.mxu0 0.0
    %4411 = vmatpush1.xpose.msra.mxu0 0.0
    %4412 = vmatprep.subr.mxu0 0.0
    %4413 = vmatpush1.xpose.msra.mxu0 0.0
    %4414 = vmatprep.subr.mxu0 0.0
    %4415 = vmatpush1.xpose.msra.mxu0 0.0
    %4416 = vmatprep.subr.mxu0 0.0
    %4417 = vmatpush1.xpose.msra.mxu0 0.0
    %4418 = vmatprep.subr.mxu0 0.0
    %4419 = vmatpush1.xpose.msra.mxu0 0.0
    %4420 = vmatprep.subr.mxu0 0.0
    %4421 = vmatpush1.xpose.msra.mxu0 0.0
    %4422 = vmatprep.subr.mxu0 0.0
    %4423 = vmatpush1.xpose.msra.mxu0 0.0
    %4424 = vmatprep.subr.mxu0 0.0
    %4425 = vmatpush1.xpose.msra.mxu0 0.0
    %4426 = vmatprep.subr.mxu0 0.0
    %4427 = vmatpush1.xpose.msra.mxu0 0.0
    %4428 = vmatprep.subr.mxu0 0.0
    %4429 = vmatpush1.xpose.msra.mxu0 0.0
    %4430 = vmatprep.subr.mxu0 0.0
    %4431 = vmatpush1.xpose.msra.mxu0 0.0
    %4432 = vmatprep.subr.mxu0 0.0
    %4433 = vmatpush1.xpose.msra.mxu0 0.0
    %4434 = vmatprep.subr.mxu0 0.0
    %4435 = vmatpush1.xpose.msra.mxu0 0.0
    %4436 = vmatprep.subr.mxu0 0.0
    %4437 = vmatpush1.xpose.msra.mxu0 0.0
    %4438 = vmatprep.subr.mxu0 0.0
    %4439 = vmatpush1.xpose.msra.mxu0 0.0
    %4440 = vmatprep.subr.mxu0 0.0
    %4441 = vmatpush1.xpose.msra.mxu0 0.0
    %4442 = vmatprep.mubr.f32.mxu0 0.0
    %v4443 = vand.u32 %v4219, 4294901760
    %v4444 = vsub.f32 %v4219, %v4443
    %4445 = vmatmul.mubr.f32.gmra.mrb[0].mxu0 %v4444
    %v4446 = vpop.f32.mrb[0].mxu0
    %v4447 = vadd.f32 %v4373, %v4446
    %v4448 = vpop.f32.mrb[0].mxu0
    %4449 = vdwg.mxu0
    %4450 = vmatprep.subr.mxu0 0.0
    %v4451 = vand.u32 %v4222, 4294901760
    %4452 = vmatpush1.xpose.msra.mxu0 %v4451
    %4453 = vmatprep.subr.mxu0 0.0
    %4454 = vmatpush1.xpose.msra.mxu0 0.0
    %4455 = vmatprep.subr.mxu0 0.0
    %4456 = vmatpush1.xpose.msra.mxu0 0.0
    %4457 = vmatprep.subr.mxu0 0.0
    %4458 = vmatpush1.xpose.msra.mxu0 0.0
    %4459 = vmatprep.subr.mxu0 0.0
    %4460 = vmatpush1.xpose.msra.mxu0 0.0
    %4461 = vmatprep.subr.mxu0 0.0
    %4462 = vmatpush1.xpose.msra.mxu0 0.0
    %4463 = vmatprep.subr.mxu0 0.0
    %4464 = vmatpush1.xpose.msra.mxu0 0.0
    %4465 = vmatprep.subr.mxu0 0.0
    %4466 = vmatpush1.xpose.msra.mxu0 0.0
    %4467 = vmatprep.subr.mxu0 0.0
    %4468 = vmatpush1.xpose.msra.mxu0 0.0
    %4469 = vmatprep.subr.mxu0 0.0
    %4470 = vmatpush1.xpose.msra.mxu0 0.0
    %4471 = vmatprep.subr.mxu0 0.0
    %4472 = vmatpush1.xpose.msra.mxu0 0.0
    %4473 = vmatprep.subr.mxu0 0.0
    %4474 = vmatpush1.xpose.msra.mxu0 0.0
    %4475 = vmatprep.subr.mxu0 0.0
    %4476 = vmatpush1.xpose.msra.mxu0 0.0
    %4477 = vmatprep.subr.mxu0 0.0
    %4478 = vmatpush1.xpose.msra.mxu0 0.0
    %4479 = vmatprep.subr.mxu0 0.0
    %4480 = vmatpush1.xpose.msra.mxu0 0.0
    %4481 = vmatprep.subr.mxu0 0.0
    %4482 = vmatpush1.xpose.msra.mxu0 0.0
    %4483 = vmatprep.subr.mxu0 0.0
    %4484 = vmatpush1.xpose.msra.mxu0 0.0
    %4485 = vmatprep.subr.mxu0 0.0
    %4486 = vmatpush1.xpose.msra.mxu0 0.0
    %4487 = vmatprep.subr.mxu0 0.0
    %4488 = vmatpush1.xpose.msra.mxu0 0.0
    %4489 = vmatprep.subr.mxu0 0.0
    %4490 = vmatpush1.xpose.msra.mxu0 0.0
    %4491 = vmatprep.subr.mxu0 0.0
    %4492 = vmatpush1.xpose.msra.mxu0 0.0
    %4493 = vmatprep.subr.mxu0 0.0
    %4494 = vmatpush1.xpose.msra.mxu0 0.0
    %4495 = vmatprep.subr.mxu0 0.0
    %4496 = vmatpush1.xpose.msra.mxu0 0.0
    %4497 = vmatprep.subr.mxu0 0.0
    %4498 = vmatpush1.xpose.msra.mxu0 0.0
    %4499 = vmatprep.subr.mxu0 0.0
    %4500 = vmatpush1.xpose.msra.mxu0 0.0
    %4501 = vmatprep.subr.mxu0 0.0
    %4502 = vmatpush1.xpose.msra.mxu0 0.0
    %4503 = vmatprep.subr.mxu0 0.0
    %4504 = vmatpush1.xpose.msra.mxu0 0.0
    %4505 = vmatprep.subr.mxu0 0.0
    %4506 = vmatpush1.xpose.msra.mxu0 0.0
    %4507 = vmatprep.subr.mxu0 0.0
    %4508 = vmatpush1.xpose.msra.mxu0 0.0
    %4509 = vmatprep.subr.mxu0 0.0
    %4510 = vmatpush1.xpose.msra.mxu0 0.0
    %4511 = vmatprep.subr.mxu0 0.0
    %4512 = vmatpush1.xpose.msra.mxu0 0.0
    %4513 = vmatprep.subr.mxu0 0.0
    %4514 = vmatpush1.xpose.msra.mxu0 0.0
    %4515 = vmatprep.mubr.f32.mxu0 0.0
    %v4516 = vand.u32 %v4219, 4294901760
    %v4517 = vsub.f32 %v4219, %v4516
    %v4518 = vand.u32 %v4517, 4294901760
    %4519 = vmatmul.mubr.f32.gmra.mrb[0].mxu0 %v4518
    %v4520 = vpop.f32.mrb[0].mxu0
    %v4521 = vadd.f32 %v4447, %v4520
    %v4522 = vpop.f32.mrb[0].mxu0
    %4523 = vdwg.mxu0
    %4524 = vmatprep.subr.mxu0 0.0
    %v4525 = vand.u32 %v4222, 4294901760
    %v4526 = vsub.f32 %v4222, %v4525
    %v4527 = vand.u32 %v4526, 4294901760
    %4528 = vmatpush1.xpose.msra.mxu0 %v4527
    %4529 = vmatprep.subr.mxu0 0.0
    %4530 = vmatpush1.xpose.msra.mxu0 0.0
    %4531 = vmatprep.subr.mxu0 0.0
    %4532 = vmatpush1.xpose.msra.mxu0 0.0
    %4533 = vmatprep.subr.mxu0 0.0
    %4534 = vmatpush1.xpose.msra.mxu0 0.0
    %4535 = vmatprep.subr.mxu0 0.0
    %4536 = vmatpush1.xpose.msra.mxu0 0.0
    %4537 = vmatprep.subr.mxu0 0.0
    %4538 = vmatpush1.xpose.msra.mxu0 0.0
    %4539 = vmatprep.subr.mxu0 0.0
    %4540 = vmatpush1.xpose.msra.mxu0 0.0
    %4541 = vmatprep.subr.mxu0 0.0
    %4542 = vmatpush1.xpose.msra.mxu0 0.0
    %4543 = vmatprep.subr.mxu0 0.0
    %4544 = vmatpush1.xpose.msra.mxu0 0.0
    %4545 = vmatprep.subr.mxu0 0.0
    %4546 = vmatpush1.xpose.msra.mxu0 0.0
    %4547 = vmatprep.subr.mxu0 0.0
    %4548 = vmatpush1.xpose.msra.mxu0 0.0
    %4549 = vmatprep.subr.mxu0 0.0
    %4550 = vmatpush1.xpose.msra.mxu0 0.0
    %4551 = vmatprep.subr.mxu0 0.0
    %4552 = vmatpush1.xpose.msra.mxu0 0.0
    %4553 = vmatprep.subr.mxu0 0.0
    %4554 = vmatpush1.xpose.msra.mxu0 0.0
    %4555 = vmatprep.subr.mxu0 0.0
    %4556 = vmatpush1.xpose.msra.mxu0 0.0
    %4557 = vmatprep.subr.mxu0 0.0
    %4558 = vmatpush1.xpose.msra.mxu0 0.0
    %4559 = vmatprep.subr.mxu0 0.0
    %4560 = vmatpush1.xpose.msra.mxu0 0.0
    %4561 = vmatprep.subr.mxu0 0.0
    %4562 = vmatpush1.xpose.msra.mxu0 0.0
    %4563 = vmatprep.subr.mxu0 0.0
    %4564 = vmatpush1.xpose.msra.mxu0 0.0
    %4565 = vmatprep.subr.mxu0 0.0
    %4566 = vmatpush1.xpose.msra.mxu0 0.0
    %4567 = vmatprep.subr.mxu0 0.0
    %4568 = vmatpush1.xpose.msra.mxu0 0.0
    %4569 = vmatprep.subr.mxu0 0.0
    %4570 = vmatpush1.xpose.msra.mxu0 0.0
    %4571 = vmatprep.subr.mxu0 0.0
    %4572 = vmatpush1.xpose.msra.mxu0 0.0
    %4573 = vmatprep.subr.mxu0 0.0
    %4574 = vmatpush1.xpose.msra.mxu0 0.0
    %4575 = vmatprep.subr.mxu0 0.0
    %4576 = vmatpush1.xpose.msra.mxu0 0.0
    %4577 = vmatprep.subr.mxu0 0.0
    %4578 = vmatpush1.xpose.msra.mxu0 0.0
    %4579 = vmatprep.subr.mxu0 0.0
    %4580 = vmatpush1.xpose.msra.mxu0 0.0
    %4581 = vmatprep.subr.mxu0 0.0
    %4582 = vmatpush1.xpose.msra.mxu0 0.0
    %4583 = vmatprep.subr.mxu0 0.0
    %4584 = vmatpush1.xpose.msra.mxu0 0.0
    %4585 = vmatprep.subr.mxu0 0.0
    %4586 = vmatpush1.xpose.msra.mxu0 0.0
    %4587 = vmatprep.subr.mxu0 0.0
    %4588 = vmatpush1.xpose.msra.mxu0 0.0
    %4589 = vmatprep.subr.mxu0 0.0
    %4590 = vmatpush1.xpose.msra.mxu0 0.0
    %4591 = vmatprep.mubr.f32.mxu0 0.0
    %v4592 = vand.u32 %v4219, 4294901760
    %4593 = vmatmul.mubr.f32.gmra.mrb[0].mxu0 %v4592
    %v4594 = vpop.f32.mrb[0].mxu0
    %v4595 = vadd.f32 %v4521, %v4594
    %v4596 = vpop.f32.mrb[0].mxu0
    %4597 = vdwg.mxu0
    %4598 = vmatprep.subr.mxu0 0.0
    %v4599 = vand.u32 %v4222, 4294901760
    %4600 = vmatpush1.xpose.msra.mxu0 %v4599
    %4601 = vmatprep.subr.mxu0 0.0
    %4602 = vmatpush1.xpose.msra.mxu0 0.0
    %4603 = vmatprep.subr.mxu0 0.0
    %4604 = vmatpush1.xpose.msra.mxu0 0.0
    %4605 = vmatprep.subr.mxu0 0.0
    %4606 = vmatpush1.xpose.msra.mxu0 0.0
    %4607 = vmatprep.subr.mxu0 0.0
    %4608 = vmatpush1.xpose.msra.mxu0 0.0
    %4609 = vmatprep.subr.mxu0 0.0
    %4610 = vmatpush1.xpose.msra.mxu0 0.0
    %4611 = vmatprep.subr.mxu0 0.0
    %4612 = vmatpush1.xpose.msra.mxu0 0.0
    %4613 = vmatprep.subr.mxu0 0.0
    %4614 = vmatpush1.xpose.msra.mxu0 0.0
    %4615 = vmatprep.subr.mxu0 0.0
    %4616 = vmatpush1.xpose.msra.mxu0 0.0
    %4617 = vmatprep.subr.mxu0 0.0
    %4618 = vmatpush1.xpose.msra.mxu0 0.0
    %4619 = vmatprep.subr.mxu0 0.0
    %4620 = vmatpush1.xpose.msra.mxu0 0.0
    %4621 = vmatprep.subr.mxu0 0.0
    %4622 = vmatpush1.xpose.msra.mxu0 0.0
    %4623 = vmatprep.subr.mxu0 0.0
    %4624 = vmatpush1.xpose.msra.mxu0 0.0
    %4625 = vmatprep.subr.mxu0 0.0
    %4626 = vmatpush1.xpose.msra.mxu0 0.0
    %4627 = vmatprep.subr.mxu0 0.0
    %4628 = vmatpush1.xpose.msra.mxu0 0.0
    %4629 = vmatprep.subr.mxu0 0.0
    %4630 = vmatpush1.xpose.msra.mxu0 0.0
    %4631 = vmatprep.subr.mxu0 0.0
    %4632 = vmatpush1.xpose.msra.mxu0 0.0
    %4633 = vmatprep.subr.mxu0 0.0
    %4634 = vmatpush1.xpose.msra.mxu0 0.0
    %4635 = vmatprep.subr.mxu0 0.0
    %4636 = vmatpush1.xpose.msra.mxu0 0.0
    %4637 = vmatprep.subr.mxu0 0.0
    %4638 = vmatpush1.xpose.msra.mxu0 0.0
    %4639 = vmatprep.subr.mxu0 0.0
    %4640 = vmatpush1.xpose.msra.mxu0 0.0
    %4641 = vmatprep.subr.mxu0 0.0
    %4642 = vmatpush1.xpose.msra.mxu0 0.0
    %4643 = vmatprep.subr.mxu0 0.0
    %4644 = vmatpush1.xpose.msra.mxu0 0.0
    %4645 = vmatprep.subr.mxu0 0.0
    %4646 = vmatpush1.xpose.msra.mxu0 0.0
    %4647 = vmatprep.subr.mxu0 0.0
    %4648 = vmatpush1.xpose.msra.mxu0 0.0
    %4649 = vmatprep.subr.mxu0 0.0
    %4650 = vmatpush1.xpose.msra.mxu0 0.0
    %4651 = vmatprep.subr.mxu0 0.0
    %4652 = vmatpush1.xpose.msra.mxu0 0.0
    %4653 = vmatprep.subr.mxu0 0.0
    %4654 = vmatpush1.xpose.msra.mxu0 0.0
    %4655 = vmatprep.subr.mxu0 0.0
    %4656 = vmatpush1.xpose.msra.mxu0 0.0
    %4657 = vmatprep.subr.mxu0 0.0
    %4658 = vmatpush1.xpose.msra.mxu0 0.0
    %4659 = vmatprep.subr.mxu0 0.0
    %4660 = vmatpush1.xpose.msra.mxu0 0.0
    %4661 = vmatprep.subr.mxu0 0.0
    %4662 = vmatpush1.xpose.msra.mxu0 0.0
    %4663 = vmatprep.mubr.f32.mxu0 0.0
    %v4664 = vand.u32 %v4219, 4294901760
    %4665 = vmatmul.mubr.f32.gmra.mrb[0].mxu0 %v4664
    %v4666 = vpop.f32.mrb[0].mxu0
    %v4667 = vadd.f32 %v4595, %v4666
    %v4668 = vpop.f32.mrb[0].mxu0
    %4669 = vdwg.mxu0
    %vm4670 = vcmask 59392
    %4671 = vst.msk [vmem:[#allocation8] sm:$0x7] %vm4670, %v4667
    %v4672 = vld [vmem:[%s4] sm:$0x7]
    %v4673 = vld [vmem:[%s5] sm:$0x1]
    %v4675 = vlaneseq
    %v4676 = vshrl.u32 %v4675, 7
    %v4677 = vsub.s32 0, %v4676
    %v4678 = vrot.slane %v4673, %v4677
    %v4681 = vsel %vm66, %v4672, 0
    %4683 = vmatprep.subr.mxu0 0.0
    %v4684 = vand.u32 %v4681, 4294901760
    %4685 = vmatpush1.msra.mxu0 %v4684
    %4686 = vmatprep.subr.mxu0 0.0
    %4687 = vmatpush1.msra.mxu0 0.0
    %4688 = vmatprep.subr.mxu0 0.0
    %4689 = vmatpush1.msra.mxu0 0.0
    %4690 = vmatprep.subr.mxu0 0.0
    %4691 = vmatpush1.msra.mxu0 0.0
    %4692 = vmatprep.subr.mxu0 0.0
    %4693 = vmatpush1.msra.mxu0 0.0
    %4694 = vmatprep.subr.mxu0 0.0
    %4695 = vmatpush1.msra.mxu0 0.0
    %4696 = vmatprep.subr.mxu0 0.0
    %4697 = vmatpush1.msra.mxu0 0.0
    %4698 = vmatprep.subr.mxu0 0.0
    %4699 = vmatpush1.msra.mxu0 0.0
    %4700 = vmatprep.subr.mxu0 0.0
    %4701 = vmatpush1.msra.mxu0 0.0
    %4702 = vmatprep.subr.mxu0 0.0
    %4703 = vmatpush1.msra.mxu0 0.0
    %4704 = vmatprep.subr.mxu0 0.0
    %4705 = vmatpush1.msra.mxu0 0.0
    %4706 = vmatprep.subr.mxu0 0.0
    %4707 = vmatpush1.msra.mxu0 0.0
    %4708 = vmatprep.subr.mxu0 0.0
    %4709 = vmatpush1.msra.mxu0 0.0
    %4710 = vmatprep.subr.mxu0 0.0
    %4711 = vmatpush1.msra.mxu0 0.0
    %4712 = vmatprep.subr.mxu0 0.0
    %4713 = vmatpush1.msra.mxu0 0.0
    %4714 = vmatprep.subr.mxu0 0.0
    %4715 = vmatpush1.msra.mxu0 0.0
    %4716 = vmatprep.subr.mxu0 0.0
    %4717 = vmatpush1.msra.mxu0 0.0
    %4718 = vmatprep.subr.mxu0 0.0
    %4719 = vmatpush1.msra.mxu0 0.0
    %4720 = vmatprep.subr.mxu0 0.0
    %4721 = vmatpush1.msra.mxu0 0.0
    %4722 = vmatprep.subr.mxu0 0.0
    %4723 = vmatpush1.msra.mxu0 0.0
    %4724 = vmatprep.subr.mxu0 0.0
    %4725 = vmatpush1.msra.mxu0 0.0
    %4726 = vmatprep.subr.mxu0 0.0
    %4727 = vmatpush1.msra.mxu0 0.0
    %4728 = vmatprep.subr.mxu0 0.0
    %4729 = vmatpush1.msra.mxu0 0.0
    %4730 = vmatprep.subr.mxu0 0.0
    %4731 = vmatpush1.msra.mxu0 0.0
    %4732 = vmatprep.subr.mxu0 0.0
    %4733 = vmatpush1.msra.mxu0 0.0
    %4734 = vmatprep.subr.mxu0 0.0
    %4735 = vmatpush1.msra.mxu0 0.0
    %4736 = vmatprep.subr.mxu0 0.0
    %4737 = vmatpush1.msra.mxu0 0.0
    %4738 = vmatprep.subr.mxu0 0.0
    %4739 = vmatpush1.msra.mxu0 0.0
    %4740 = vmatprep.subr.mxu0 0.0
    %4741 = vmatpush1.msra.mxu0 0.0
    %4742 = vmatprep.subr.mxu0 0.0
    %4743 = vmatpush1.msra.mxu0 0.0
    %4744 = vmatprep.subr.mxu0 0.0
    %4745 = vmatpush1.msra.mxu0 0.0
    %4746 = vmatprep.subr.mxu0 0.0
    %4747 = vmatpush1.msra.mxu0 0.0
    %4748 = vmatprep.mubr.f32.mxu0 0.0
    %v4749 = vand.u32 %v4222, 4294901760
    %v4750 = vsub.f32 %v4222, %v4749
    %v4751 = vand.u32 %v4750, 4294901760
    %v4752 = vsub.f32 %v4750, %v4751
    %v4753 = vand.u32 %v4752, 4294901760
    %4754 = vmatmul.mubr.f32.gmra.mrb[0].mxu0 %v4753
    %v4755 = vpop.f32.mrb[0].mxu0
    %v4756 = vadd.f32 %v4678, %v4755
    %v4757 = vpop.f32.mrb[0].mxu0
    %4758 = vdwg.mxu0
    %4759 = vmatprep.subr.mxu0 0.0
    %v4760 = vand.u32 %v4681, 4294901760
    %v4761 = vsub.f32 %v4681, %v4760
    %v4762 = vand.u32 %v4761, 4294901760
    %v4763 = vsub.f32 %v4761, %v4762
    %v4764 = vand.u32 %v4763, 4294901760
    %4765 = vmatpush1.msra.mxu0 %v4764
    %4766 = vmatprep.subr.mxu0 0.0
    %4767 = vmatpush1.msra.mxu0 0.0
    %4768 = vmatprep.subr.mxu0 0.0
    %4769 = vmatpush1.msra.mxu0 0.0
    %4770 = vmatprep.subr.mxu0 0.0
    %4771 = vmatpush1.msra.mxu0 0.0
    %4772 = vmatprep.subr.mxu0 0.0
    %4773 = vmatpush1.msra.mxu0 0.0
    %4774 = vmatprep.subr.mxu0 0.0
    %4775 = vmatpush1.msra.mxu0 0.0
    %4776 = vmatprep.subr.mxu0 0.0
    %4777 = vmatpush1.msra.mxu0 0.0
    %4778 = vmatprep.subr.mxu0 0.0
    %4779 = vmatpush1.msra.mxu0 0.0
    %4780 = vmatprep.subr.mxu0 0.0
    %4781 = vmatpush1.msra.mxu0 0.0
    %4782 = vmatprep.subr.mxu0 0.0
    %4783 = vmatpush1.msra.mxu0 0.0
    %4784 = vmatprep.subr.mxu0 0.0
    %4785 = vmatpush1.msra.mxu0 0.0
    %4786 = vmatprep.subr.mxu0 0.0
    %4787 = vmatpush1.msra.mxu0 0.0
    %4788 = vmatprep.subr.mxu0 0.0
    %4789 = vmatpush1.msra.mxu0 0.0
    %4790 = vmatprep.subr.mxu0 0.0
    %4791 = vmatpush1.msra.mxu0 0.0
    %4792 = vmatprep.subr.mxu0 0.0
    %4793 = vmatpush1.msra.mxu0 0.0
    %4794 = vmatprep.subr.mxu0 0.0
    %4795 = vmatpush1.msra.mxu0 0.0
    %4796 = vmatprep.subr.mxu0 0.0
    %4797 = vmatpush1.msra.mxu0 0.0
    %4798 = vmatprep.subr.mxu0 0.0
    %4799 = vmatpush1.msra.mxu0 0.0
    %4800 = vmatprep.subr.mxu0 0.0
    %4801 = vmatpush1.msra.mxu0 0.0
    %4802 = vmatprep.subr.mxu0 0.0
    %4803 = vmatpush1.msra.mxu0 0.0
    %4804 = vmatprep.subr.mxu0 0.0
    %4805 = vmatpush1.msra.mxu0 0.0
    %4806 = vmatprep.subr.mxu0 0.0
    %4807 = vmatpush1.msra.mxu0 0.0
    %4808 = vmatprep.subr.mxu0 0.0
    %4809 = vmatpush1.msra.mxu0 0.0
    %4810 = vmatprep.subr.mxu0 0.0
    %4811 = vmatpush1.msra.mxu0 0.0
    %4812 = vmatprep.subr.mxu0 0.0
    %4813 = vmatpush1.msra.mxu0 0.0
    %4814 = vmatprep.subr.mxu0 0.0
    %4815 = vmatpush1.msra.mxu0 0.0
    %4816 = vmatprep.subr.mxu0 0.0
    %4817 = vmatpush1.msra.mxu0 0.0
    %4818 = vmatprep.subr.mxu0 0.0
    %4819 = vmatpush1.msra.mxu0 0.0
    %4820 = vmatprep.subr.mxu0 0.0
    %4821 = vmatpush1.msra.mxu0 0.0
    %4822 = vmatprep.subr.mxu0 0.0
    %4823 = vmatpush1.msra.mxu0 0.0
    %4824 = vmatprep.subr.mxu0 0.0
    %4825 = vmatpush1.msra.mxu0 0.0
    %4826 = vmatprep.subr.mxu0 0.0
    %4827 = vmatpush1.msra.mxu0 0.0
    %4828 = vmatprep.mubr.f32.mxu0 0.0
    %v4829 = vand.u32 %v4222, 4294901760
    %4830 = vmatmul.mubr.f32.gmra.mrb[0].mxu0 %v4829
    %v4831 = vpop.f32.mrb[0].mxu0
    %v4832 = vadd.f32 %v4756, %v4831
    %v4833 = vpop.f32.mrb[0].mxu0
    %4834 = vdwg.mxu0
    %4835 = vmatprep.subr.mxu0 0.0
    %v4836 = vand.u32 %v4681, 4294901760
    %v4837 = vsub.f32 %v4681, %v4836
    %4838 = vmatpush1.msra.mxu0 %v4837
    %4839 = vmatprep.subr.mxu0 0.0
    %4840 = vmatpush1.msra.mxu0 0.0
    %4841 = vmatprep.subr.mxu0 0.0
    %4842 = vmatpush1.msra.mxu0 0.0
    %4843 = vmatprep.subr.mxu0 0.0
    %4844 = vmatpush1.msra.mxu0 0.0
    %4845 = vmatprep.subr.mxu0 0.0
    %4846 = vmatpush1.msra.mxu0 0.0
    %4847 = vmatprep.subr.mxu0 0.0
    %4848 = vmatpush1.msra.mxu0 0.0
    %4849 = vmatprep.subr.mxu0 0.0
    %4850 = vmatpush1.msra.mxu0 0.0
    %4851 = vmatprep.subr.mxu0 0.0
    %4852 = vmatpush1.msra.mxu0 0.0
    %4853 = vmatprep.subr.mxu0 0.0
    %4854 = vmatpush1.msra.mxu0 0.0
    %4855 = vmatprep.subr.mxu0 0.0
    %4856 = vmatpush1.msra.mxu0 0.0
    %4857 = vmatprep.subr.mxu0 0.0
    %4858 = vmatpush1.msra.mxu0 0.0
    %4859 = vmatprep.subr.mxu0 0.0
    %4860 = vmatpush1.msra.mxu0 0.0
    %4861 = vmatprep.subr.mxu0 0.0
    %4862 = vmatpush1.msra.mxu0 0.0
    %4863 = vmatprep.subr.mxu0 0.0
    %4864 = vmatpush1.msra.mxu0 0.0
    %4865 = vmatprep.subr.mxu0 0.0
    %4866 = vmatpush1.msra.mxu0 0.0
    %4867 = vmatprep.subr.mxu0 0.0
    %4868 = vmatpush1.msra.mxu0 0.0
    %4869 = vmatprep.subr.mxu0 0.0
    %4870 = vmatpush1.msra.mxu0 0.0
    %4871 = vmatprep.subr.mxu0 0.0
    %4872 = vmatpush1.msra.mxu0 0.0
    %4873 = vmatprep.subr.mxu0 0.0
    %4874 = vmatpush1.msra.mxu0 0.0
    %4875 = vmatprep.subr.mxu0 0.0
    %4876 = vmatpush1.msra.mxu0 0.0
    %4877 = vmatprep.subr.mxu0 0.0
    %4878 = vmatpush1.msra.mxu0 0.0
    %4879 = vmatprep.subr.mxu0 0.0
    %4880 = vmatpush1.msra.mxu0 0.0
    %4881 = vmatprep.subr.mxu0 0.0
    %4882 = vmatpush1.msra.mxu0 0.0
    %4883 = vmatprep.subr.mxu0 0.0
    %4884 = vmatpush1.msra.mxu0 0.0
    %4885 = vmatprep.subr.mxu0 0.0
    %4886 = vmatpush1.msra.mxu0 0.0
    %4887 = vmatprep.subr.mxu0 0.0
    %4888 = vmatpush1.msra.mxu0 0.0
    %4889 = vmatprep.subr.mxu0 0.0
    %4890 = vmatpush1.msra.mxu0 0.0
    %4891 = vmatprep.subr.mxu0 0.0
    %4892 = vmatpush1.msra.mxu0 0.0
    %4893 = vmatprep.subr.mxu0 0.0
    %4894 = vmatpush1.msra.mxu0 0.0
    %4895 = vmatprep.subr.mxu0 0.0
    %4896 = vmatpush1.msra.mxu0 0.0
    %4897 = vmatprep.subr.mxu0 0.0
    %4898 = vmatpush1.msra.mxu0 0.0
    %4899 = vmatprep.subr.mxu0 0.0
    %4900 = vmatpush1.msra.mxu0 0.0
    %4901 = vmatprep.mubr.f32.mxu0 0.0
    %v4902 = vand.u32 %v4222, 4294901760
    %v4903 = vsub.f32 %v4222, %v4902
    %4904 = vmatmul.mubr.f32.gmra.mrb[0].mxu0 %v4903
    %v4905 = vpop.f32.mrb[0].mxu0
    %v4906 = vadd.f32 %v4832, %v4905
    %v4907 = vpop.f32.mrb[0].mxu0
    %4908 = vdwg.mxu0
    %4909 = vmatprep.subr.mxu0 0.0
    %v4910 = vand.u32 %v4681, 4294901760
    %4911 = vmatpush1.msra.mxu0 %v4910
    %4912 = vmatprep.subr.mxu0 0.0
    %4913 = vmatpush1.msra.mxu0 0.0
    %4914 = vmatprep.subr.mxu0 0.0
    %4915 = vmatpush1.msra.mxu0 0.0
    %4916 = vmatprep.subr.mxu0 0.0
    %4917 = vmatpush1.msra.mxu0 0.0
    %4918 = vmatprep.subr.mxu0 0.0
    %4919 = vmatpush1.msra.mxu0 0.0
    %4920 = vmatprep.subr.mxu0 0.0
    %4921 = vmatpush1.msra.mxu0 0.0
    %4922 = vmatprep.subr.mxu0 0.0
    %4923 = vmatpush1.msra.mxu0 0.0
    %4924 = vmatprep.subr.mxu0 0.0
    %4925 = vmatpush1.msra.mxu0 0.0
    %4926 = vmatprep.subr.mxu0 0.0
    %4927 = vmatpush1.msra.mxu0 0.0
    %4928 = vmatprep.subr.mxu0 0.0
    %4929 = vmatpush1.msra.mxu0 0.0
    %4930 = vmatprep.subr.mxu0 0.0
    %4931 = vmatpush1.msra.mxu0 0.0
    %4932 = vmatprep.subr.mxu0 0.0
    %4933 = vmatpush1.msra.mxu0 0.0
    %4934 = vmatprep.subr.mxu0 0.0
    %4935 = vmatpush1.msra.mxu0 0.0
    %4936 = vmatprep.subr.mxu0 0.0
    %4937 = vmatpush1.msra.mxu0 0.0
    %4938 = vmatprep.subr.mxu0 0.0
    %4939 = vmatpush1.msra.mxu0 0.0
    %4940 = vmatprep.subr.mxu0 0.0
    %4941 = vmatpush1.msra.mxu0 0.0
    %4942 = vmatprep.subr.mxu0 0.0
    %4943 = vmatpush1.msra.mxu0 0.0
    %4944 = vmatprep.subr.mxu0 0.0
    %4945 = vmatpush1.msra.mxu0 0.0
    %4946 = vmatprep.subr.mxu0 0.0
    %4947 = vmatpush1.msra.mxu0 0.0
    %4948 = vmatprep.subr.mxu0 0.0
    %4949 = vmatpush1.msra.mxu0 0.0
    %4950 = vmatprep.subr.mxu0 0.0
    %4951 = vmatpush1.msra.mxu0 0.0
    %4952 = vmatprep.subr.mxu0 0.0
    %4953 = vmatpush1.msra.mxu0 0.0
    %4954 = vmatprep.subr.mxu0 0.0
    %4955 = vmatpush1.msra.mxu0 0.0
    %4956 = vmatprep.subr.mxu0 0.0
    %4957 = vmatpush1.msra.mxu0 0.0
    %4958 = vmatprep.subr.mxu0 0.0
    %4959 = vmatpush1.msra.mxu0 0.0
    %4960 = vmatprep.subr.mxu0 0.0
    %4961 = vmatpush1.msra.mxu0 0.0
    %4962 = vmatprep.subr.mxu0 0.0
    %4963 = vmatpush1.msra.mxu0 0.0
    %4964 = vmatprep.subr.mxu0 0.0
    %4965 = vmatpush1.msra.mxu0 0.0
    %4966 = vmatprep.subr.mxu0 0.0
    %4967 = vmatpush1.msra.mxu0 0.0
    %4968 = vmatprep.subr.mxu0 0.0
    %4969 = vmatpush1.msra.mxu0 0.0
    %4970 = vmatprep.subr.mxu0 0.0
    %4971 = vmatpush1.msra.mxu0 0.0
    %4972 = vmatprep.subr.mxu0 0.0
    %4973 = vmatpush1.msra.mxu0 0.0
    %4974 = vmatprep.mubr.f32.mxu0 0.0
    %v4975 = vand.u32 %v4222, 4294901760
    %v4976 = vsub.f32 %v4222, %v4975
    %v4977 = vand.u32 %v4976, 4294901760
    %4978 = vmatmul.mubr.f32.gmra.mrb[0].mxu0 %v4977
    %v4979 = vpop.f32.mrb[0].mxu0
    %v4980 = vadd.f32 %v4906, %v4979
    %v4981 = vpop.f32.mrb[0].mxu0
    %4982 = vdwg.mxu0
    %4983 = vmatprep.subr.mxu0 0.0
    %v4984 = vand.u32 %v4681, 4294901760
    %v4985 = vsub.f32 %v4681, %v4984
    %v4986 = vand.u32 %v4985, 4294901760
    %4987 = vmatpush1.msra.mxu0 %v4986
    %4988 = vmatprep.subr.mxu0 0.0
    %4989 = vmatpush1.msra.mxu0 0.0
    %4990 = vmatprep.subr.mxu0 0.0
    %4991 = vmatpush1.msra.mxu0 0.0
    %4992 = vmatprep.subr.mxu0 0.0
    %4993 = vmatpush1.msra.mxu0 0.0
    %4994 = vmatprep.subr.mxu0 0.0
    %4995 = vmatpush1.msra.mxu0 0.0
    %4996 = vmatprep.subr.mxu0 0.0
    %4997 = vmatpush1.msra.mxu0 0.0
    %4998 = vmatprep.subr.mxu0 0.0
    %4999 = vmatpush1.msra.mxu0 0.0
    %5000 = vmatprep.subr.mxu0 0.0
    %5001 = vmatpush1.msra.mxu0 0.0
    %5002 = vmatprep.subr.mxu0 0.0
    %5003 = vmatpush1.msra.mxu0 0.0
    %5004 = vmatprep.subr.mxu0 0.0
    %5005 = vmatpush1.msra.mxu0 0.0
    %5006 = vmatprep.subr.mxu0 0.0
    %5007 = vmatpush1.msra.mxu0 0.0
    %5008 = vmatprep.subr.mxu0 0.0
    %5009 = vmatpush1.msra.mxu0 0.0
    %5010 = vmatprep.subr.mxu0 0.0
    %5011 = vmatpush1.msra.mxu0 0.0
    %5012 = vmatprep.subr.mxu0 0.0
    %5013 = vmatpush1.msra.mxu0 0.0
    %5014 = vmatprep.subr.mxu0 0.0
    %5015 = vmatpush1.msra.mxu0 0.0
    %5016 = vmatprep.subr.mxu0 0.0
    %5017 = vmatpush1.msra.mxu0 0.0
    %5018 = vmatprep.subr.mxu0 0.0
    %5019 = vmatpush1.msra.mxu0 0.0
    %5020 = vmatprep.subr.mxu0 0.0
    %5021 = vmatpush1.msra.mxu0 0.0
    %5022 = vmatprep.subr.mxu0 0.0
    %5023 = vmatpush1.msra.mxu0 0.0
    %5024 = vmatprep.subr.mxu0 0.0
    %5025 = vmatpush1.msra.mxu0 0.0
    %5026 = vmatprep.subr.mxu0 0.0
    %5027 = vmatpush1.msra.mxu0 0.0
    %5028 = vmatprep.subr.mxu0 0.0
    %5029 = vmatpush1.msra.mxu0 0.0
    %5030 = vmatprep.subr.mxu0 0.0
    %5031 = vmatpush1.msra.mxu0 0.0
    %5032 = vmatprep.subr.mxu0 0.0
    %5033 = vmatpush1.msra.mxu0 0.0
    %5034 = vmatprep.subr.mxu0 0.0
    %5035 = vmatpush1.msra.mxu0 0.0
    %5036 = vmatprep.subr.mxu0 0.0
    %5037 = vmatpush1.msra.mxu0 0.0
    %5038 = vmatprep.subr.mxu0 0.0
    %5039 = vmatpush1.msra.mxu0 0.0
    %5040 = vmatprep.subr.mxu0 0.0
    %5041 = vmatpush1.msra.mxu0 0.0
    %5042 = vmatprep.subr.mxu0 0.0
    %5043 = vmatpush1.msra.mxu0 0.0
    %5044 = vmatprep.subr.mxu0 0.0
    %5045 = vmatpush1.msra.mxu0 0.0
    %5046 = vmatprep.subr.mxu0 0.0
    %5047 = vmatpush1.msra.mxu0 0.0
    %5048 = vmatprep.subr.mxu0 0.0
    %5049 = vmatpush1.msra.mxu0 0.0
    %5050 = vmatprep.mubr.f32.mxu0 0.0
    %v5051 = vand.u32 %v4222, 4294901760
    %5052 = vmatmul.mubr.f32.gmra.mrb[0].mxu0 %v5051
    %v5053 = vpop.f32.mrb[0].mxu0
    %v5054 = vadd.f32 %v4980, %v5053
    %v5055 = vpop.f32.mrb[0].mxu0
    %5056 = vdwg.mxu0
    %5057 = vmatprep.subr.mxu0 0.0
    %v5058 = vand.u32 %v4681, 4294901760
    %5059 = vmatpush1.msra.mxu0 %v5058
    %5060 = vmatprep.subr.mxu0 0.0
    %5061 = vmatpush1.msra.mxu0 0.0
    %5062 = vmatprep.subr.mxu0 0.0
    %5063 = vmatpush1.msra.mxu0 0.0
    %5064 = vmatprep.subr.mxu0 0.0
    %5065 = vmatpush1.msra.mxu0 0.0
    %5066 = vmatprep.subr.mxu0 0.0
    %5067 = vmatpush1.msra.mxu0 0.0
    %5068 = vmatprep.subr.mxu0 0.0
    %5069 = vmatpush1.msra.mxu0 0.0
    %5070 = vmatprep.subr.mxu0 0.0
    %5071 = vmatpush1.msra.mxu0 0.0
    %5072 = vmatprep.subr.mxu0 0.0
    %5073 = vmatpush1.msra.mxu0 0.0
    %5074 = vmatprep.subr.mxu0 0.0
    %5075 = vmatpush1.msra.mxu0 0.0
    %5076 = vmatprep.subr.mxu0 0.0
    %5077 = vmatpush1.msra.mxu0 0.0
    %5078 = vmatprep.subr.mxu0 0.0
    %5079 = vmatpush1.msra.mxu0 0.0
    %5080 = vmatprep.subr.mxu0 0.0
    %5081 = vmatpush1.msra.mxu0 0.0
    %5082 = vmatprep.subr.mxu0 0.0
    %5083 = vmatpush1.msra.mxu0 0.0
    %5084 = vmatprep.subr.mxu0 0.0
    %5085 = vmatpush1.msra.mxu0 0.0
    %5086 = vmatprep.subr.mxu0 0.0
    %5087 = vmatpush1.msra.mxu0 0.0
    %5088 = vmatprep.subr.mxu0 0.0
    %5089 = vmatpush1.msra.mxu0 0.0
    %5090 = vmatprep.subr.mxu0 0.0
    %5091 = vmatpush1.msra.mxu0 0.0
    %5092 = vmatprep.subr.mxu0 0.0
    %5093 = vmatpush1.msra.mxu0 0.0
    %5094 = vmatprep.subr.mxu0 0.0
    %5095 = vmatpush1.msra.mxu0 0.0
    %5096 = vmatprep.subr.mxu0 0.0
    %5097 = vmatpush1.msra.mxu0 0.0
    %5098 = vmatprep.subr.mxu0 0.0
    %5099 = vmatpush1.msra.mxu0 0.0
    %5100 = vmatprep.subr.mxu0 0.0
    %5101 = vmatpush1.msra.mxu0 0.0
    %5102 = vmatprep.subr.mxu0 0.0
    %5103 = vmatpush1.msra.mxu0 0.0
    %5104 = vmatprep.subr.mxu0 0.0
    %5105 = vmatpush1.msra.mxu0 0.0
    %5106 = vmatprep.subr.mxu0 0.0
    %5107 = vmatpush1.msra.mxu0 0.0
    %5108 = vmatprep.subr.mxu0 0.0
    %5109 = vmatpush1.msra.mxu0 0.0
    %5110 = vmatprep.subr.mxu0 0.0
    %5111 = vmatpush1.msra.mxu0 0.0
    %5112 = vmatprep.subr.mxu0 0.0
    %5113 = vmatpush1.msra.mxu0 0.0
    %5114 = vmatprep.subr.mxu0 0.0
    %5115 = vmatpush1.msra.mxu0 0.0
    %5116 = vmatprep.subr.mxu0 0.0
    %5117 = vmatpush1.msra.mxu0 0.0
    %5118 = vmatprep.subr.mxu0 0.0
    %5119 = vmatpush1.msra.mxu0 0.0
    %5120 = vmatprep.subr.mxu0 0.0
    %5121 = vmatpush1.msra.mxu0 0.0
    %5122 = vmatprep.mubr.f32.mxu0 0.0
    %v5123 = vand.u32 %v4222, 4294901760
    %5124 = vmatmul.mubr.f32.gmra.mrb[0].mxu0 %v5123
    %v5125 = vpop.f32.mrb[0].mxu0
    %v5126 = vadd.f32 %v5054, %v5125
    %v5127 = vpop.f32.mrb[0].mxu0
    %5128 = vdwg.mxu0
    %v5129 = vmax.f32 %v5126, 0.0
    %v5130 = vld [vmem:[%s6] sm:$0x7]
    %v5131 = vld [vmem:[%s7] sm:$0x7]
    %5133 = vset.pattern.permute.xlu0 0
    %5134 = vperm.xlu0 %5133, %v5131
    %v5135 = vpop.permute.xlu0 %5134
    %vm5137 = vcmask 523264
    %v5139 = vsel %vm5137, %v5130, 0
    %v5142 = vsel %vm5137, %v5129, 0
    %5144 = vmatprep.subr.mxu0 0.0
    %v5145 = vand.u32 %v5142, 4294901760
    %5146 = vmatpush1.xpose.msra.mxu0 %v5145
    %5147 = vmatprep.subr.mxu0 0.0
    %5148 = vmatpush1.xpose.msra.mxu0 0.0
    %5149 = vmatprep.subr.mxu0 0.0
    %5150 = vmatpush1.xpose.msra.mxu0 0.0
    %5151 = vmatprep.subr.mxu0 0.0
    %5152 = vmatpush1.xpose.msra.mxu0 0.0
    %5153 = vmatprep.subr.mxu0 0.0
    %5154 = vmatpush1.xpose.msra.mxu0 0.0
    %5155 = vmatprep.subr.mxu0 0.0
    %5156 = vmatpush1.xpose.msra.mxu0 0.0
    %5157 = vmatprep.subr.mxu0 0.0
    %5158 = vmatpush1.xpose.msra.mxu0 0.0
    %5159 = vmatprep.subr.mxu0 0.0
    %5160 = vmatpush1.xpose.msra.mxu0 0.0
    %5161 = vmatprep.subr.mxu0 0.0
    %5162 = vmatpush1.xpose.msra.mxu0 0.0
    %5163 = vmatprep.subr.mxu0 0.0
    %5164 = vmatpush1.xpose.msra.mxu0 0.0
    %5165 = vmatprep.subr.mxu0 0.0
    %5166 = vmatpush1.xpose.msra.mxu0 0.0
    %5167 = vmatprep.subr.mxu0 0.0
    %5168 = vmatpush1.xpose.msra.mxu0 0.0
    %5169 = vmatprep.subr.mxu0 0.0
    %5170 = vmatpush1.xpose.msra.mxu0 0.0
    %5171 = vmatprep.subr.mxu0 0.0
    %5172 = vmatpush1.xpose.msra.mxu0 0.0
    %5173 = vmatprep.subr.mxu0 0.0
    %5174 = vmatpush1.xpose.msra.mxu0 0.0
    %5175 = vmatprep.subr.mxu0 0.0
    %5176 = vmatpush1.xpose.msra.mxu0 0.0
    %5177 = vmatprep.subr.mxu0 0.0
    %5178 = vmatpush1.xpose.msra.mxu0 0.0
    %5179 = vmatprep.subr.mxu0 0.0
    %5180 = vmatpush1.xpose.msra.mxu0 0.0
    %5181 = vmatprep.subr.mxu0 0.0
    %5182 = vmatpush1.xpose.msra.mxu0 0.0
    %5183 = vmatprep.subr.mxu0 0.0
    %5184 = vmatpush1.xpose.msra.mxu0 0.0
    %5185 = vmatprep.subr.mxu0 0.0
    %5186 = vmatpush1.xpose.msra.mxu0 0.0
    %5187 = vmatprep.subr.mxu0 0.0
    %5188 = vmatpush1.xpose.msra.mxu0 0.0
    %5189 = vmatprep.subr.mxu0 0.0
    %5190 = vmatpush1.xpose.msra.mxu0 0.0
    %5191 = vmatprep.subr.mxu0 0.0
    %5192 = vmatpush1.xpose.msra.mxu0 0.0
    %5193 = vmatprep.subr.mxu0 0.0
    %5194 = vmatpush1.xpose.msra.mxu0 0.0
    %5195 = vmatprep.subr.mxu0 0.0
    %5196 = vmatpush1.xpose.msra.mxu0 0.0
    %5197 = vmatprep.subr.mxu0 0.0
    %5198 = vmatpush1.xpose.msra.mxu0 0.0
    %5199 = vmatprep.subr.mxu0 0.0
    %5200 = vmatpush1.xpose.msra.mxu0 0.0
    %5201 = vmatprep.subr.mxu0 0.0
    %5202 = vmatpush1.xpose.msra.mxu0 0.0
    %5203 = vmatprep.subr.mxu0 0.0
    %5204 = vmatpush1.xpose.msra.mxu0 0.0
    %5205 = vmatprep.subr.mxu0 0.0
    %5206 = vmatpush1.xpose.msra.mxu0 0.0
    %5207 = vmatprep.subr.mxu0 0.0
    %5208 = vmatpush1.xpose.msra.mxu0 0.0
    %5209 = vmatprep.mubr.f32.mxu0 0.0
    %v5210 = vand.u32 %v5139, 4294901760
    %v5211 = vsub.f32 %v5139, %v5210
    %v5212 = vand.u32 %v5211, 4294901760
    %v5213 = vsub.f32 %v5211, %v5212
    %v5214 = vand.u32 %v5213, 4294901760
    %5215 = vmatmul.mubr.f32.gmra.mrb[0].mxu0 %v5214
    %v5216 = vpop.f32.mrb[0].mxu0
    %v5217 = vadd.f32 %v5135, %v5216
    %v5218 = vpop.f32.mrb[0].mxu0
    %5219 = vdwg.mxu0
    %5220 = vmatprep.subr.mxu0 0.0
    %v5221 = vand.u32 %v5142, 4294901760
    %v5222 = vsub.f32 %v5142, %v5221
    %v5223 = vand.u32 %v5222, 4294901760
    %v5224 = vsub.f32 %v5222, %v5223
    %v5225 = vand.u32 %v5224, 4294901760
    %5226 = vmatpush1.xpose.msra.mxu0 %v5225
    %5227 = vmatprep.subr.mxu0 0.0
    %5228 = vmatpush1.xpose.msra.mxu0 0.0
    %5229 = vmatprep.subr.mxu0 0.0
    %5230 = vmatpush1.xpose.msra.mxu0 0.0
    %5231 = vmatprep.subr.mxu0 0.0
    %5232 = vmatpush1.xpose.msra.mxu0 0.0
    %5233 = vmatprep.subr.mxu0 0.0
    %5234 = vmatpush1.xpose.msra.mxu0 0.0
    %5235 = vmatprep.subr.mxu0 0.0
    %5236 = vmatpush1.xpose.msra.mxu0 0.0
    %5237 = vmatprep.subr.mxu0 0.0
    %5238 = vmatpush1.xpose.msra.mxu0 0.0
    %5239 = vmatprep.subr.mxu0 0.0
    %5240 = vmatpush1.xpose.msra.mxu0 0.0
    %5241 = vmatprep.subr.mxu0 0.0
    %5242 = vmatpush1.xpose.msra.mxu0 0.0
    %5243 = vmatprep.subr.mxu0 0.0
    %5244 = vmatpush1.xpose.msra.mxu0 0.0
    %5245 = vmatprep.subr.mxu0 0.0
    %5246 = vmatpush1.xpose.msra.mxu0 0.0
    %5247 = vmatprep.subr.mxu0 0.0
    %5248 = vmatpush1.xpose.msra.mxu0 0.0
    %5249 = vmatprep.subr.mxu0 0.0
    %5250 = vmatpush1.xpose.msra.mxu0 0.0
    %5251 = vmatprep.subr.mxu0 0.0
    %5252 = vmatpush1.xpose.msra.mxu0 0.0
    %5253 = vmatprep.subr.mxu0 0.0
    %5254 = vmatpush1.xpose.msra.mxu0 0.0
    %5255 = vmatprep.subr.mxu0 0.0
    %5256 = vmatpush1.xpose.msra.mxu0 0.0
    %5257 = vmatprep.subr.mxu0 0.0
    %5258 = vmatpush1.xpose.msra.mxu0 0.0
    %5259 = vmatprep.subr.mxu0 0.0
    %5260 = vmatpush1.xpose.msra.mxu0 0.0
    %5261 = vmatprep.subr.mxu0 0.0
    %5262 = vmatpush1.xpose.msra.mxu0 0.0
    %5263 = vmatprep.subr.mxu0 0.0
    %5264 = vmatpush1.xpose.msra.mxu0 0.0
    %5265 = vmatprep.subr.mxu0 0.0
    %5266 = vmatpush1.xpose.msra.mxu0 0.0
    %5267 = vmatprep.subr.mxu0 0.0
    %5268 = vmatpush1.xpose.msra.mxu0 0.0
    %5269 = vmatprep.subr.mxu0 0.0
    %5270 = vmatpush1.xpose.msra.mxu0 0.0
    %5271 = vmatprep.subr.mxu0 0.0
    %5272 = vmatpush1.xpose.msra.mxu0 0.0
    %5273 = vmatprep.subr.mxu0 0.0
    %5274 = vmatpush1.xpose.msra.mxu0 0.0
    %5275 = vmatprep.subr.mxu0 0.0
    %5276 = vmatpush1.xpose.msra.mxu0 0.0
    %5277 = vmatprep.subr.mxu0 0.0
    %5278 = vmatpush1.xpose.msra.mxu0 0.0
    %5279 = vmatprep.subr.mxu0 0.0
    %5280 = vmatpush1.xpose.msra.mxu0 0.0
    %5281 = vmatprep.subr.mxu0 0.0
    %5282 = vmatpush1.xpose.msra.mxu0 0.0
    %5283 = vmatprep.subr.mxu0 0.0
    %5284 = vmatpush1.xpose.msra.mxu0 0.0
    %5285 = vmatprep.subr.mxu0 0.0
    %5286 = vmatpush1.xpose.msra.mxu0 0.0
    %5287 = vmatprep.subr.mxu0 0.0
    %5288 = vmatpush1.xpose.msra.mxu0 0.0
    %5289 = vmatprep.mubr.f32.mxu0 0.0
    %v5290 = vand.u32 %v5139, 4294901760
    %5291 = vmatmul.mubr.f32.gmra.mrb[0].mxu0 %v5290
    %v5292 = vpop.f32.mrb[0].mxu0
    %v5293 = vadd.f32 %v5217, %v5292
    %v5294 = vpop.f32.mrb[0].mxu0
    %5295 = vdwg.mxu0
    %5296 = vmatprep.subr.mxu0 0.0
    %v5297 = vand.u32 %v5142, 4294901760
    %v5298 = vsub.f32 %v5142, %v5297
    %5299 = vmatpush1.xpose.msra.mxu0 %v5298
    %5300 = vmatprep.subr.mxu0 0.0
    %5301 = vmatpush1.xpose.msra.mxu0 0.0
    %5302 = vmatprep.subr.mxu0 0.0
    %5303 = vmatpush1.xpose.msra.mxu0 0.0
    %5304 = vmatprep.subr.mxu0 0.0
    %5305 = vmatpush1.xpose.msra.mxu0 0.0
    %5306 = vmatprep.subr.mxu0 0.0
    %5307 = vmatpush1.xpose.msra.mxu0 0.0
    %5308 = vmatprep.subr.mxu0 0.0
    %5309 = vmatpush1.xpose.msra.mxu0 0.0
    %5310 = vmatprep.subr.mxu0 0.0
    %5311 = vmatpush1.xpose.msra.mxu0 0.0
    %5312 = vmatprep.subr.mxu0 0.0
    %5313 = vmatpush1.xpose.msra.mxu0 0.0
    %5314 = vmatprep.subr.mxu0 0.0
    %5315 = vmatpush1.xpose.msra.mxu0 0.0
    %5316 = vmatprep.subr.mxu0 0.0
    %5317 = vmatpush1.xpose.msra.mxu0 0.0
    %5318 = vmatprep.subr.mxu0 0.0
    %5319 = vmatpush1.xpose.msra.mxu0 0.0
    %5320 = vmatprep.subr.mxu0 0.0
    %5321 = vmatpush1.xpose.msra.mxu0 0.0
    %5322 = vmatprep.subr.mxu0 0.0
    %5323 = vmatpush1.xpose.msra.mxu0 0.0
    %5324 = vmatprep.subr.mxu0 0.0
    %5325 = vmatpush1.xpose.msra.mxu0 0.0
    %5326 = vmatprep.subr.mxu0 0.0
    %5327 = vmatpush1.xpose.msra.mxu0 0.0
    %5328 = vmatprep.subr.mxu0 0.0
    %5329 = vmatpush1.xpose.msra.mxu0 0.0
    %5330 = vmatprep.subr.mxu0 0.0
    %5331 = vmatpush1.xpose.msra.mxu0 0.0
    %5332 = vmatprep.subr.mxu0 0.0
    %5333 = vmatpush1.xpose.msra.mxu0 0.0
    %5334 = vmatprep.subr.mxu0 0.0
    %5335 = vmatpush1.xpose.msra.mxu0 0.0
    %5336 = vmatprep.subr.mxu0 0.0
    %5337 = vmatpush1.xpose.msra.mxu0 0.0
    %5338 = vmatprep.subr.mxu0 0.0
    %5339 = vmatpush1.xpose.msra.mxu0 0.0
    %5340 = vmatprep.subr.mxu0 0.0
    %5341 = vmatpush1.xpose.msra.mxu0 0.0
    %5342 = vmatprep.subr.mxu0 0.0
    %5343 = vmatpush1.xpose.msra.mxu0 0.0
    %5344 = vmatprep.subr.mxu0 0.0
    %5345 = vmatpush1.xpose.msra.mxu0 0.0
    %5346 = vmatprep.subr.mxu0 0.0
    %5347 = vmatpush1.xpose.msra.mxu0 0.0
    %5348 = vmatprep.subr.mxu0 0.0
    %5349 = vmatpush1.xpose.msra.mxu0 0.0
    %5350 = vmatprep.subr.mxu0 0.0
    %5351 = vmatpush1.xpose.msra.mxu0 0.0
    %5352 = vmatprep.subr.mxu0 0.0
    %5353 = vmatpush1.xpose.msra.mxu0 0.0
    %5354 = vmatprep.subr.mxu0 0.0
    %5355 = vmatpush1.xpose.msra.mxu0 0.0
    %5356 = vmatprep.subr.mxu0 0.0
    %5357 = vmatpush1.xpose.msra.mxu0 0.0
    %5358 = vmatprep.subr.mxu0 0.0
    %5359 = vmatpush1.xpose.msra.mxu0 0.0
    %5360 = vmatprep.subr.mxu0 0.0
    %5361 = vmatpush1.xpose.msra.mxu0 0.0
    %5362 = vmatprep.mubr.f32.mxu0 0.0
    %v5363 = vand.u32 %v5139, 4294901760
    %v5364 = vsub.f32 %v5139, %v5363
    %5365 = vmatmul.mubr.f32.gmra.mrb[0].mxu0 %v5364
    %v5366 = vpop.f32.mrb[0].mxu0
    %v5367 = vadd.f32 %v5293, %v5366
    %v5368 = vpop.f32.mrb[0].mxu0
    %5369 = vdwg.mxu0
    %5370 = vmatprep.subr.mxu0 0.0
    %v5371 = vand.u32 %v5142, 4294901760
    %5372 = vmatpush1.xpose.msra.mxu0 %v5371
    %5373 = vmatprep.subr.mxu0 0.0
    %5374 = vmatpush1.xpose.msra.mxu0 0.0
    %5375 = vmatprep.subr.mxu0 0.0
    %5376 = vmatpush1.xpose.msra.mxu0 0.0
    %5377 = vmatprep.subr.mxu0 0.0
    %5378 = vmatpush1.xpose.msra.mxu0 0.0
    %5379 = vmatprep.subr.mxu0 0.0
    %5380 = vmatpush1.xpose.msra.mxu0 0.0
    %5381 = vmatprep.subr.mxu0 0.0
    %5382 = vmatpush1.xpose.msra.mxu0 0.0
    %5383 = vmatprep.subr.mxu0 0.0
    %5384 = vmatpush1.xpose.msra.mxu0 0.0
    %5385 = vmatprep.subr.mxu0 0.0
    %5386 = vmatpush1.xpose.msra.mxu0 0.0
    %5387 = vmatprep.subr.mxu0 0.0
    %5388 = vmatpush1.xpose.msra.mxu0 0.0
    %5389 = vmatprep.subr.mxu0 0.0
    %5390 = vmatpush1.xpose.msra.mxu0 0.0
    %5391 = vmatprep.subr.mxu0 0.0
    %5392 = vmatpush1.xpose.msra.mxu0 0.0
    %5393 = vmatprep.subr.mxu0 0.0
    %5394 = vmatpush1.xpose.msra.mxu0 0.0
    %5395 = vmatprep.subr.mxu0 0.0
    %5396 = vmatpush1.xpose.msra.mxu0 0.0
    %5397 = vmatprep.subr.mxu0 0.0
    %5398 = vmatpush1.xpose.msra.mxu0 0.0
    %5399 = vmatprep.subr.mxu0 0.0
    %5400 = vmatpush1.xpose.msra.mxu0 0.0
    %5401 = vmatprep.subr.mxu0 0.0
    %5402 = vmatpush1.xpose.msra.mxu0 0.0
    %5403 = vmatprep.subr.mxu0 0.0
    %5404 = vmatpush1.xpose.msra.mxu0 0.0
    %5405 = vmatprep.subr.mxu0 0.0
    %5406 = vmatpush1.xpose.msra.mxu0 0.0
    %5407 = vmatprep.subr.mxu0 0.0
    %5408 = vmatpush1.xpose.msra.mxu0 0.0
    %5409 = vmatprep.subr.mxu0 0.0
    %5410 = vmatpush1.xpose.msra.mxu0 0.0
    %5411 = vmatprep.subr.mxu0 0.0
    %5412 = vmatpush1.xpose.msra.mxu0 0.0
    %5413 = vmatprep.subr.mxu0 0.0
    %5414 = vmatpush1.xpose.msra.mxu0 0.0
    %5415 = vmatprep.subr.mxu0 0.0
    %5416 = vmatpush1.xpose.msra.mxu0 0.0
    %5417 = vmatprep.subr.mxu0 0.0
    %5418 = vmatpush1.xpose.msra.mxu0 0.0
    %5419 = vmatprep.subr.mxu0 0.0
    %5420 = vmatpush1.xpose.msra.mxu0 0.0
    %5421 = vmatprep.subr.mxu0 0.0
    %5422 = vmatpush1.xpose.msra.mxu0 0.0
    %5423 = vmatprep.subr.mxu0 0.0
    %5424 = vmatpush1.xpose.msra.mxu0 0.0
    %5425 = vmatprep.subr.mxu0 0.0
    %5426 = vmatpush1.xpose.msra.mxu0 0.0
    %5427 = vmatprep.subr.mxu0 0.0
    %5428 = vmatpush1.xpose.msra.mxu0 0.0
    %5429 = vmatprep.subr.mxu0 0.0
    %5430 = vmatpush1.xpose.msra.mxu0 0.0
    %5431 = vmatprep.subr.mxu0 0.0
    %5432 = vmatpush1.xpose.msra.mxu0 0.0
    %5433 = vmatprep.subr.mxu0 0.0
    %5434 = vmatpush1.xpose.msra.mxu0 0.0
    %5435 = vmatprep.mubr.f32.mxu0 0.0
    %v5436 = vand.u32 %v5139, 4294901760
    %v5437 = vsub.f32 %v5139, %v5436
    %v5438 = vand.u32 %v5437, 4294901760
    %5439 = vmatmul.mubr.f32.gmra.mrb[0].mxu0 %v5438
    %v5440 = vpop.f32.mrb[0].mxu0
    %v5441 = vadd.f32 %v5367, %v5440
    %v5442 = vpop.f32.mrb[0].mxu0
    %5443 = vdwg.mxu0
    %5444 = vmatprep.subr.mxu0 0.0
    %v5445 = vand.u32 %v5142, 4294901760
    %v5446 = vsub.f32 %v5142, %v5445
    %v5447 = vand.u32 %v5446, 4294901760
    %5448 = vmatpush1.xpose.msra.mxu0 %v5447
    %5449 = vmatprep.subr.mxu0 0.0
    %5450 = vmatpush1.xpose.msra.mxu0 0.0
    %5451 = vmatprep.subr.mxu0 0.0
    %5452 = vmatpush1.xpose.msra.mxu0 0.0
    %5453 = vmatprep.subr.mxu0 0.0
    %5454 = vmatpush1.xpose.msra.mxu0 0.0
    %5455 = vmatprep.subr.mxu0 0.0
    %5456 = vmatpush1.xpose.msra.mxu0 0.0
    %5457 = vmatprep.subr.mxu0 0.0
    %5458 = vmatpush1.xpose.msra.mxu0 0.0
    %5459 = vmatprep.subr.mxu0 0.0
    %5460 = vmatpush1.xpose.msra.mxu0 0.0
    %5461 = vmatprep.subr.mxu0 0.0
    %5462 = vmatpush1.xpose.msra.mxu0 0.0
    %5463 = vmatprep.subr.mxu0 0.0
    %5464 = vmatpush1.xpose.msra.mxu0 0.0
    %5465 = vmatprep.subr.mxu0 0.0
    %5466 = vmatpush1.xpose.msra.mxu0 0.0
    %5467 = vmatprep.subr.mxu0 0.0
    %5468 = vmatpush1.xpose.msra.mxu0 0.0
    %5469 = vmatprep.subr.mxu0 0.0
    %5470 = vmatpush1.xpose.msra.mxu0 0.0
    %5471 = vmatprep.subr.mxu0 0.0
    %5472 = vmatpush1.xpose.msra.mxu0 0.0
    %5473 = vmatprep.subr.mxu0 0.0
    %5474 = vmatpush1.xpose.msra.mxu0 0.0
    %5475 = vmatprep.subr.mxu0 0.0
    %5476 = vmatpush1.xpose.msra.mxu0 0.0
    %5477 = vmatprep.subr.mxu0 0.0
    %5478 = vmatpush1.xpose.msra.mxu0 0.0
    %5479 = vmatprep.subr.mxu0 0.0
    %5480 = vmatpush1.xpose.msra.mxu0 0.0
    %5481 = vmatprep.subr.mxu0 0.0
    %5482 = vmatpush1.xpose.msra.mxu0 0.0
    %5483 = vmatprep.subr.mxu0 0.0
    %5484 = vmatpush1.xpose.msra.mxu0 0.0
    %5485 = vmatprep.subr.mxu0 0.0
    %5486 = vmatpush1.xpose.msra.mxu0 0.0
    %5487 = vmatprep.subr.mxu0 0.0
    %5488 = vmatpush1.xpose.msra.mxu0 0.0
    %5489 = vmatprep.subr.mxu0 0.0
    %5490 = vmatpush1.xpose.msra.mxu0 0.0
    %5491 = vmatprep.subr.mxu0 0.0
    %5492 = vmatpush1.xpose.msra.mxu0 0.0
    %5493 = vmatprep.subr.mxu0 0.0
    %5494 = vmatpush1.xpose.msra.mxu0 0.0
    %5495 = vmatprep.subr.mxu0 0.0
    %5496 = vmatpush1.xpose.msra.mxu0 0.0
    %5497 = vmatprep.subr.mxu0 0.0
    %5498 = vmatpush1.xpose.msra.mxu0 0.0
    %5499 = vmatprep.subr.mxu0 0.0
    %5500 = vmatpush1.xpose.msra.mxu0 0.0
    %5501 = vmatprep.subr.mxu0 0.0
    %5502 = vmatpush1.xpose.msra.mxu0 0.0
    %5503 = vmatprep.subr.mxu0 0.0
    %5504 = vmatpush1.xpose.msra.mxu0 0.0
    %5505 = vmatprep.subr.mxu0 0.0
    %5506 = vmatpush1.xpose.msra.mxu0 0.0
    %5507 = vmatprep.subr.mxu0 0.0
    %5508 = vmatpush1.xpose.msra.mxu0 0.0
    %5509 = vmatprep.subr.mxu0 0.0
    %5510 = vmatpush1.xpose.msra.mxu0 0.0
    %5511 = vmatprep.mubr.f32.mxu0 0.0
    %v5512 = vand.u32 %v5139, 4294901760
    %5513 = vmatmul.mubr.f32.gmra.mrb[0].mxu0 %v5512
    %v5514 = vpop.f32.mrb[0].mxu0
    %v5515 = vadd.f32 %v5441, %v5514
    %v5516 = vpop.f32.mrb[0].mxu0
    %5517 = vdwg.mxu0
    %5518 = vmatprep.subr.mxu0 0.0
    %v5519 = vand.u32 %v5142, 4294901760
    %5520 = vmatpush1.xpose.msra.mxu0 %v5519
    %5521 = vmatprep.subr.mxu0 0.0
    %5522 = vmatpush1.xpose.msra.mxu0 0.0
    %5523 = vmatprep.subr.mxu0 0.0
    %5524 = vmatpush1.xpose.msra.mxu0 0.0
    %5525 = vmatprep.subr.mxu0 0.0
    %5526 = vmatpush1.xpose.msra.mxu0 0.0
    %5527 = vmatprep.subr.mxu0 0.0
    %5528 = vmatpush1.xpose.msra.mxu0 0.0
    %5529 = vmatprep.subr.mxu0 0.0
    %5530 = vmatpush1.xpose.msra.mxu0 0.0
    %5531 = vmatprep.subr.mxu0 0.0
    %5532 = vmatpush1.xpose.msra.mxu0 0.0
    %5533 = vmatprep.subr.mxu0 0.0
    %5534 = vmatpush1.xpose.msra.mxu0 0.0
    %5535 = vmatprep.subr.mxu0 0.0
    %5536 = vmatpush1.xpose.msra.mxu0 0.0
    %5537 = vmatprep.subr.mxu0 0.0
    %5538 = vmatpush1.xpose.msra.mxu0 0.0
    %5539 = vmatprep.subr.mxu0 0.0
    %5540 = vmatpush1.xpose.msra.mxu0 0.0
    %5541 = vmatprep.subr.mxu0 0.0
    %5542 = vmatpush1.xpose.msra.mxu0 0.0
    %5543 = vmatprep.subr.mxu0 0.0
    %5544 = vmatpush1.xpose.msra.mxu0 0.0
    %5545 = vmatprep.subr.mxu0 0.0
    %5546 = vmatpush1.xpose.msra.mxu0 0.0
    %5547 = vmatprep.subr.mxu0 0.0
    %5548 = vmatpush1.xpose.msra.mxu0 0.0
    %5549 = vmatprep.subr.mxu0 0.0
    %5550 = vmatpush1.xpose.msra.mxu0 0.0
    %5551 = vmatprep.subr.mxu0 0.0
    %5552 = vmatpush1.xpose.msra.mxu0 0.0
    %5553 = vmatprep.subr.mxu0 0.0
    %5554 = vmatpush1.xpose.msra.mxu0 0.0
    %5555 = vmatprep.subr.mxu0 0.0
    %5556 = vmatpush1.xpose.msra.mxu0 0.0
    %5557 = vmatprep.subr.mxu0 0.0
    %5558 = vmatpush1.xpose.msra.mxu0 0.0
    %5559 = vmatprep.subr.mxu0 0.0
    %5560 = vmatpush1.xpose.msra.mxu0 0.0
    %5561 = vmatprep.subr.mxu0 0.0
    %5562 = vmatpush1.xpose.msra.mxu0 0.0
    %5563 = vmatprep.subr.mxu0 0.0
    %5564 = vmatpush1.xpose.msra.mxu0 0.0
    %5565 = vmatprep.subr.mxu0 0.0
    %5566 = vmatpush1.xpose.msra.mxu0 0.0
    %5567 = vmatprep.subr.mxu0 0.0
    %5568 = vmatpush1.xpose.msra.mxu0 0.0
    %5569 = vmatprep.subr.mxu0 0.0
    %5570 = vmatpush1.xpose.msra.mxu0 0.0
    %5571 = vmatprep.subr.mxu0 0.0
    %5572 = vmatpush1.xpose.msra.mxu0 0.0
    %5573 = vmatprep.subr.mxu0 0.0
    %5574 = vmatpush1.xpose.msra.mxu0 0.0
    %5575 = vmatprep.subr.mxu0 0.0
    %5576 = vmatpush1.xpose.msra.mxu0 0.0
    %5577 = vmatprep.subr.mxu0 0.0
    %5578 = vmatpush1.xpose.msra.mxu0 0.0
    %5579 = vmatprep.subr.mxu0 0.0
    %5580 = vmatpush1.xpose.msra.mxu0 0.0
    %5581 = vmatprep.subr.mxu0 0.0
    %5582 = vmatpush1.xpose.msra.mxu0 0.0
    %5583 = vmatprep.mubr.f32.mxu0 0.0
    %v5584 = vand.u32 %v5139, 4294901760
    %5585 = vmatmul.mubr.f32.gmra.mrb[0].mxu0 %v5584
    %v5586 = vpop.f32.mrb[0].mxu0
    %v5587 = vadd.f32 %v5515, %v5586
    %v5588 = vpop.f32.mrb[0].mxu0
    %5589 = vdwg.mxu0
    %5590 = vst.msk [vmem:[#allocation7] sm:$0x7] %vm4670, %v5587
    // Predicated region
    $region42: #{tpu_custom_call.1} parent=1 // pred_check
      _
    $region43: #{tpu_custom_call.1} parent=1 // pred_check_branch
      %5592 = sbr.rel (0) target = $region45
    $region44: #{tpu_custom_call.1} parent=1 // pred_region
      %s5594 = ssub.s32 64, 64
      %5595 = vsyncadd [#allocation5], %s5594
      %s5597 = sshll.u32 [#allocation7], 4
      %s5598 = int_to_ptr.vmem [resolvable:$true] %s5597
      %5600 = dma.vmem_to_hbm [thread:$0]  %s5598, 64, %s9, [#allocation5]
    $region45: #{tpu_custom_call.1} parent=1 // pred_fallthru
      _
    // Predicated region
    $region46: #{tpu_custom_call.1} parent=1 // pred_check
      _
    $region47: #{tpu_custom_call.1} parent=1 // pred_check_branch
      %5602 = sbr.rel (0) target = $region49
    $region48: #{tpu_custom_call.1} parent=1 // pred_region
      %s5604 = ssub.s32 64, 64
      %5605 = vsyncadd [#allocation9], %s5604
      %s5607 = sshll.u32 [#allocation8], 4
      %s5608 = int_to_ptr.vmem [resolvable:$true] %s5607
      %5610 = dma.vmem_to_hbm [thread:$0]  %s5608, 64, %s10, [#allocation9]
    $region49: #{tpu_custom_call.1} parent=1 // pred_fallthru
      _
    // Predicated region
    $region50: #{tpu_custom_call.1} parent=1 // pred_check
      _
    $region51: #{tpu_custom_call.1} parent=1 // pred_check_branch
      %5612 = sbr.rel (0) target = $region53
    $region52: #{tpu_custom_call.1} parent=1 // pred_region
      %5613 = dma.done [#allocation5], 64
    $region53: #{tpu_custom_call.1} parent=1 // pred_fallthru
      _
    // Predicated region
    $region54: #{tpu_custom_call.1} parent=1 // pred_check
      _
    $region55: #{tpu_custom_call.1} parent=1 // pred_check_branch
      %5615 = sbr.rel (0) target = $region57
    $region56: #{tpu_custom_call.1} parent=1 // pred_region
      %5616 = dma.done [#allocation9], 64
    $region57: #{tpu_custom_call.1} parent=1 // pred_fallthru
      _
    %5617 = vsyncpa [#allocation5], 1
    %5618 = vsyncpa [#allocation9], 1
    %5619 = vsyncpa [#allocation6], 1

</llo_original>
